<compile_context>
chip_gen: v7x
topology: tpu7x:2x2x1
jax: 0.10.0
libtpu: 0.0.40
codegen_flags: <defaults>
</compile_context>

<pallas_src>
import functools
import math

import jax
import jax.numpy as jnp
from jax.experimental import pallas as pl
from jax.experimental.pallas import tpu as pltpu

# ----------------------------- hyper-params ---------------------------------
WORD_EMBED_DIM = 24
ENT_IND_EMBED_DIM = 8
DIST_EMBED_DIM = 8
CONV_FILTER_CNT = 32          # num_filter (F)
NUM_CLASSES = 5               # len(relation_cls_label_map)
WORD_VOCAB = 50
DIST_VOCAB = 20
LSTM_DIRECTION = 2
MFC = 2
SOFTMAX_TYPE = 0              # mask scores to 0.0 and normalize by the sum

INPUT_DIM = WORD_EMBED_DIM + ENT_IND_EMBED_DIM        # 32
HIDDEN_DIM = 2 * INPUT_DIM                            # 64
H = HIDDEN_DIM // LSTM_DIRECTION                      # 32 per direction
CNN_IN_DIM = HIDDEN_DIM + 2 * DIST_EMBED_DIM          # 80
NUM_ATT = 2 * MFC                                     # 4 attention heads
FEATURE_DIM = 3 * CONV_FILTER_CNT + NUM_ATT * HIDDEN_DIM   # 352


# ------------------------------ fused kernel ---------------------------------
def mfa_fused_kernel(words_in_ref, dist_ref, wmask_ref, a1mask_ref, a2mask_ref,
                     d1dist_ref, d2dist_ref, depmask_ref,
                     wih_ref, whh_ref, blstm_ref, fmask_ref,
                     wcnn_wo_ref, wcnn_d_ref, bcnn_ref,
                     wargs_ref, barg1_ref, barg2_ref,
                     attn_ref, wdense_ref, bdense_ref,
                     out_ref):
    f32 = jnp.float32
    B, S, D = words_in_ref.shape          # (2, 8, 32)
    H2 = HIDDEN_DIM                        # 64
    F = CONV_FILTER_CNT                    # 32
    K = NUM_ATT                            # 4

    x = words_in_ref[...]                  # (B, S, 32)
    dist = dist_ref[...]                   # (B, S, 16)

    # ------------------------------ BiLSTM --------------------------------
    # Hoisted input projection: one (B*S,32)x(32,256) matmul, gate-major
    # columns [i_f,i_b,f_f,f_b,g_f,g_b,o_f,o_b] (each 32 wide).
    gates_x = (jnp.dot(x.reshape(B * S, D), wih_ref[...],
                       preferred_element_type=f32)
               + blstm_ref[...]).reshape(B, S, 8 * H)
    fmask = fmask_ref[...]                 # (1, 256): 1.0 on fwd-direction cols
    bmask = 1.0 - fmask
    whh = whh_ref[...]                     # (64, 256) block-diagonal, gate-major

    h = jnp.zeros((B, H2), f32)            # [h_f | h_b]
    c = jnp.zeros((B, H2), f32)            # [c_f | c_b]
    h_f_list, h_b_list = [], []
    for t in range(S):                     # S static -> fully unrolled at trace time
        # fwd direction consumes time t, bwd direction consumes time S-1-t
        gx = gates_x[:, t, :] * fmask + gates_x[:, S - 1 - t, :] * bmask
        z = gx + jnp.dot(h, whh, preferred_element_type=f32)      # (B, 256)
        i_g = jax.nn.sigmoid(z[:, 0:2 * H])          # [i_f | i_b]
        f_g = jax.nn.sigmoid(z[:, 2 * H:4 * H])      # [f_f | f_b]
        g_g = jnp.tanh(z[:, 4 * H:6 * H])            # [g_f | g_b]
        o_g = jax.nn.sigmoid(z[:, 6 * H:8 * H])      # [o_f | o_b]
        c = f_g * c + i_g * g_g
        h = o_g * jnp.tanh(c)
        h_f_list.append(h[:, 0:H])
        h_b_list.append(h[:, H:H2])
    # bwd outputs were produced in reversed time order; flip the (python) list.
    wo = jnp.concatenate(
        [jnp.stack(h_f_list, axis=1),
         jnp.stack(h_b_list[::-1], axis=1)], axis=-1)             # (B, S, 64)

    # ----------------- masked Conv1d(k=3, pad=1) + max + tanh -----------------
    def conv_pool(y3, bias):
        # y3: (B, S, 3F) with lanes [tap0 | tap1 | tap2]; bias: (1, F)
        y0 = y3[:, :, 0:F]
        y1 = y3[:, :, F:2 * F]
        y2 = y3[:, :, 2 * F:3 * F]
        zrow = jnp.zeros((B, 1, F), f32)
        # out[t] = tap0*x[t-1] + tap1*x[t] + tap2*x[t+1] + bias (zero pad)
        conv = (y1
                + jnp.concatenate([zrow, y0[:, :-1, :]], axis=1)
                + jnp.concatenate([y2[:, 1:, :], zrow], axis=1)
                + bias[None, :, :])
        # NOTE: max-pools over every position (incl. masked), matching PyTorch.
        return jnp.tanh(jnp.max(conv, axis=1))                    # (B, F)

    wm = wmask_ref[...][:, :, None]                               # (B, S, 1)
    y_main = (jnp.dot((wo * wm).reshape(B * S, H2), wcnn_wo_ref[...],
                      preferred_element_type=f32)
              + jnp.dot((dist * wm).reshape(B * S, 2 * DIST_EMBED_DIM),
                        wcnn_d_ref[...], preferred_element_type=f32)
              ).reshape(B, S, 3 * F)
    cnn_out = conv_pool(y_main, bcnn_ref[...])                    # (B, F)

    xm12 = jnp.concatenate([x * a1mask_ref[...][:, :, None],
                            x * a2mask_ref[...][:, :, None]], axis=-1)   # (B,S,64)
    y_args = jnp.dot(xm12.reshape(B * S, 2 * D), wargs_ref[...],
                     preferred_element_type=f32).reshape(B, S, 6 * F)
    arg1_out = conv_pool(y_args[:, :, 0:3 * F], barg1_ref[...])   # (B, F)
    arg2_out = conv_pool(y_args[:, :, 3 * F:6 * F], barg2_ref[...])

    # ------------------ multi-factor attention (K heads fused) ----------------
    # head order: att1_e1(q=arg1), att1_e2(q=arg2), att2_e1(q=arg1), att2_e2(q=arg2)
    q_cat = jnp.concatenate([arg1_out, arg2_out] * MFC, axis=-1)  # (B, K*F) = (B,128)
    aq = jnp.dot(q_cat, attn_ref[...],
                 preferred_element_type=f32).reshape(B, K, H2)    # (B, K, 64)
    score = jnp.einsum('bkh,bsh->bks', aq, wo,
                       preferred_element_type=f32)                # (B, K, S)
    score = jnp.exp(jnp.tanh(score))
    d1 = d1dist_ref[...][:, None, :]
    d2 = d2dist_ref[...][:, None, :]
    dd = jnp.concatenate([d1, d2] * MFC, axis=1)                  # (B, K, S)
    score = score * dd
    dm = depmask_ref[...][:, None, :]                             # (B, 1, S)
    # softmax_type == 0: zero masked positions, normalize by the row sum.
    score = jnp.where(dm > 0.5, 0.0, score)
    # TODO(synk): matches reference exactly -- no epsilon; all-masked rows divide by 0.
    score = score / jnp.sum(score, axis=-1, keepdims=True)
    att_out = jnp.einsum('bks,bsh->bkh', score, wo,
                         preferred_element_type=f32).reshape(B, K * H2)  # (B, 256)

    # --------------------------- dense + softmax ------------------------------
    feature = jnp.concatenate([cnn_out, arg1_out, arg2_out, att_out], axis=-1)  # (B,352)
    logits = jnp.dot(feature, wdense_ref[...],
                     preferred_element_type=f32) + bdense_ref[...]
    m = jnp.max(logits, axis=-1, keepdims=True)
    e = jnp.exp(logits - m)
    out_ref[...] = e / jnp.sum(e, axis=-1, keepdims=True)


# ------------------------------ parameters -----------------------------------
def init_params(key):
    ks = iter(jax.random.split(key, 32))

    def uni(k, shape, bound):
        return jax.random.uniform(k, shape, jnp.float32, -bound, bound)

    p = {}
    p['word_emb'] = jax.random.normal(next(ks), (WORD_VOCAB, WORD_EMBED_DIM),
                                      jnp.float32).at[0].set(0.0)
    p['ent_emb'] = jax.random.normal(next(ks), (4, ENT_IND_EMBED_DIM),
                                     jnp.float32).at[0].set(0.0)
    p['dist1_emb'] = jax.random.normal(next(ks), (DIST_VOCAB, DIST_EMBED_DIM),
                                       jnp.float32).at[0].set(0.0)
    p['dist2_emb'] = jax.random.normal(next(ks), (DIST_VOCAB, DIST_EMBED_DIM),
                                       jnp.float32).at[0].set(0.0)

    lb = 1.0 / math.sqrt(H)
    p['lstm'] = dict(
        wih_f=uni(next(ks), (INPUT_DIM, 4 * H), lb),
        whh_f=uni(next(ks), (H, 4 * H), lb),
        b_f=uni(next(ks), (1, 4 * H), lb),
        wih_b=uni(next(ks), (INPUT_DIM, 4 * H), lb),
        whh_b=uni(next(ks), (H, 4 * H), lb),
        b_b=uni(next(ks), (1, 4 * H), lb),
    )

    def conv_params(cin):
        cb = 1.0 / math.sqrt(cin * 3)
        return dict(
            w0=uni(next(ks), (cin, CONV_FILTER_CNT), cb),
            w1=uni(next(ks), (cin, CONV_FILTER_CNT), cb),
            w2=uni(next(ks), (cin, CONV_FILTER_CNT), cb),
            b=uni(next(ks), (1, CONV_FILTER_CNT), cb),
        )

    p['cnn'] = conv_params(CNN_IN_DIM)
    p['arg1_cnn'] = conv_params(INPUT_DIM)
    p['arg2_cnn'] = conv_params(INPUT_DIM)

    ab = 1.0 / math.sqrt(CONV_FILTER_CNT)
    for i in range(1, MFC + 1):
        p[f'att{i}_e1'] = uni(next(ks), (HIDDEN_DIM, CONV_FILTER_CNT), ab)
        p[f'att{i}_e2'] = uni(next(ks), (HIDDEN_DIM, CONV_FILTER_CNT), ab)

    db = 1.0 / math.sqrt(FEATURE_DIM)
    p['dense_w'] = uni(next(ks), (FEATURE_DIM, NUM_CLASSES), db)
    p['dense_b'] = uni(next(ks), (1, NUM_CLASSES), db)
    return p


def pack_params(p):
    """Pack natural-layout params into the fused, lane-dense kernel layout."""
    def interleave(wf, wb):
        # gate-major column order: [i_f,i_b,f_f,f_b,g_f,g_b,o_f,o_b], each H wide
        parts = []
        for g in range(4):
            parts.append(wf[..., g * H:(g + 1) * H])
            parts.append(wb[..., g * H:(g + 1) * H])
        return jnp.concatenate(parts, axis=-1)

    l = p['lstm']
    wih_comb = interleave(l['wih_f'], l['wih_b'])            # (32, 256)
    b_comb = interleave(l['b_f'], l['b_b'])                  # (1, 256)
    whh_f_pad = interleave(l['whh_f'], jnp.zeros_like(l['whh_b']))
    whh_b_pad = interleave(jnp.zeros_like(l['whh_f']), l['whh_b'])
    whh_comb = jnp.concatenate([whh_f_pad, whh_b_pad], axis=0)   # (64, 256) block-diag
    ones = jnp.ones((1, 4 * H), jnp.float32)
    fmask = interleave(ones, jnp.zeros_like(ones))           # (1, 256)

    c = p['cnn']
    w_cnn_all = jnp.concatenate([c['w0'], c['w1'], c['w2']], axis=1)   # (80, 96)
    w_cnn_wo = w_cnn_all[:HIDDEN_DIM, :]                     # (64, 96) words_output part
    w_cnn_d = w_cnn_all[HIDDEN_DIM:, :]                      # (16, 96) distance-embed part

    a1, a2 = p['arg1_cnn'], p['arg2_cnn']
    w_a1 = jnp.concatenate([a1['w0'], a1['w1'], a1['w2']], axis=1)     # (32, 96)
    w_a2 = jnp.concatenate([a2['w0'], a2['w1'], a2['w2']], axis=1)     # (32, 96)
    zz = jnp.zeros_like(w_a1)
    w_args_bd = jnp.concatenate(
        [jnp.concatenate([w_a1, zz], axis=1),
         jnp.concatenate([zz, w_a2], axis=1)], axis=0)       # (64, 192) block-diag

    attn_list = []
    for i in range(1, MFC + 1):
        attn_list.append(p[f'att{i}_e1'])
        attn_list.append(p[f'att{i}_e2'])
    rows = []
    for k, a in enumerate(attn_list):
        blocks = [jnp.zeros((CONV_FILTER_CNT, HIDDEN_DIM), jnp.float32)] * NUM_ATT
        blocks[k] = a.T                                      # (32, 64)
        rows.append(jnp.concatenate(blocks, axis=1))
    attn_bd = jnp.concatenate(rows, axis=0)                  # (128, 256) block-diag

    return dict(
        word_emb=p['word_emb'], ent_emb=p['ent_emb'],
        dist1_emb=p['dist1_emb'], dist2_emb=p['dist2_emb'],
        wih=wih_comb, whh=whh_comb, b_lstm=b_comb, fmask=fmask,
        w_cnn_wo=w_cnn_wo, w_cnn_d=w_cnn_d, b_cnn=c['b'],
        w_args=w_args_bd, b_arg1=a1['b'], b_arg2=a2['b'],
        attn=attn_bd, dense_w=p['dense_w'], dense_b=p['dense_b'],
    )


# ------------------------------ MFA forward ----------------------------------
@functools.partial(jax.jit, static_argnames=('is_training',))
def mfa_forward(packed, words_seq, words_mask, words_ent_ind_seq,
                words_arg1_dist_seq, words_arg2_dist_seq,
                arg_dep_dist, arg1_dep_dist, arg2_dep_dist,
                arg1_mask, arg2_mask,
                arg_dep_mask, arg1_dep_mask, arg2_dep_mask,
                is_training=False):
    del arg_dep_dist, arg1_dep_mask, arg2_dep_mask, is_training  # unused (inference)

    B, S = words_seq.shape

    # Embedding gathers stay in plain JAX (glue before the fused kernel).
    word_embeds = jnp.take(packed['word_emb'], words_seq, axis=0)
    ind_embeds = jnp.take(packed['ent_emb'], words_ent_ind_seq, axis=0)
    dist1 = jnp.take(packed['dist1_emb'], words_arg1_dist_seq, axis=0)
    dist2 = jnp.take(packed['dist2_emb'], words_arg2_dist_seq, axis=0)
    words_input = jnp.concatenate([word_embeds, ind_embeds], axis=2)   # (B, S, 32)
    dist_embeds = jnp.concatenate([dist1, dist2], axis=2)              # (B, S, 16)

    vmem = pl.BlockSpec(memory_space=pltpu.MemorySpace.VMEM)
    # TODO(synk): if B grows, add a batch grid + dimension_semantics=("parallel",)
    # so v7x's second TensorCore is used; at B=2 a single grid-less call is best.
    probs = pl.pallas_call(
        mfa_fused_kernel,
        out_shape=jax.ShapeDtypeStruct((B, NUM_CLASSES), jnp.float32),
        in_specs=[vmem] * 21,
        out_specs=vmem,
    )(words_input, dist_embeds, words_mask, arg1_mask, arg2_mask,
      arg1_dep_dist, arg2_dep_dist, arg_dep_mask.astype(jnp.float32),
      packed['wih'], packed['whh'], packed['b_lstm'], packed['fmask'],
      packed['w_cnn_wo'], packed['w_cnn_d'], packed['b_cnn'],
      packed['w_args'], packed['b_arg1'], packed['b_arg2'],
      packed['attn'], packed['dense_w'], packed['dense_b'])
    return probs


# --------------------------------- main ---------------------------------------
if __name__ == "__main__":
    B, S = 2, 8
    params = init_params(jax.random.PRNGKey(42))
    packed = jax.tree_util.tree_map(jnp.asarray, pack_params(params))  # pack once

    key = jax.random.PRNGKey(0)
    ks = jax.random.split(key, 10)
    words_seq = jax.random.randint(ks[0], (B, S), 1, WORD_VOCAB, dtype=jnp.int32)
    words_ent_ind_seq = jax.random.randint(ks[1], (B, S), 0, 4, dtype=jnp.int32)
    words_arg1_dist_seq = jax.random.randint(ks[2], (B, S), 1, DIST_VOCAB, dtype=jnp.int32)
    words_arg2_dist_seq = jax.random.randint(ks[3], (B, S), 1, DIST_VOCAB, dtype=jnp.int32)

    words_mask = jnp.ones((B, S), jnp.float32)
    arg1_mask = (jax.random.uniform(ks[4], (B, S)) > 0.3).astype(jnp.float32)
    arg2_mask = (jax.random.uniform(ks[5], (B, S)) > 0.3).astype(jnp.float32)

    arg_dep_dist = jax.random.uniform(ks[6], (B, S), jnp.float32, 0.1, 1.0)
    arg1_dep_dist = jax.random.uniform(ks[7], (B, S), jnp.float32, 0.1, 1.0)
    arg2_dep_dist = jax.random.uniform(ks[8], (B, S), jnp.float32, 0.1, 1.0)

    arg_dep_mask = jnp.zeros((B, S), bool).at[:, -2:].set(True)   # mask last 2 tokens
    arg1_dep_mask = arg_dep_mask
    arg2_dep_mask = arg_dep_mask

    probs = mfa_forward(packed, words_seq, words_mask, words_ent_ind_seq,
                        words_arg1_dist_seq, words_arg2_dist_seq,
                        arg_dep_dist, arg1_dep_dist, arg2_dep_dist,
                        arg1_mask, arg2_mask,
                        arg_dep_mask, arg1_dep_mask, arg2_dep_mask,
                        is_training=False)
    jax.block_until_ready(probs)
    assert probs.shape == (B, NUM_CLASSES)
    assert bool(jnp.all(jnp.isfinite(probs)))
    print("KERNEL_OK")
</pallas_src>

<mosaic_0001>
module attributes {stable_mosaic.version = 11 : i64} {
  func.func @mfa_fused_kernel(%arg0: memref<2x8x32xf32, #tpu.memory_space<vmem>>, %arg1: memref<2x8x16xf32, #tpu.memory_space<vmem>>, %arg2: memref<2x8xf32, #tpu.memory_space<vmem>>, %arg3: memref<2x8xf32, #tpu.memory_space<vmem>>, %arg4: memref<2x8xf32, #tpu.memory_space<vmem>>, %arg5: memref<2x8xf32, #tpu.memory_space<vmem>>, %arg6: memref<2x8xf32, #tpu.memory_space<vmem>>, %arg7: memref<2x8xf32, #tpu.memory_space<vmem>>, %arg8: memref<32x256xf32, #tpu.memory_space<vmem>>, %arg9: memref<64x256xf32, #tpu.memory_space<vmem>>, %arg10: memref<1x256xf32, #tpu.memory_space<vmem>>, %arg11: memref<1x256xf32, #tpu.memory_space<vmem>>, %arg12: memref<64x96xf32, #tpu.memory_space<vmem>>, %arg13: memref<16x96xf32, #tpu.memory_space<vmem>>, %arg14: memref<1x32xf32, #tpu.memory_space<vmem>>, %arg15: memref<64x192xf32, #tpu.memory_space<vmem>>, %arg16: memref<1x32xf32, #tpu.memory_space<vmem>>, %arg17: memref<1x32xf32, #tpu.memory_space<vmem>>, %arg18: memref<128x256xf32, #tpu.memory_space<vmem>>, %arg19: memref<352x5xf32, #tpu.memory_space<vmem>>, %arg20: memref<1x5xf32, #tpu.memory_space<vmem>>, %arg21: memref<2x5xf32, #tpu.memory_space<vmem>>) attributes {dimension_semantics = [], scalar_prefetch = 0 : i64, scratch_operands = 0 : i64, tpu.core_type = #tpu.core_type<tc>} {
    %c0 = arith.constant 0 : index
    %c0_0 = arith.constant 0 : index
    %c0_1 = arith.constant 0 : index
    %0 = vector.load %arg0[%c0, %c0_0, %c0_1] : memref<2x8x32xf32, #tpu.memory_space<vmem>>, vector<2x8x32xf32>
    %c0_2 = arith.constant 0 : index
    %c0_3 = arith.constant 0 : index
    %c0_4 = arith.constant 0 : index
    %1 = vector.load %arg1[%c0_2, %c0_3, %c0_4] : memref<2x8x16xf32, #tpu.memory_space<vmem>>, vector<2x8x16xf32>
    %2 = vector.shape_cast %0 : vector<2x8x32xf32> to vector<16x32xf32>
    %c0_5 = arith.constant 0 : index
    %c0_6 = arith.constant 0 : index
    %3 = vector.load %arg8[%c0_5, %c0_6] : memref<32x256xf32, #tpu.memory_space<vmem>>, vector<32x256xf32>
    %cst = arith.constant dense<0.000000e+00> : vector<16x256xf32>
    %4 = tpu.matmul %2, %3, %cst {dimension_numbers = #tpu.dot_dimension_numbers<[1], [0], [0], [1], [0, 0, 1, 1], [], []>} : vector<16x32xf32>, vector<32x256xf32>, vector<16x256xf32> -> vector<16x256xf32>
    %c0_7 = arith.constant 0 : index
    %c0_8 = arith.constant 0 : index
    %5 = vector.load %arg10[%c0_7, %c0_8] : memref<1x256xf32, #tpu.memory_space<vmem>>, vector<1x256xf32>
    %6 = vector.broadcast %5 : vector<1x256xf32> to vector<16x256xf32>
    %7 = arith.addf %4, %6 : vector<16x256xf32>
    %8 = vector.shape_cast %7 : vector<16x256xf32> to vector<2x8x256xf32>
    %c0_9 = arith.constant 0 : index
    %c0_10 = arith.constant 0 : index
    %9 = vector.load %arg11[%c0_9, %c0_10] : memref<1x256xf32, #tpu.memory_space<vmem>>, vector<1x256xf32>
    %cst_11 = arith.constant 1.000000e+00 : f32
    %10 = vector.broadcast %cst_11 : f32 to vector<1x256xf32>
    %11 = arith.subf %10, %9 : vector<1x256xf32>
    %c0_12 = arith.constant 0 : index
    %c0_13 = arith.constant 0 : index
    %12 = vector.load %arg9[%c0_12, %c0_13] : memref<64x256xf32, #tpu.memory_space<vmem>>, vector<64x256xf32>
    %cst_14 = arith.constant 0.000000e+00 : f32
    %13 = vector.broadcast %cst_14 : f32 to vector<2x64xf32>
    %cst_15 = arith.constant 0.000000e+00 : f32
    %14 = vector.broadcast %cst_15 : f32 to vector<2x64xf32>
    %15 = vector.extract_strided_slice %8 {offsets = [0, 0, 0], sizes = [2, 1, 256], strides = [1, 1, 1]} : vector<2x8x256xf32> to vector<2x1x256xf32>
    %16 = vector.shape_cast %15 : vector<2x1x256xf32> to vector<2x256xf32>
    %17 = vector.broadcast %9 : vector<1x256xf32> to vector<2x256xf32>
    %18 = arith.mulf %16, %17 : vector<2x256xf32>
    %19 = vector.extract_strided_slice %8 {offsets = [0, 7, 0], sizes = [2, 1, 256], strides = [1, 1, 1]} : vector<2x8x256xf32> to vector<2x1x256xf32>
    %20 = vector.shape_cast %19 : vector<2x1x256xf32> to vector<2x256xf32>
    %21 = vector.broadcast %11 : vector<1x256xf32> to vector<2x256xf32>
    %22 = arith.mulf %20, %21 : vector<2x256xf32>
    %23 = arith.addf %18, %22 : vector<2x256xf32>
    %cst_16 = arith.constant dense<0.000000e+00> : vector<2x256xf32>
    %24 = tpu.matmul %13, %12, %cst_16 {dimension_numbers = #tpu.dot_dimension_numbers<[1], [0], [0], [1], [0, 0, 1, 1], [], []>} : vector<2x64xf32>, vector<64x256xf32>, vector<2x256xf32> -> vector<2x256xf32>
    %25 = arith.addf %23, %24 : vector<2x256xf32>
    %26 = vector.extract_strided_slice %25 {offsets = [0, 0], sizes = [2, 64], strides = [1, 1]} : vector<2x256xf32> to vector<2x64xf32>
    %27 = arith.negf %26 : vector<2x64xf32>
    %28 = math.exp %27 : vector<2x64xf32>
    %cst_17 = arith.constant 1.000000e+00 : f32
    %29 = vector.broadcast %cst_17 : f32 to vector<2x64xf32>
    %30 = arith.addf %29, %28 : vector<2x64xf32>
    %31 = arith.divf %29, %30 : vector<2x64xf32>
    %32 = vector.extract_strided_slice %25 {offsets = [0, 64], sizes = [2, 64], strides = [1, 1]} : vector<2x256xf32> to vector<2x64xf32>
    %33 = arith.negf %32 : vector<2x64xf32>
    %34 = math.exp %33 : vector<2x64xf32>
    %cst_18 = arith.constant 1.000000e+00 : f32
    %35 = vector.broadcast %cst_18 : f32 to vector<2x64xf32>
    %36 = arith.addf %35, %34 : vector<2x64xf32>
    %37 = arith.divf %35, %36 : vector<2x64xf32>
    %38 = vector.extract_strided_slice %25 {offsets = [0, 128], sizes = [2, 64], strides = [1, 1]} : vector<2x256xf32> to vector<2x64xf32>
    %39 = math.tanh %38 : vector<2x64xf32>
    %40 = vector.extract_strided_slice %25 {offsets = [0, 192], sizes = [2, 64], strides = [1, 1]} : vector<2x256xf32> to vector<2x64xf32>
    %41 = arith.negf %40 : vector<2x64xf32>
    %42 = math.exp %41 : vector<2x64xf32>
    %cst_19 = arith.constant 1.000000e+00 : f32
    %43 = vector.broadcast %cst_19 : f32 to vector<2x64xf32>
    %44 = arith.addf %43, %42 : vector<2x64xf32>
    %45 = arith.divf %43, %44 : vector<2x64xf32>
    %46 = arith.mulf %37, %14 : vector<2x64xf32>
    %47 = arith.mulf %31, %39 : vector<2x64xf32>
    %48 = arith.addf %46, %47 : vector<2x64xf32>
    %49 = math.tanh %48 : vector<2x64xf32>
    %50 = arith.mulf %45, %49 : vector<2x64xf32>
    %51 = vector.extract_strided_slice %50 {offsets = [0, 0], sizes = [2, 32], strides = [1, 1]} : vector<2x64xf32> to vector<2x32xf32>
    %52 = vector.extract_strided_slice %50 {offsets = [0, 32], sizes = [2, 32], strides = [1, 1]} : vector<2x64xf32> to vector<2x32xf32>
    %53 = vector.extract_strided_slice %8 {offsets = [0, 1, 0], sizes = [2, 1, 256], strides = [1, 1, 1]} : vector<2x8x256xf32> to vector<2x1x256xf32>
    %54 = vector.shape_cast %53 : vector<2x1x256xf32> to vector<2x256xf32>
    %55 = vector.broadcast %9 : vector<1x256xf32> to vector<2x256xf32>
    %56 = arith.mulf %54, %55 : vector<2x256xf32>
    %57 = vector.extract_strided_slice %8 {offsets = [0, 6, 0], sizes = [2, 1, 256], strides = [1, 1, 1]} : vector<2x8x256xf32> to vector<2x1x256xf32>
    %58 = vector.shape_cast %57 : vector<2x1x256xf32> to vector<2x256xf32>
    %59 = vector.broadcast %11 : vector<1x256xf32> to vector<2x256xf32>
    %60 = arith.mulf %58, %59 : vector<2x256xf32>
    %61 = arith.addf %56, %60 : vector<2x256xf32>
    %cst_20 = arith.constant dense<0.000000e+00> : vector<2x256xf32>
    %62 = tpu.matmul %50, %12, %cst_20 {dimension_numbers = #tpu.dot_dimension_numbers<[1], [0], [0], [1], [0, 0, 1, 1], [], []>} : vector<2x64xf32>, vector<64x256xf32>, vector<2x256xf32> -> vector<2x256xf32>
    %63 = arith.addf %61, %62 : vector<2x256xf32>
    %64 = vector.extract_strided_slice %63 {offsets = [0, 0], sizes = [2, 64], strides = [1, 1]} : vector<2x256xf32> to vector<2x64xf32>
    %65 = arith.negf %64 : vector<2x64xf32>
    %66 = math.exp %65 : vector<2x64xf32>
    %cst_21 = arith.constant 1.000000e+00 : f32
    %67 = vector.broadcast %cst_21 : f32 to vector<2x64xf32>
    %68 = arith.addf %67, %66 : vector<2x64xf32>
    %69 = arith.divf %67, %68 : vector<2x64xf32>
    %70 = vector.extract_strided_slice %63 {offsets = [0, 64], sizes = [2, 64], strides = [1, 1]} : vector<2x256xf32> to vector<2x64xf32>
    %71 = arith.negf %70 : vector<2x64xf32>
    %72 = math.exp %71 : vector<2x64xf32>
    %cst_22 = arith.constant 1.000000e+00 : f32
    %73 = vector.broadcast %cst_22 : f32 to vector<2x64xf32>
    %74 = arith.addf %73, %72 : vector<2x64xf32>
    %75 = arith.divf %73, %74 : vector<2x64xf32>
    %76 = vector.extract_strided_slice %63 {offsets = [0, 128], sizes = [2, 64], strides = [1, 1]} : vector<2x256xf32> to vector<2x64xf32>
    %77 = math.tanh %76 : vector<2x64xf32>
    %78 = vector.extract_strided_slice %63 {offsets = [0, 192], sizes = [2, 64], strides = [1, 1]} : vector<2x256xf32> to vector<2x64xf32>
    %79 = arith.negf %78 : vector<2x64xf32>
    %80 = math.exp %79 : vector<2x64xf32>
    %cst_23 = arith.constant 1.000000e+00 : f32
    %81 = vector.broadcast %cst_23 : f32 to vector<2x64xf32>
    %82 = arith.addf %81, %80 : vector<2x64xf32>
    %83 = arith.divf %81, %82 : vector<2x64xf32>
    %84 = arith.mulf %75, %48 : vector<2x64xf32>
    %85 = arith.mulf %69, %77 : vector<2x64xf32>
    %86 = arith.addf %84, %85 : vector<2x64xf32>
    %87 = math.tanh %86 : vector<2x64xf32>
    %88 = arith.mulf %83, %87 : vector<2x64xf32>
    %89 = vector.extract_strided_slice %88 {offsets = [0, 0], sizes = [2, 32], strides = [1, 1]} : vector<2x64xf32> to vector<2x32xf32>
    %90 = vector.extract_strided_slice %88 {offsets = [0, 32], sizes = [2, 32], strides = [1, 1]} : vector<2x64xf32> to vector<2x32xf32>
    %91 = vector.extract_strided_slice %8 {offsets = [0, 2, 0], sizes = [2, 1, 256], strides = [1, 1, 1]} : vector<2x8x256xf32> to vector<2x1x256xf32>
    %92 = vector.shape_cast %91 : vector<2x1x256xf32> to vector<2x256xf32>
    %93 = vector.broadcast %9 : vector<1x256xf32> to vector<2x256xf32>
    %94 = arith.mulf %92, %93 : vector<2x256xf32>
    %95 = vector.extract_strided_slice %8 {offsets = [0, 5, 0], sizes = [2, 1, 256], strides = [1, 1, 1]} : vector<2x8x256xf32> to vector<2x1x256xf32>
    %96 = vector.shape_cast %95 : vector<2x1x256xf32> to vector<2x256xf32>
    %97 = vector.broadcast %11 : vector<1x256xf32> to vector<2x256xf32>
    %98 = arith.mulf %96, %97 : vector<2x256xf32>
    %99 = arith.addf %94, %98 : vector<2x256xf32>
    %cst_24 = arith.constant dense<0.000000e+00> : vector<2x256xf32>
    %100 = tpu.matmul %88, %12, %cst_24 {dimension_numbers = #tpu.dot_dimension_numbers<[1], [0], [0], [1], [0, 0, 1, 1], [], []>} : vector<2x64xf32>, vector<64x256xf32>, vector<2x256xf32> -> vector<2x256xf32>
    %101 = arith.addf %99, %100 : vector<2x256xf32>
    %102 = vector.extract_strided_slice %101 {offsets = [0, 0], sizes = [2, 64], strides = [1, 1]} : vector<2x256xf32> to vector<2x64xf32>
    %103 = arith.negf %102 : vector<2x64xf32>
    %104 = math.exp %103 : vector<2x64xf32>
    %cst_25 = arith.constant 1.000000e+00 : f32
    %105 = vector.broadcast %cst_25 : f32 to vector<2x64xf32>
    %106 = arith.addf %105, %104 : vector<2x64xf32>
    %107 = arith.divf %105, %106 : vector<2x64xf32>
    %108 = vector.extract_strided_slice %101 {offsets = [0, 64], sizes = [2, 64], strides = [1, 1]} : vector<2x256xf32> to vector<2x64xf32>
    %109 = arith.negf %108 : vector<2x64xf32>
    %110 = math.exp %109 : vector<2x64xf32>
    %cst_26 = arith.constant 1.000000e+00 : f32
    %111 = vector.broadcast %cst_26 : f32 to vector<2x64xf32>
    %112 = arith.addf %111, %110 : vector<2x64xf32>
    %113 = arith.divf %111, %112 : vector<2x64xf32>
    %114 = vector.extract_strided_slice %101 {offsets = [0, 128], sizes = [2, 64], strides = [1, 1]} : vector<2x256xf32> to vector<2x64xf32>
    %115 = math.tanh %114 : vector<2x64xf32>
    %116 = vector.extract_strided_slice %101 {offsets = [0, 192], sizes = [2, 64], strides = [1, 1]} : vector<2x256xf32> to vector<2x64xf32>
    %117 = arith.negf %116 : vector<2x64xf32>
    %118 = math.exp %117 : vector<2x64xf32>
    %cst_27 = arith.constant 1.000000e+00 : f32
    %119 = vector.broadcast %cst_27 : f32 to vector<2x64xf32>
    %120 = arith.addf %119, %118 : vector<2x64xf32>
    %121 = arith.divf %119, %120 : vector<2x64xf32>
    %122 = arith.mulf %113, %86 : vector<2x64xf32>
    %123 = arith.mulf %107, %115 : vector<2x64xf32>
    %124 = arith.addf %122, %123 : vector<2x64xf32>
    %125 = math.tanh %124 : vector<2x64xf32>
    %126 = arith.mulf %121, %125 : vector<2x64xf32>
    %127 = vector.extract_strided_slice %126 {offsets = [0, 0], sizes = [2, 32], strides = [1, 1]} : vector<2x64xf32> to vector<2x32xf32>
    %128 = vector.extract_strided_slice %126 {offsets = [0, 32], sizes = [2, 32], strides = [1, 1]} : vector<2x64xf32> to vector<2x32xf32>
    %129 = vector.extract_strided_slice %8 {offsets = [0, 3, 0], sizes = [2, 1, 256], strides = [1, 1, 1]} : vector<2x8x256xf32> to vector<2x1x256xf32>
    %130 = vector.shape_cast %129 : vector<2x1x256xf32> to vector<2x256xf32>
    %131 = vector.broadcast %9 : vector<1x256xf32> to vector<2x256xf32>
    %132 = arith.mulf %130, %131 : vector<2x256xf32>
    %133 = vector.extract_strided_slice %8 {offsets = [0, 4, 0], sizes = [2, 1, 256], strides = [1, 1, 1]} : vector<2x8x256xf32> to vector<2x1x256xf32>
    %134 = vector.shape_cast %133 : vector<2x1x256xf32> to vector<2x256xf32>
    %135 = vector.broadcast %11 : vector<1x256xf32> to vector<2x256xf32>
    %136 = arith.mulf %134, %135 : vector<2x256xf32>
    %137 = arith.addf %132, %136 : vector<2x256xf32>
    %cst_28 = arith.constant dense<0.000000e+00> : vector<2x256xf32>
    %138 = tpu.matmul %126, %12, %cst_28 {dimension_numbers = #tpu.dot_dimension_numbers<[1], [0], [0], [1], [0, 0, 1, 1], [], []>} : vector<2x64xf32>, vector<64x256xf32>, vector<2x256xf32> -> vector<2x256xf32>
    %139 = arith.addf %137, %138 : vector<2x256xf32>
    %140 = vector.extract_strided_slice %139 {offsets = [0, 0], sizes = [2, 64], strides = [1, 1]} : vector<2x256xf32> to vector<2x64xf32>
    %141 = arith.negf %140 : vector<2x64xf32>
    %142 = math.exp %141 : vector<2x64xf32>
    %cst_29 = arith.constant 1.000000e+00 : f32
    %143 = vector.broadcast %cst_29 : f32 to vector<2x64xf32>
    %144 = arith.addf %143, %142 : vector<2x64xf32>
    %145 = arith.divf %143, %144 : vector<2x64xf32>
    %146 = vector.extract_strided_slice %139 {offsets = [0, 64], sizes = [2, 64], strides = [1, 1]} : vector<2x256xf32> to vector<2x64xf32>
    %147 = arith.negf %146 : vector<2x64xf32>
    %148 = math.exp %147 : vector<2x64xf32>
    %cst_30 = arith.constant 1.000000e+00 : f32
    %149 = vector.broadcast %cst_30 : f32 to vector<2x64xf32>
    %150 = arith.addf %149, %148 : vector<2x64xf32>
    %151 = arith.divf %149, %150 : vector<2x64xf32>
    %152 = vector.extract_strided_slice %139 {offsets = [0, 128], sizes = [2, 64], strides = [1, 1]} : vector<2x256xf32> to vector<2x64xf32>
    %153 = math.tanh %152 : vector<2x64xf32>
    %154 = vector.extract_strided_slice %139 {offsets = [0, 192], sizes = [2, 64], strides = [1, 1]} : vector<2x256xf32> to vector<2x64xf32>
    %155 = arith.negf %154 : vector<2x64xf32>
    %156 = math.exp %155 : vector<2x64xf32>
    %cst_31 = arith.constant 1.000000e+00 : f32
    %157 = vector.broadcast %cst_31 : f32 to vector<2x64xf32>
    %158 = arith.addf %157, %156 : vector<2x64xf32>
    %159 = arith.divf %157, %158 : vector<2x64xf32>
    %160 = arith.mulf %151, %124 : vector<2x64xf32>
    %161 = arith.mulf %145, %153 : vector<2x64xf32>
    %162 = arith.addf %160, %161 : vector<2x64xf32>
    %163 = math.tanh %162 : vector<2x64xf32>
    %164 = arith.mulf %159, %163 : vector<2x64xf32>
    %165 = vector.extract_strided_slice %164 {offsets = [0, 0], sizes = [2, 32], strides = [1, 1]} : vector<2x64xf32> to vector<2x32xf32>
    %166 = vector.extract_strided_slice %164 {offsets = [0, 32], sizes = [2, 32], strides = [1, 1]} : vector<2x64xf32> to vector<2x32xf32>
    %167 = vector.extract_strided_slice %8 {offsets = [0, 4, 0], sizes = [2, 1, 256], strides = [1, 1, 1]} : vector<2x8x256xf32> to vector<2x1x256xf32>
    %168 = vector.shape_cast %167 : vector<2x1x256xf32> to vector<2x256xf32>
    %169 = vector.broadcast %9 : vector<1x256xf32> to vector<2x256xf32>
    %170 = arith.mulf %168, %169 : vector<2x256xf32>
    %171 = vector.extract_strided_slice %8 {offsets = [0, 3, 0], sizes = [2, 1, 256], strides = [1, 1, 1]} : vector<2x8x256xf32> to vector<2x1x256xf32>
    %172 = vector.shape_cast %171 : vector<2x1x256xf32> to vector<2x256xf32>
    %173 = vector.broadcast %11 : vector<1x256xf32> to vector<2x256xf32>
    %174 = arith.mulf %172, %173 : vector<2x256xf32>
    %175 = arith.addf %170, %174 : vector<2x256xf32>
    %cst_32 = arith.constant dense<0.000000e+00> : vector<2x256xf32>
    %176 = tpu.matmul %164, %12, %cst_32 {dimension_numbers = #tpu.dot_dimension_numbers<[1], [0], [0], [1], [0, 0, 1, 1], [], []>} : vector<2x64xf32>, vector<64x256xf32>, vector<2x256xf32> -> vector<2x256xf32>
    %177 = arith.addf %175, %176 : vector<2x256xf32>
    %178 = vector.extract_strided_slice %177 {offsets = [0, 0], sizes = [2, 64], strides = [1, 1]} : vector<2x256xf32> to vector<2x64xf32>
    %179 = arith.negf %178 : vector<2x64xf32>
    %180 = math.exp %179 : vector<2x64xf32>
    %cst_33 = arith.constant 1.000000e+00 : f32
    %181 = vector.broadcast %cst_33 : f32 to vector<2x64xf32>
    %182 = arith.addf %181, %180 : vector<2x64xf32>
    %183 = arith.divf %181, %182 : vector<2x64xf32>
    %184 = vector.extract_strided_slice %177 {offsets = [0, 64], sizes = [2, 64], strides = [1, 1]} : vector<2x256xf32> to vector<2x64xf32>
    %185 = arith.negf %184 : vector<2x64xf32>
    %186 = math.exp %185 : vector<2x64xf32>
    %cst_34 = arith.constant 1.000000e+00 : f32
    %187 = vector.broadcast %cst_34 : f32 to vector<2x64xf32>
    %188 = arith.addf %187, %186 : vector<2x64xf32>
    %189 = arith.divf %187, %188 : vector<2x64xf32>
    %190 = vector.extract_strided_slice %177 {offsets = [0, 128], sizes = [2, 64], strides = [1, 1]} : vector<2x256xf32> to vector<2x64xf32>
    %191 = math.tanh %190 : vector<2x64xf32>
    %192 = vector.extract_strided_slice %177 {offsets = [0, 192], sizes = [2, 64], strides = [1, 1]} : vector<2x256xf32> to vector<2x64xf32>
    %193 = arith.negf %192 : vector<2x64xf32>
    %194 = math.exp %193 : vector<2x64xf32>
    %cst_35 = arith.constant 1.000000e+00 : f32
    %195 = vector.broadcast %cst_35 : f32 to vector<2x64xf32>
    %196 = arith.addf %195, %194 : vector<2x64xf32>
    %197 = arith.divf %195, %196 : vector<2x64xf32>
    %198 = arith.mulf %189, %162 : vector<2x64xf32>
    %199 = arith.mulf %183, %191 : vector<2x64xf32>
    %200 = arith.addf %198, %199 : vector<2x64xf32>
    %201 = math.tanh %200 : vector<2x64xf32>
    %202 = arith.mulf %197, %201 : vector<2x64xf32>
    %203 = vector.extract_strided_slice %202 {offsets = [0, 0], sizes = [2, 32], strides = [1, 1]} : vector<2x64xf32> to vector<2x32xf32>
    %204 = vector.extract_strided_slice %202 {offsets = [0, 32], sizes = [2, 32], strides = [1, 1]} : vector<2x64xf32> to vector<2x32xf32>
    %205 = vector.extract_strided_slice %8 {offsets = [0, 5, 0], sizes = [2, 1, 256], strides = [1, 1, 1]} : vector<2x8x256xf32> to vector<2x1x256xf32>
    %206 = vector.shape_cast %205 : vector<2x1x256xf32> to vector<2x256xf32>
    %207 = vector.broadcast %9 : vector<1x256xf32> to vector<2x256xf32>
    %208 = arith.mulf %206, %207 : vector<2x256xf32>
    %209 = vector.extract_strided_slice %8 {offsets = [0, 2, 0], sizes = [2, 1, 256], strides = [1, 1, 1]} : vector<2x8x256xf32> to vector<2x1x256xf32>
    %210 = vector.shape_cast %209 : vector<2x1x256xf32> to vector<2x256xf32>
    %211 = vector.broadcast %11 : vector<1x256xf32> to vector<2x256xf32>
    %212 = arith.mulf %210, %211 : vector<2x256xf32>
    %213 = arith.addf %208, %212 : vector<2x256xf32>
    %cst_36 = arith.constant dense<0.000000e+00> : vector<2x256xf32>
    %214 = tpu.matmul %202, %12, %cst_36 {dimension_numbers = #tpu.dot_dimension_numbers<[1], [0], [0], [1], [0, 0, 1, 1], [], []>} : vector<2x64xf32>, vector<64x256xf32>, vector<2x256xf32> -> vector<2x256xf32>
    %215 = arith.addf %213, %214 : vector<2x256xf32>
    %216 = vector.extract_strided_slice %215 {offsets = [0, 0], sizes = [2, 64], strides = [1, 1]} : vector<2x256xf32> to vector<2x64xf32>
    %217 = arith.negf %216 : vector<2x64xf32>
    %218 = math.exp %217 : vector<2x64xf32>
    %cst_37 = arith.constant 1.000000e+00 : f32
    %219 = vector.broadcast %cst_37 : f32 to vector<2x64xf32>
    %220 = arith.addf %219, %218 : vector<2x64xf32>
    %221 = arith.divf %219, %220 : vector<2x64xf32>
    %222 = vector.extract_strided_slice %215 {offsets = [0, 64], sizes = [2, 64], strides = [1, 1]} : vector<2x256xf32> to vector<2x64xf32>
    %223 = arith.negf %222 : vector<2x64xf32>
    %224 = math.exp %223 : vector<2x64xf32>
    %cst_38 = arith.constant 1.000000e+00 : f32
    %225 = vector.broadcast %cst_38 : f32 to vector<2x64xf32>
    %226 = arith.addf %225, %224 : vector<2x64xf32>
    %227 = arith.divf %225, %226 : vector<2x64xf32>
    %228 = vector.extract_strided_slice %215 {offsets = [0, 128], sizes = [2, 64], strides = [1, 1]} : vector<2x256xf32> to vector<2x64xf32>
    %229 = math.tanh %228 : vector<2x64xf32>
    %230 = vector.extract_strided_slice %215 {offsets = [0, 192], sizes = [2, 64], strides = [1, 1]} : vector<2x256xf32> to vector<2x64xf32>
    %231 = arith.negf %230 : vector<2x64xf32>
    %232 = math.exp %231 : vector<2x64xf32>
    %cst_39 = arith.constant 1.000000e+00 : f32
    %233 = vector.broadcast %cst_39 : f32 to vector<2x64xf32>
    %234 = arith.addf %233, %232 : vector<2x64xf32>
    %235 = arith.divf %233, %234 : vector<2x64xf32>
    %236 = arith.mulf %227, %200 : vector<2x64xf32>
    %237 = arith.mulf %221, %229 : vector<2x64xf32>
    %238 = arith.addf %236, %237 : vector<2x64xf32>
    %239 = math.tanh %238 : vector<2x64xf32>
    %240 = arith.mulf %235, %239 : vector<2x64xf32>
    %241 = vector.extract_strided_slice %240 {offsets = [0, 0], sizes = [2, 32], strides = [1, 1]} : vector<2x64xf32> to vector<2x32xf32>
    %242 = vector.extract_strided_slice %240 {offsets = [0, 32], sizes = [2, 32], strides = [1, 1]} : vector<2x64xf32> to vector<2x32xf32>
    %243 = vector.extract_strided_slice %8 {offsets = [0, 6, 0], sizes = [2, 1, 256], strides = [1, 1, 1]} : vector<2x8x256xf32> to vector<2x1x256xf32>
    %244 = vector.shape_cast %243 : vector<2x1x256xf32> to vector<2x256xf32>
    %245 = vector.broadcast %9 : vector<1x256xf32> to vector<2x256xf32>
    %246 = arith.mulf %244, %245 : vector<2x256xf32>
    %247 = vector.extract_strided_slice %8 {offsets = [0, 1, 0], sizes = [2, 1, 256], strides = [1, 1, 1]} : vector<2x8x256xf32> to vector<2x1x256xf32>
    %248 = vector.shape_cast %247 : vector<2x1x256xf32> to vector<2x256xf32>
    %249 = vector.broadcast %11 : vector<1x256xf32> to vector<2x256xf32>
    %250 = arith.mulf %248, %249 : vector<2x256xf32>
    %251 = arith.addf %246, %250 : vector<2x256xf32>
    %cst_40 = arith.constant dense<0.000000e+00> : vector<2x256xf32>
    %252 = tpu.matmul %240, %12, %cst_40 {dimension_numbers = #tpu.dot_dimension_numbers<[1], [0], [0], [1], [0, 0, 1, 1], [], []>} : vector<2x64xf32>, vector<64x256xf32>, vector<2x256xf32> -> vector<2x256xf32>
    %253 = arith.addf %251, %252 : vector<2x256xf32>
    %254 = vector.extract_strided_slice %253 {offsets = [0, 0], sizes = [2, 64], strides = [1, 1]} : vector<2x256xf32> to vector<2x64xf32>
    %255 = arith.negf %254 : vector<2x64xf32>
    %256 = math.exp %255 : vector<2x64xf32>
    %cst_41 = arith.constant 1.000000e+00 : f32
    %257 = vector.broadcast %cst_41 : f32 to vector<2x64xf32>
    %258 = arith.addf %257, %256 : vector<2x64xf32>
    %259 = arith.divf %257, %258 : vector<2x64xf32>
    %260 = vector.extract_strided_slice %253 {offsets = [0, 64], sizes = [2, 64], strides = [1, 1]} : vector<2x256xf32> to vector<2x64xf32>
    %261 = arith.negf %260 : vector<2x64xf32>
    %262 = math.exp %261 : vector<2x64xf32>
    %cst_42 = arith.constant 1.000000e+00 : f32
    %263 = vector.broadcast %cst_42 : f32 to vector<2x64xf32>
    %264 = arith.addf %263, %262 : vector<2x64xf32>
    %265 = arith.divf %263, %264 : vector<2x64xf32>
    %266 = vector.extract_strided_slice %253 {offsets = [0, 128], sizes = [2, 64], strides = [1, 1]} : vector<2x256xf32> to vector<2x64xf32>
    %267 = math.tanh %266 : vector<2x64xf32>
    %268 = vector.extract_strided_slice %253 {offsets = [0, 192], sizes = [2, 64], strides = [1, 1]} : vector<2x256xf32> to vector<2x64xf32>
    %269 = arith.negf %268 : vector<2x64xf32>
    %270 = math.exp %269 : vector<2x64xf32>
    %cst_43 = arith.constant 1.000000e+00 : f32
    %271 = vector.broadcast %cst_43 : f32 to vector<2x64xf32>
    %272 = arith.addf %271, %270 : vector<2x64xf32>
    %273 = arith.divf %271, %272 : vector<2x64xf32>
    %274 = arith.mulf %265, %238 : vector<2x64xf32>
    %275 = arith.mulf %259, %267 : vector<2x64xf32>
    %276 = arith.addf %274, %275 : vector<2x64xf32>
    %277 = math.tanh %276 : vector<2x64xf32>
    %278 = arith.mulf %273, %277 : vector<2x64xf32>
    %279 = vector.extract_strided_slice %278 {offsets = [0, 0], sizes = [2, 32], strides = [1, 1]} : vector<2x64xf32> to vector<2x32xf32>
    %280 = vector.extract_strided_slice %278 {offsets = [0, 32], sizes = [2, 32], strides = [1, 1]} : vector<2x64xf32> to vector<2x32xf32>
    %281 = vector.extract_strided_slice %8 {offsets = [0, 7, 0], sizes = [2, 1, 256], strides = [1, 1, 1]} : vector<2x8x256xf32> to vector<2x1x256xf32>
    %282 = vector.shape_cast %281 : vector<2x1x256xf32> to vector<2x256xf32>
    %283 = vector.broadcast %9 : vector<1x256xf32> to vector<2x256xf32>
    %284 = arith.mulf %282, %283 : vector<2x256xf32>
    %285 = vector.extract_strided_slice %8 {offsets = [0, 0, 0], sizes = [2, 1, 256], strides = [1, 1, 1]} : vector<2x8x256xf32> to vector<2x1x256xf32>
    %286 = vector.shape_cast %285 : vector<2x1x256xf32> to vector<2x256xf32>
    %287 = vector.broadcast %11 : vector<1x256xf32> to vector<2x256xf32>
    %288 = arith.mulf %286, %287 : vector<2x256xf32>
    %289 = arith.addf %284, %288 : vector<2x256xf32>
    %cst_44 = arith.constant dense<0.000000e+00> : vector<2x256xf32>
    %290 = tpu.matmul %278, %12, %cst_44 {dimension_numbers = #tpu.dot_dimension_numbers<[1], [0], [0], [1], [0, 0, 1, 1], [], []>} : vector<2x64xf32>, vector<64x256xf32>, vector<2x256xf32> -> vector<2x256xf32>
    %291 = arith.addf %289, %290 : vector<2x256xf32>
    %292 = vector.extract_strided_slice %291 {offsets = [0, 0], sizes = [2, 64], strides = [1, 1]} : vector<2x256xf32> to vector<2x64xf32>
    %293 = arith.negf %292 : vector<2x64xf32>
    %294 = math.exp %293 : vector<2x64xf32>
    %cst_45 = arith.constant 1.000000e+00 : f32
    %295 = vector.broadcast %cst_45 : f32 to vector<2x64xf32>
    %296 = arith.addf %295, %294 : vector<2x64xf32>
    %297 = arith.divf %295, %296 : vector<2x64xf32>
    %298 = vector.extract_strided_slice %291 {offsets = [0, 64], sizes = [2, 64], strides = [1, 1]} : vector<2x256xf32> to vector<2x64xf32>
    %299 = arith.negf %298 : vector<2x64xf32>
    %300 = math.exp %299 : vector<2x64xf32>
    %cst_46 = arith.constant 1.000000e+00 : f32
    %301 = vector.broadcast %cst_46 : f32 to vector<2x64xf32>
    %302 = arith.addf %301, %300 : vector<2x64xf32>
    %303 = arith.divf %301, %302 : vector<2x64xf32>
    %304 = vector.extract_strided_slice %291 {offsets = [0, 128], sizes = [2, 64], strides = [1, 1]} : vector<2x256xf32> to vector<2x64xf32>
    %305 = math.tanh %304 : vector<2x64xf32>
    %306 = vector.extract_strided_slice %291 {offsets = [0, 192], sizes = [2, 64], strides = [1, 1]} : vector<2x256xf32> to vector<2x64xf32>
    %307 = arith.negf %306 : vector<2x64xf32>
    %308 = math.exp %307 : vector<2x64xf32>
    %cst_47 = arith.constant 1.000000e+00 : f32
    %309 = vector.broadcast %cst_47 : f32 to vector<2x64xf32>
    %310 = arith.addf %309, %308 : vector<2x64xf32>
    %311 = arith.divf %309, %310 : vector<2x64xf32>
    %312 = arith.mulf %303, %276 : vector<2x64xf32>
    %313 = arith.mulf %297, %305 : vector<2x64xf32>
    %314 = arith.addf %312, %313 : vector<2x64xf32>
    %315 = math.tanh %314 : vector<2x64xf32>
    %316 = arith.mulf %311, %315 : vector<2x64xf32>
    %317 = vector.extract_strided_slice %316 {offsets = [0, 0], sizes = [2, 32], strides = [1, 1]} : vector<2x64xf32> to vector<2x32xf32>
    %318 = vector.extract_strided_slice %316 {offsets = [0, 32], sizes = [2, 32], strides = [1, 1]} : vector<2x64xf32> to vector<2x32xf32>
    %319 = vector.shape_cast %51 : vector<2x32xf32> to vector<2x1x32xf32>
    %320 = vector.shape_cast %89 : vector<2x32xf32> to vector<2x1x32xf32>
    %321 = vector.shape_cast %127 : vector<2x32xf32> to vector<2x1x32xf32>
    %322 = vector.shape_cast %165 : vector<2x32xf32> to vector<2x1x32xf32>
    %323 = vector.shape_cast %203 : vector<2x32xf32> to vector<2x1x32xf32>
    %324 = vector.shape_cast %241 : vector<2x32xf32> to vector<2x1x32xf32>
    %325 = vector.shape_cast %279 : vector<2x32xf32> to vector<2x1x32xf32>
    %326 = vector.shape_cast %317 : vector<2x32xf32> to vector<2x1x32xf32>
    %327 = tpu.concatenate %319, %320, %321, %322, %323, %324, %325, %326 in 1 : vector<2x1x32xf32>, vector<2x1x32xf32>, vector<2x1x32xf32>, vector<2x1x32xf32>, vector<2x1x32xf32>, vector<2x1x32xf32>, vector<2x1x32xf32>, vector<2x1x32xf32> -> vector<2x8x32xf32>
    %328 = vector.shape_cast %318 : vector<2x32xf32> to vector<2x1x32xf32>
    %329 = vector.shape_cast %280 : vector<2x32xf32> to vector<2x1x32xf32>
    %330 = vector.shape_cast %242 : vector<2x32xf32> to vector<2x1x32xf32>
    %331 = vector.shape_cast %204 : vector<2x32xf32> to vector<2x1x32xf32>
    %332 = vector.shape_cast %166 : vector<2x32xf32> to vector<2x1x32xf32>
    %333 = vector.shape_cast %128 : vector<2x32xf32> to vector<2x1x32xf32>
    %334 = vector.shape_cast %90 : vector<2x32xf32> to vector<2x1x32xf32>
    %335 = vector.shape_cast %52 : vector<2x32xf32> to vector<2x1x32xf32>
    %336 = tpu.concatenate %328, %329, %330, %331, %332, %333, %334, %335 in 1 : vector<2x1x32xf32>, vector<2x1x32xf32>, vector<2x1x32xf32>, vector<2x1x32xf32>, vector<2x1x32xf32>, vector<2x1x32xf32>, vector<2x1x32xf32>, vector<2x1x32xf32> -> vector<2x8x32xf32>
    %337 = tpu.concatenate %327, %336 in 2 : vector<2x8x32xf32>, vector<2x8x32xf32> -> vector<2x8x64xf32>
    %c0_48 = arith.constant 0 : index
    %c0_49 = arith.constant 0 : index
    %338 = vector.load %arg2[%c0_48, %c0_49] : memref<2x8xf32, #tpu.memory_space<vmem>>, vector<2x8xf32>
    %339 = vector.shape_cast %338 : vector<2x8xf32> to vector<2x8x1xf32>
    %340 = vector.broadcast %339 : vector<2x8x1xf32> to vector<2x8x64xf32>
    %341 = arith.mulf %337, %340 : vector<2x8x64xf32>
    %342 = vector.shape_cast %341 : vector<2x8x64xf32> to vector<16x64xf32>
    %c0_50 = arith.constant 0 : index
    %c0_51 = arith.constant 0 : index
    %343 = vector.load %arg12[%c0_50, %c0_51] : memref<64x96xf32, #tpu.memory_space<vmem>>, vector<64x96xf32>
    %cst_52 = arith.constant dense<0.000000e+00> : vector<16x96xf32>
    %344 = tpu.matmul %342, %343, %cst_52 {dimension_numbers = #tpu.dot_dimension_numbers<[1], [0], [0], [1], [0, 0, 1, 1], [], []>} : vector<16x64xf32>, vector<64x96xf32>, vector<16x96xf32> -> vector<16x96xf32>
    %345 = vector.broadcast %339 : vector<2x8x1xf32> to vector<2x8x16xf32>
    %346 = arith.mulf %1, %345 : vector<2x8x16xf32>
    %347 = vector.shape_cast %346 : vector<2x8x16xf32> to vector<16x16xf32>
    %c0_53 = arith.constant 0 : index
    %c0_54 = arith.constant 0 : index
    %348 = vector.load %arg13[%c0_53, %c0_54] : memref<16x96xf32, #tpu.memory_space<vmem>>, vector<16x96xf32>
    %cst_55 = arith.constant dense<0.000000e+00> : vector<16x96xf32>
    %349 = tpu.matmul %347, %348, %cst_55 {dimension_numbers = #tpu.dot_dimension_numbers<[1], [0], [0], [1], [0, 0, 1, 1], [], []>} : vector<16x16xf32>, vector<16x96xf32>, vector<16x96xf32> -> vector<16x96xf32>
    %350 = arith.addf %344, %349 : vector<16x96xf32>
    %351 = vector.shape_cast %350 : vector<16x96xf32> to vector<2x8x96xf32>
    %c0_56 = arith.constant 0 : index
    %c0_57 = arith.constant 0 : index
    %352 = vector.load %arg14[%c0_56, %c0_57] : memref<1x32xf32, #tpu.memory_space<vmem>>, vector<1x32xf32>
    %353 = vector.extract_strided_slice %351 {offsets = [0, 0, 0], sizes = [2, 8, 32], strides = [1, 1, 1]} : vector<2x8x96xf32> to vector<2x8x32xf32>
    %354 = vector.extract_strided_slice %351 {offsets = [0, 0, 32], sizes = [2, 8, 32], strides = [1, 1, 1]} : vector<2x8x96xf32> to vector<2x8x32xf32>
    %355 = vector.extract_strided_slice %351 {offsets = [0, 0, 64], sizes = [2, 8, 32], strides = [1, 1, 1]} : vector<2x8x96xf32> to vector<2x8x32xf32>
    %cst_58 = arith.constant 0.000000e+00 : f32
    %356 = vector.broadcast %cst_58 : f32 to vector<2x1x32xf32>
    %357 = vector.extract_strided_slice %353 {offsets = [0, 0, 0], sizes = [2, 7, 32], strides = [1, 1, 1]} : vector<2x8x32xf32> to vector<2x7x32xf32>
    %358 = tpu.concatenate %356, %357 in 1 : vector<2x1x32xf32>, vector<2x7x32xf32> -> vector<2x8x32xf32>
    %359 = arith.addf %354, %358 : vector<2x8x32xf32>
    %360 = vector.extract_strided_slice %355 {offsets = [0, 1, 0], sizes = [2, 7, 32], strides = [1, 1, 1]} : vector<2x8x32xf32> to vector<2x7x32xf32>
    %361 = tpu.concatenate %360, %356 in 1 : vector<2x7x32xf32>, vector<2x1x32xf32> -> vector<2x8x32xf32>
    %362 = arith.addf %359, %361 : vector<2x8x32xf32>
    %363 = vector.shape_cast %352 : vector<1x32xf32> to vector<1x1x32xf32>
    %364 = vector.broadcast %363 : vector<1x1x32xf32> to vector<2x8x32xf32>
    %365 = arith.addf %362, %364 : vector<2x8x32xf32>
    %cst_59 = arith.constant dense<0xFF800000> : vector<2x32xf32>
    %366 = vector.multi_reduction <maximumf>, %365, %cst_59 [1] : vector<2x8x32xf32> to vector<2x32xf32>
    %367 = math.tanh %366 : vector<2x32xf32>
    %c0_60 = arith.constant 0 : index
    %c0_61 = arith.constant 0 : index
    %368 = vector.load %arg3[%c0_60, %c0_61] : memref<2x8xf32, #tpu.memory_space<vmem>>, vector<2x8xf32>
    %369 = vector.shape_cast %368 : vector<2x8xf32> to vector<2x8x1xf32>
    %370 = vector.broadcast %369 : vector<2x8x1xf32> to vector<2x8x32xf32>
    %371 = arith.mulf %0, %370 : vector<2x8x32xf32>
    %c0_62 = arith.constant 0 : index
    %c0_63 = arith.constant 0 : index
    %372 = vector.load %arg4[%c0_62, %c0_63] : memref<2x8xf32, #tpu.memory_space<vmem>>, vector<2x8xf32>
    %373 = vector.shape_cast %372 : vector<2x8xf32> to vector<2x8x1xf32>
    %374 = vector.broadcast %373 : vector<2x8x1xf32> to vector<2x8x32xf32>
    %375 = arith.mulf %0, %374 : vector<2x8x32xf32>
    %376 = tpu.concatenate %371, %375 in 2 : vector<2x8x32xf32>, vector<2x8x32xf32> -> vector<2x8x64xf32>
    %377 = vector.shape_cast %376 : vector<2x8x64xf32> to vector<16x64xf32>
    %c0_64 = arith.constant 0 : index
    %c0_65 = arith.constant 0 : index
    %378 = vector.load %arg15[%c0_64, %c0_65] : memref<64x192xf32, #tpu.memory_space<vmem>>, vector<64x192xf32>
    %cst_66 = arith.constant dense<0.000000e+00> : vector<16x192xf32>
    %379 = tpu.matmul %377, %378, %cst_66 {dimension_numbers = #tpu.dot_dimension_numbers<[1], [0], [0], [1], [0, 0, 1, 1], [], []>} : vector<16x64xf32>, vector<64x192xf32>, vector<16x192xf32> -> vector<16x192xf32>
    %380 = vector.shape_cast %379 : vector<16x192xf32> to vector<2x8x192xf32>
    %381 = vector.extract_strided_slice %380 {offsets = [0, 0, 0], sizes = [2, 8, 96], strides = [1, 1, 1]} : vector<2x8x192xf32> to vector<2x8x96xf32>
    %c0_67 = arith.constant 0 : index
    %c0_68 = arith.constant 0 : index
    %382 = vector.load %arg16[%c0_67, %c0_68] : memref<1x32xf32, #tpu.memory_space<vmem>>, vector<1x32xf32>
    %383 = vector.extract_strided_slice %381 {offsets = [0, 0, 0], sizes = [2, 8, 32], strides = [1, 1, 1]} : vector<2x8x96xf32> to vector<2x8x32xf32>
    %384 = vector.extract_strided_slice %381 {offsets = [0, 0, 32], sizes = [2, 8, 32], strides = [1, 1, 1]} : vector<2x8x96xf32> to vector<2x8x32xf32>
    %385 = vector.extract_strided_slice %381 {offsets = [0, 0, 64], sizes = [2, 8, 32], strides = [1, 1, 1]} : vector<2x8x96xf32> to vector<2x8x32xf32>
    %cst_69 = arith.constant 0.000000e+00 : f32
    %386 = vector.broadcast %cst_69 : f32 to vector<2x1x32xf32>
    %387 = vector.extract_strided_slice %383 {offsets = [0, 0, 0], sizes = [2, 7, 32], strides = [1, 1, 1]} : vector<2x8x32xf32> to vector<2x7x32xf32>
    %388 = tpu.concatenate %386, %387 in 1 : vector<2x1x32xf32>, vector<2x7x32xf32> -> vector<2x8x32xf32>
    %389 = arith.addf %384, %388 : vector<2x8x32xf32>
    %390 = vector.extract_strided_slice %385 {offsets = [0, 1, 0], sizes = [2, 7, 32], strides = [1, 1, 1]} : vector<2x8x32xf32> to vector<2x7x32xf32>
    %391 = tpu.concatenate %390, %386 in 1 : vector<2x7x32xf32>, vector<2x1x32xf32> -> vector<2x8x32xf32>
    %392 = arith.addf %389, %391 : vector<2x8x32xf32>
    %393 = vector.shape_cast %382 : vector<1x32xf32> to vector<1x1x32xf32>
    %394 = vector.broadcast %393 : vector<1x1x32xf32> to vector<2x8x32xf32>
    %395 = arith.addf %392, %394 : vector<2x8x32xf32>
    %cst_70 = arith.constant dense<0xFF800000> : vector<2x32xf32>
    %396 = vector.multi_reduction <maximumf>, %395, %cst_70 [1] : vector<2x8x32xf32> to vector<2x32xf32>
    %397 = math.tanh %396 : vector<2x32xf32>
    %398 = vector.extract_strided_slice %380 {offsets = [0, 0, 96], sizes = [2, 8, 96], strides = [1, 1, 1]} : vector<2x8x192xf32> to vector<2x8x96xf32>
    %c0_71 = arith.constant 0 : index
    %c0_72 = arith.constant 0 : index
    %399 = vector.load %arg17[%c0_71, %c0_72] : memref<1x32xf32, #tpu.memory_space<vmem>>, vector<1x32xf32>
    %400 = vector.extract_strided_slice %398 {offsets = [0, 0, 0], sizes = [2, 8, 32], strides = [1, 1, 1]} : vector<2x8x96xf32> to vector<2x8x32xf32>
    %401 = vector.extract_strided_slice %398 {offsets = [0, 0, 32], sizes = [2, 8, 32], strides = [1, 1, 1]} : vector<2x8x96xf32> to vector<2x8x32xf32>
    %402 = vector.extract_strided_slice %398 {offsets = [0, 0, 64], sizes = [2, 8, 32], strides = [1, 1, 1]} : vector<2x8x96xf32> to vector<2x8x32xf32>
    %cst_73 = arith.constant 0.000000e+00 : f32
    %403 = vector.broadcast %cst_73 : f32 to vector<2x1x32xf32>
    %404 = vector.extract_strided_slice %400 {offsets = [0, 0, 0], sizes = [2, 7, 32], strides = [1, 1, 1]} : vector<2x8x32xf32> to vector<2x7x32xf32>
    %405 = tpu.concatenate %403, %404 in 1 : vector<2x1x32xf32>, vector<2x7x32xf32> -> vector<2x8x32xf32>
    %406 = arith.addf %401, %405 : vector<2x8x32xf32>
    %407 = vector.extract_strided_slice %402 {offsets = [0, 1, 0], sizes = [2, 7, 32], strides = [1, 1, 1]} : vector<2x8x32xf32> to vector<2x7x32xf32>
    %408 = tpu.concatenate %407, %403 in 1 : vector<2x7x32xf32>, vector<2x1x32xf32> -> vector<2x8x32xf32>
    %409 = arith.addf %406, %408 : vector<2x8x32xf32>
    %410 = vector.shape_cast %399 : vector<1x32xf32> to vector<1x1x32xf32>
    %411 = vector.broadcast %410 : vector<1x1x32xf32> to vector<2x8x32xf32>
    %412 = arith.addf %409, %411 : vector<2x8x32xf32>
    %cst_74 = arith.constant dense<0xFF800000> : vector<2x32xf32>
    %413 = vector.multi_reduction <maximumf>, %412, %cst_74 [1] : vector<2x8x32xf32> to vector<2x32xf32>
    %414 = math.tanh %413 : vector<2x32xf32>
    %415 = tpu.concatenate %397, %414, %397, %414 in 1 : vector<2x32xf32>, vector<2x32xf32>, vector<2x32xf32>, vector<2x32xf32> -> vector<2x128xf32>
    %c0_75 = arith.constant 0 : index
    %c0_76 = arith.constant 0 : index
    %416 = vector.load %arg18[%c0_75, %c0_76] : memref<128x256xf32, #tpu.memory_space<vmem>>, vector<128x256xf32>
    %cst_77 = arith.constant dense<0.000000e+00> : vector<2x256xf32>
    %417 = tpu.matmul %415, %416, %cst_77 {dimension_numbers = #tpu.dot_dimension_numbers<[1], [0], [0], [1], [0, 0, 1, 1], [], []>} : vector<2x128xf32>, vector<128x256xf32>, vector<2x256xf32> -> vector<2x256xf32>
    %418 = vector.shape_cast %417 : vector<2x256xf32> to vector<2x4x64xf32>
    "tpu.trace_start"() <{level = 10 : i32, message = "bkh,bsh->bks"}> : () -> ()
    %cst_78 = arith.constant dense<0.000000e+00> : vector<2x4x8xf32>
    %419 = tpu.matmul %418, %337, %cst_78 {dimension_numbers = #tpu.dot_dimension_numbers<[2], [2], [1], [1], [0, 0, 0, 1, 1, 1], [0], [0]>} : vector<2x4x64xf32>, vector<2x8x64xf32>, vector<2x4x8xf32> -> vector<2x4x8xf32>
    "tpu.trace_stop"() : () -> ()
    %420 = math.tanh %419 : vector<2x4x8xf32>
    %421 = math.exp %420 : vector<2x4x8xf32>
    %c0_79 = arith.constant 0 : index
    %c0_80 = arith.constant 0 : index
    %422 = vector.load %arg5[%c0_79, %c0_80] : memref<2x8xf32, #tpu.memory_space<vmem>>, vector<2x8xf32>
    %423 = vector.shape_cast %422 : vector<2x8xf32> to vector<2x1x8xf32>
    %c0_81 = arith.constant 0 : index
    %c0_82 = arith.constant 0 : index
    %424 = vector.load %arg6[%c0_81, %c0_82] : memref<2x8xf32, #tpu.memory_space<vmem>>, vector<2x8xf32>
    %425 = vector.shape_cast %424 : vector<2x8xf32> to vector<2x1x8xf32>
    %426 = tpu.concatenate %423, %425, %423, %425 in 1 : vector<2x1x8xf32>, vector<2x1x8xf32>, vector<2x1x8xf32>, vector<2x1x8xf32> -> vector<2x4x8xf32>
    %427 = arith.mulf %421, %426 : vector<2x4x8xf32>
    %c0_83 = arith.constant 0 : index
    %c0_84 = arith.constant 0 : index
    %428 = vector.load %arg7[%c0_83, %c0_84] : memref<2x8xf32, #tpu.memory_space<vmem>>, vector<2x8xf32>
    %429 = vector.shape_cast %428 : vector<2x8xf32> to vector<2x1x8xf32>
    %cst_85 = arith.constant 5.000000e-01 : f32
    %430 = vector.broadcast %cst_85 : f32 to vector<2x1x8xf32>
    %431 = arith.cmpf ogt, %429, %430 : vector<2x1x8xf32>
    %cst_86 = arith.constant 0.000000e+00 : f32
    %432 = vector.shape_cast %431 : vector<2x1x8xi1> to vector<2x1x8xi1>
    %433 = vector.broadcast %432 : vector<2x1x8xi1> to vector<2x4x8xi1>
    %434 = vector.broadcast %cst_86 : f32 to vector<2x4x8xf32>
    %435 = arith.select %433, %434, %427 : vector<2x4x8xi1>, vector<2x4x8xf32>
    %cst_87 = arith.constant dense<0.000000e+00> : vector<2x4xf32>
    %436 = vector.multi_reduction <add>, %435, %cst_87 [2] : vector<2x4x8xf32> to vector<2x4xf32>
    %437 = vector.shape_cast %436 : vector<2x4xf32> to vector<2x4x1xf32>
    %438 = vector.broadcast %437 : vector<2x4x1xf32> to vector<2x4x8xf32>
    %439 = arith.divf %435, %438 : vector<2x4x8xf32>
    "tpu.trace_start"() <{level = 10 : i32, message = "bks,bsh->bkh"}> : () -> ()
    %cst_88 = arith.constant dense<0.000000e+00> : vector<2x4x64xf32>
    %440 = tpu.matmul %439, %337, %cst_88 {dimension_numbers = #tpu.dot_dimension_numbers<[2], [1], [1], [2], [0, 0, 0, 1, 1, 2], [0], [0]>} : vector<2x4x8xf32>, vector<2x8x64xf32>, vector<2x4x64xf32> -> vector<2x4x64xf32>
    "tpu.trace_stop"() : () -> ()
    %441 = vector.shape_cast %440 : vector<2x4x64xf32> to vector<2x256xf32>
    %442 = tpu.concatenate %367, %397, %414, %441 in 1 : vector<2x32xf32>, vector<2x32xf32>, vector<2x32xf32>, vector<2x256xf32> -> vector<2x352xf32>
    %c0_89 = arith.constant 0 : index
    %c0_90 = arith.constant 0 : index
    %443 = vector.load %arg19[%c0_89, %c0_90] : memref<352x5xf32, #tpu.memory_space<vmem>>, vector<352x5xf32>
    %cst_91 = arith.constant dense<0.000000e+00> : vector<2x5xf32>
    %444 = tpu.matmul %442, %443, %cst_91 {dimension_numbers = #tpu.dot_dimension_numbers<[1], [0], [0], [1], [0, 0, 1, 1], [], []>} : vector<2x352xf32>, vector<352x5xf32>, vector<2x5xf32> -> vector<2x5xf32>
    %c0_92 = arith.constant 0 : index
    %c0_93 = arith.constant 0 : index
    %445 = vector.load %arg20[%c0_92, %c0_93] : memref<1x5xf32, #tpu.memory_space<vmem>>, vector<1x5xf32>
    %446 = vector.broadcast %445 : vector<1x5xf32> to vector<2x5xf32>
    %447 = arith.addf %444, %446 : vector<2x5xf32>
    %cst_94 = arith.constant dense<0xFF800000> : vector<2xf32>
    %448 = vector.multi_reduction <maximumf>, %447, %cst_94 [1] : vector<2x5xf32> to vector<2xf32>
    %449 = vector.shape_cast %448 : vector<2xf32> to vector<2x1xf32>
    %450 = vector.broadcast %449 : vector<2x1xf32> to vector<2x5xf32>
    %451 = arith.subf %447, %450 : vector<2x5xf32>
    %452 = math.exp %451 : vector<2x5xf32>
    %cst_95 = arith.constant dense<0.000000e+00> : vector<2xf32>
    %453 = vector.multi_reduction <add>, %452, %cst_95 [1] : vector<2x5xf32> to vector<2xf32>
    %454 = vector.shape_cast %453 : vector<2xf32> to vector<2x1xf32>
    %455 = vector.broadcast %454 : vector<2x1xf32> to vector<2x5xf32>
    %456 = arith.divf %452, %455 : vector<2x5xf32>
    %c0_96 = arith.constant 0 : index
    %c0_97 = arith.constant 0 : index
    %457 = vector.load %arg21[%c0_96, %c0_97] : memref<2x5xf32, #tpu.memory_space<vmem>>, vector<2x5xf32>
    tpu.vector_store %arg21[%c0_96, %c0_97], %456 {strides = array<i32>} : memref<2x5xf32, #tpu.memory_space<vmem>>, vector<2x5xf32>,
    return
  }
}

</mosaic_0001>

<llo_original>
// kernel: mfa_forward.1
$region0: #{mfa_forward.1}
  #allocation0 [shape = 'u32[]', space=smem, size = 0x4, offset = 0x4, fixed_abs, tag = 'smem constant byte address 0x4 - core index']
  #allocation1 [shape = 'u32[144,128]{1,0:T(1,128)}', space=vmem, size = 0x12000, scoped, tag = 'internal scratch']
  %s0 = inlined_call_operand.vmem [shape: f32[2,8,32], index: 0, kind: input, shape index: {}]
  %s1 = inlined_call_operand.vmem [shape: f32[2,8,16], index: 1, kind: input, shape index: {}]
  %s2 = inlined_call_operand.vmem [shape: f32[2,8], index: 2, kind: input, shape index: {}]
  %s3 = inlined_call_operand.vmem [shape: f32[2,8], index: 3, kind: input, shape index: {}]
  %s4 = inlined_call_operand.vmem [shape: f32[2,8], index: 4, kind: input, shape index: {}]
  %s5 = inlined_call_operand.vmem [shape: f32[2,8], index: 5, kind: input, shape index: {}]
  %s6 = inlined_call_operand.vmem [shape: f32[2,8], index: 6, kind: input, shape index: {}]
  %s7 = inlined_call_operand.vmem [shape: f32[2,8], index: 7, kind: input, shape index: {}]
  %s8 = inlined_call_operand.vmem [shape: f32[32,256], index: 8, kind: input, shape index: {}]
  %s9 = inlined_call_operand.vmem [shape: f32[64,256], index: 9, kind: input, shape index: {}]
  %s10 = inlined_call_operand.vmem [shape: f32[1,256], index: 10, kind: input, shape index: {}]
  %s11 = inlined_call_operand.vmem [shape: f32[1,256], index: 11, kind: input, shape index: {}]
  %s12 = inlined_call_operand.vmem [shape: f32[64,96], index: 12, kind: input, shape index: {}]
  %s13 = inlined_call_operand.vmem [shape: f32[16,96], index: 13, kind: input, shape index: {}]
  %s14 = inlined_call_operand.vmem [shape: f32[1,32], index: 14, kind: input, shape index: {}]
  %s15 = inlined_call_operand.vmem [shape: f32[64,192], index: 15, kind: input, shape index: {}]
  %s16 = inlined_call_operand.vmem [shape: f32[1,32], index: 16, kind: input, shape index: {}]
  %s17 = inlined_call_operand.vmem [shape: f32[1,32], index: 17, kind: input, shape index: {}]
  %s18 = inlined_call_operand.vmem [shape: f32[128,256], index: 18, kind: input, shape index: {}]
  %s19 = inlined_call_operand.vmem [shape: f32[352,5], index: 19, kind: input, shape index: {}]
  %s20 = inlined_call_operand.vmem [shape: f32[1,5], index: 20, kind: input, shape index: {}]
  %s21 = inlined_call_operand.hbm [shape: f32[2,5], index: 21, kind: output, shape index: {}]
  %s22 = sld [smem:[#allocation0]]
  $region94: #{mfa_forward.1} parent=0
    _
  %s24 = ssub.s32 1, %s22
  %s25 = scalar_select 0, %s24, %s22
  $region1: #{mfa_forward.1} parent=0
    #allocation2 [shape = 'u8[1024]{0}', space=vmem, size = 0x400, scoped, tag = 'output window, operand 0, single buffered']
    #allocation3 [shape = 's32[1]{0}', space=sflag, size = 0x4, scoped, tag = 'scoped memory for mfa_forward.1']
    %26 = vsyncpa [#allocation3], 0
    // Predicated region
    $region2: #{mfa_forward.1} parent=1 // pred_check
      _
    $region3: #{mfa_forward.1} parent=1 // pred_check_branch
      %28 = sbr.rel (0) target = $region5
    $region4: #{mfa_forward.1} parent=1 // pred_region
      _
    $region5: #{mfa_forward.1} parent=1 // pred_fallthru
      _
    // Predicated region
    $region6: #{mfa_forward.1} parent=1 // pred_check
      _
    $region7: #{mfa_forward.1} parent=1 // pred_check_branch
      %30 = sbr.rel (0) target = $region9
    $region8: #{mfa_forward.1} parent=1 // pred_region
      _
    $region9: #{mfa_forward.1} parent=1 // pred_fallthru
      _
    // Predicated region
    $region10: #{mfa_forward.1} parent=1 // pred_check
      _
    $region11: #{mfa_forward.1} parent=1 // pred_check_branch
      %32 = sbr.rel (0) target = $region13
    $region12: #{mfa_forward.1} parent=1 // pred_region
      _
    $region13: #{mfa_forward.1} parent=1 // pred_fallthru
      _
    // Predicated region
    $region14: #{mfa_forward.1} parent=1 // pred_check
      _
    $region15: #{mfa_forward.1} parent=1 // pred_check_branch
      %34 = sbr.rel (0) target = $region17
    $region16: #{mfa_forward.1} parent=1 // pred_region
      _
    $region17: #{mfa_forward.1} parent=1 // pred_fallthru
      _
    // Predicated region
    $region18: #{mfa_forward.1} parent=1 // pred_check
      _
    $region19: #{mfa_forward.1} parent=1 // pred_check_branch
      %36 = sbr.rel (0) target = $region21
    $region20: #{mfa_forward.1} parent=1 // pred_region
      _
    $region21: #{mfa_forward.1} parent=1 // pred_fallthru
      _
    // Predicated region
    $region22: #{mfa_forward.1} parent=1 // pred_check
      _
    $region23: #{mfa_forward.1} parent=1 // pred_check_branch
      %38 = sbr.rel (0) target = $region25
    $region24: #{mfa_forward.1} parent=1 // pred_region
      _
    $region25: #{mfa_forward.1} parent=1 // pred_fallthru
      _
    // Predicated region
    $region26: #{mfa_forward.1} parent=1 // pred_check
      _
    $region27: #{mfa_forward.1} parent=1 // pred_check_branch
      %40 = sbr.rel (0) target = $region29
    $region28: #{mfa_forward.1} parent=1 // pred_region
      _
    $region29: #{mfa_forward.1} parent=1 // pred_fallthru
      _
    // Predicated region
    $region30: #{mfa_forward.1} parent=1 // pred_check
      _
    $region31: #{mfa_forward.1} parent=1 // pred_check_branch
      %42 = sbr.rel (0) target = $region33
    $region32: #{mfa_forward.1} parent=1 // pred_region
      _
    $region33: #{mfa_forward.1} parent=1 // pred_fallthru
      _
    // Predicated region
    $region34: #{mfa_forward.1} parent=1 // pred_check
      _
    $region35: #{mfa_forward.1} parent=1 // pred_check_branch
      %44 = sbr.rel (0) target = $region37
    $region36: #{mfa_forward.1} parent=1 // pred_region
      _
    $region37: #{mfa_forward.1} parent=1 // pred_fallthru
      _
    // Predicated region
    $region38: #{mfa_forward.1} parent=1 // pred_check
      _
    $region39: #{mfa_forward.1} parent=1 // pred_check_branch
      %46 = sbr.rel (0) target = $region41
    $region40: #{mfa_forward.1} parent=1 // pred_region
      _
    $region41: #{mfa_forward.1} parent=1 // pred_fallthru
      _
    // Predicated region
    $region42: #{mfa_forward.1} parent=1 // pred_check
      _
    $region43: #{mfa_forward.1} parent=1 // pred_check_branch
      %48 = sbr.rel (0) target = $region45
    $region44: #{mfa_forward.1} parent=1 // pred_region
      _
    $region45: #{mfa_forward.1} parent=1 // pred_fallthru
      _
    // Predicated region
    $region46: #{mfa_forward.1} parent=1 // pred_check
      _
    $region47: #{mfa_forward.1} parent=1 // pred_check_branch
      %50 = sbr.rel (0) target = $region49
    $region48: #{mfa_forward.1} parent=1 // pred_region
      _
    $region49: #{mfa_forward.1} parent=1 // pred_fallthru
      _
    // Predicated region
    $region50: #{mfa_forward.1} parent=1 // pred_check
      _
    $region51: #{mfa_forward.1} parent=1 // pred_check_branch
      %52 = sbr.rel (0) target = $region53
    $region52: #{mfa_forward.1} parent=1 // pred_region
      _
    $region53: #{mfa_forward.1} parent=1 // pred_fallthru
      _
    // Predicated region
    $region54: #{mfa_forward.1} parent=1 // pred_check
      _
    $region55: #{mfa_forward.1} parent=1 // pred_check_branch
      %54 = sbr.rel (0) target = $region57
    $region56: #{mfa_forward.1} parent=1 // pred_region
      _
    $region57: #{mfa_forward.1} parent=1 // pred_fallthru
      _
    // Predicated region
    $region58: #{mfa_forward.1} parent=1 // pred_check
      _
    $region59: #{mfa_forward.1} parent=1 // pred_check_branch
      %56 = sbr.rel (0) target = $region61
    $region60: #{mfa_forward.1} parent=1 // pred_region
      _
    $region61: #{mfa_forward.1} parent=1 // pred_fallthru
      _
    // Predicated region
    $region62: #{mfa_forward.1} parent=1 // pred_check
      _
    $region63: #{mfa_forward.1} parent=1 // pred_check_branch
      %58 = sbr.rel (0) target = $region65
    $region64: #{mfa_forward.1} parent=1 // pred_region
      _
    $region65: #{mfa_forward.1} parent=1 // pred_fallthru
      _
    // Predicated region
    $region66: #{mfa_forward.1} parent=1 // pred_check
      _
    $region67: #{mfa_forward.1} parent=1 // pred_check_branch
      %60 = sbr.rel (0) target = $region69
    $region68: #{mfa_forward.1} parent=1 // pred_region
      _
    $region69: #{mfa_forward.1} parent=1 // pred_fallthru
      _
    // Predicated region
    $region70: #{mfa_forward.1} parent=1 // pred_check
      _
    $region71: #{mfa_forward.1} parent=1 // pred_check_branch
      %62 = sbr.rel (0) target = $region73
    $region72: #{mfa_forward.1} parent=1 // pred_region
      _
    $region73: #{mfa_forward.1} parent=1 // pred_fallthru
      _
    // Predicated region
    $region74: #{mfa_forward.1} parent=1 // pred_check
      _
    $region75: #{mfa_forward.1} parent=1 // pred_check_branch
      %64 = sbr.rel (0) target = $region77
    $region76: #{mfa_forward.1} parent=1 // pred_region
      _
    $region77: #{mfa_forward.1} parent=1 // pred_fallthru
      _
    // Predicated region
    $region78: #{mfa_forward.1} parent=1 // pred_check
      _
    $region79: #{mfa_forward.1} parent=1 // pred_check_branch
      %66 = sbr.rel (0) target = $region81
    $region80: #{mfa_forward.1} parent=1 // pred_region
      _
    $region81: #{mfa_forward.1} parent=1 // pred_fallthru
      _
    // Predicated region
    $region82: #{mfa_forward.1} parent=1 // pred_check
      _
    $region83: #{mfa_forward.1} parent=1 // pred_check_branch
      %68 = sbr.rel (0) target = $region85
    $region84: #{mfa_forward.1} parent=1 // pred_region
      _
    $region85: #{mfa_forward.1} parent=1 // pred_fallthru
      _
    %v69 = vld [vmem:[%s0] sm:$0xff]
    %v70 = vld [vmem:[%s0 + $0x8] sm:$0xff]
    %v71 = vld [vmem:[%s1] sm:$0xff]
    %v72 = vld [vmem:[%s1 + $0x8] sm:$0xff]
    %v73 = vld [vmem:[%s8] sm:$0xff]
    %v74 = vld [vmem:[%s8 + $0x8] sm:$0xff]
    %v75 = vld [vmem:[%s8 + $0x10] sm:$0xff]
    %v76 = vld [vmem:[%s8 + $0x18] sm:$0xff]
    %v77 = vld [vmem:[%s8 + $0x20] sm:$0xff]
    %v78 = vld [vmem:[%s8 + $0x28] sm:$0xff]
    %v79 = vld [vmem:[%s8 + $0x30] sm:$0xff]
    %v80 = vld [vmem:[%s8 + $0x38] sm:$0xff]
    %v81 = vld [vmem:[%s10] sm:$0x3]
    %v83 = vlaneseq
    %v84 = vshrl.u32 %v83, 7
    %v85 = vsub.s32 0, %v84
    %v86 = vrot.slane %v81, %v85
    %v87 = vlaneseq
    %v88 = vshrl.u32 %v87, 7
    %v89 = vsub.s32 1, %v88
    %v90 = vrot.slane %v81, %v89
    %vm93 = vcmask 261120
    %v95 = vsel %vm93, %v69, 0
    %v98 = vsel %vm93, %v70, 0
    %100 = vmatprep.subr.mxu0 %v74
    %101 = vmatpush1.msra.mxu0 %v73
    %102 = vmatprep.subr.mxu0 %v76
    %103 = vmatpush1.msra.mxu0 %v75
    %104 = vmatprep.subr.mxu0 %v78
    %105 = vmatpush1.msra.mxu0 %v77
    %106 = vmatprep.subr.mxu0 %v80
    %107 = vmatpush1.msra.mxu0 %v79
    %108 = vmatprep.subr.mxu0 0.0
    %109 = vmatpush1.msra.mxu0 0.0
    %110 = vmatprep.subr.mxu0 0.0
    %111 = vmatpush1.msra.mxu0 0.0
    %112 = vmatprep.subr.mxu0 0.0
    %113 = vmatpush1.msra.mxu0 0.0
    %114 = vmatprep.subr.mxu0 0.0
    %115 = vmatpush1.msra.mxu0 0.0
    %116 = vmatprep.subr.mxu0 0.0
    %117 = vmatpush1.msra.mxu0 0.0
    %118 = vmatprep.subr.mxu0 0.0
    %119 = vmatpush1.msra.mxu0 0.0
    %120 = vmatprep.subr.mxu0 0.0
    %121 = vmatpush1.msra.mxu0 0.0
    %122 = vmatprep.subr.mxu0 0.0
    %123 = vmatpush1.msra.mxu0 0.0
    %124 = vmatprep.subr.mxu0 0.0
    %125 = vmatpush1.msra.mxu0 0.0
    %126 = vmatprep.subr.mxu0 0.0
    %127 = vmatpush1.msra.mxu0 0.0
    %128 = vmatprep.subr.mxu0 0.0
    %129 = vmatpush1.msra.mxu0 0.0
    %130 = vmatprep.subr.mxu0 0.0
    %131 = vmatpush1.msra.mxu0 0.0
    %132 = vmatprep.subr.mxu0 0.0
    %133 = vmatpush1.msra.mxu0 0.0
    %134 = vmatprep.subr.mxu0 0.0
    %135 = vmatpush1.msra.mxu0 0.0
    %136 = vmatprep.subr.mxu0 0.0
    %137 = vmatpush1.msra.mxu0 0.0
    %138 = vmatprep.subr.mxu0 0.0
    %139 = vmatpush1.msra.mxu0 0.0
    %140 = vmatprep.subr.mxu0 0.0
    %141 = vmatpush1.msra.mxu0 0.0
    %142 = vmatprep.subr.mxu0 0.0
    %143 = vmatpush1.msra.mxu0 0.0
    %144 = vmatprep.subr.mxu0 0.0
    %145 = vmatpush1.msra.mxu0 0.0
    %146 = vmatprep.subr.mxu0 0.0
    %147 = vmatpush1.msra.mxu0 0.0
    %148 = vmatprep.subr.mxu0 0.0
    %149 = vmatpush1.msra.mxu0 0.0
    %150 = vmatprep.subr.mxu0 0.0
    %151 = vmatpush1.msra.mxu0 0.0
    %152 = vmatprep.subr.mxu0 0.0
    %153 = vmatpush1.msra.mxu0 0.0
    %154 = vmatprep.subr.mxu0 0.0
    %155 = vmatpush1.msra.mxu0 0.0
    %156 = vmatprep.subr.mxu0 0.0
    %157 = vmatpush1.msra.mxu0 0.0
    %158 = vmatprep.subr.mxu0 0.0
    %159 = vmatpush1.msra.mxu0 0.0
    %160 = vmatprep.subr.mxu0 0.0
    %161 = vmatpush1.msra.mxu0 0.0
    %162 = vmatprep.subr.mxu0 0.0
    %163 = vmatpush1.msra.mxu0 0.0
    %164 = vmatprep.mubr.f32.mxu0 0.0
    %165 = vmatmul.mubr.f32.gmra.mrb[0].mxu0 %v95
    %v166 = vpop.f32.mrb[0].mxu0
    %v167 = vadd.f32 %v86, %v166
    %v168 = vpop.f32.mrb[0].mxu0
    %v169 = vadd.f32 %v90, %v168
    %170 = vmatprep.mubr.f32.mxu0 0.0
    %171 = vmatmul.mubr.f32.gmra.mrb[0].mxu0 %v98
    %v172 = vpop.f32.mrb[0].mxu0
    %v173 = vadd.f32 %v86, %v172
    %v174 = vpop.f32.mrb[0].mxu0
    %v175 = vadd.f32 %v90, %v174
    %176 = vdwg.mxu0
    %v177 = vld [vmem:[%s11] sm:$0x3]
    %v178 = vsub.f32 1.0, %v177
    %v179 = vld [vmem:[%s9] sm:$0xff]
    %v180 = vld [vmem:[%s9 + $0x8] sm:$0xff]
    %v181 = vld [vmem:[%s9 + $0x10] sm:$0xff]
    %v182 = vld [vmem:[%s9 + $0x18] sm:$0xff]
    %v183 = vld [vmem:[%s9 + $0x20] sm:$0xff]
    %v184 = vld [vmem:[%s9 + $0x28] sm:$0xff]
    %v185 = vld [vmem:[%s9 + $0x30] sm:$0xff]
    %v186 = vld [vmem:[%s9 + $0x38] sm:$0xff]
    %v187 = vld [vmem:[%s9 + $0x40] sm:$0xff]
    %v188 = vld [vmem:[%s9 + $0x48] sm:$0xff]
    %v189 = vld [vmem:[%s9 + $0x50] sm:$0xff]
    %v190 = vld [vmem:[%s9 + $0x58] sm:$0xff]
    %v191 = vld [vmem:[%s9 + $0x60] sm:$0xff]
    %v192 = vld [vmem:[%s9 + $0x68] sm:$0xff]
    %v193 = vld [vmem:[%s9 + $0x70] sm:$0xff]
    %v194 = vld [vmem:[%s9 + $0x78] sm:$0xff]
    %v196 = vlaneseq
    %v197 = vshrl.u32 %v196, 7
    %v198 = vsub.s32 0, %v197
    %v199 = vrot.slane %v177, %v198
    %v200 = vlaneseq
    %v201 = vshrl.u32 %v200, 7
    %v202 = vsub.s32 1, %v201
    %v203 = vrot.slane %v177, %v202
    %v206 = vmul.f32 %v167, %v199
    %v207 = vmul.f32 %v169, %v203
    %v208 = vmul.f32 %v173, %v199
    %v209 = vmul.f32 %v175, %v203
    %v211 = vlaneseq
    %v212 = vshrl.u32 %v211, 7
    %v213 = vsub.s32 0, %v212
    %v214 = vrot.slane %v178, %v213
    %v215 = vlaneseq
    %v216 = vshrl.u32 %v215, 7
    %v217 = vsub.s32 1, %v216
    %v218 = vrot.slane %v178, %v217
    %v221 = vmul.f32 %v167, %v214
    %v222 = vmul.f32 %v169, %v218
    %v223 = vmul.f32 %v173, %v214
    %v224 = vmul.f32 %v175, %v218
    %v229 = vrot.slane %v221, 7
    %v230 = vrot.slane %v222, 7
    %v231 = vrot.slane %v223, 7
    %v232 = vrot.slane %v224, 7
    %v237 = vadd.f32 %v206, %v229
    %v238 = vadd.f32 %v207, %v230
    %v239 = vadd.f32 %v208, %v231
    %v240 = vadd.f32 %v209, %v232
    %vm241 = vcmask 523264
    %v243 = vsel %vm241, 0.0, 0
    %245 = vmatprep.subr.mxu0 %v180
    %246 = vmatpush1.msra.mxu0 %v179
    %247 = vmatprep.subr.mxu0 %v182
    %248 = vmatpush1.msra.mxu0 %v181
    %249 = vmatprep.subr.mxu0 %v184
    %250 = vmatpush1.msra.mxu0 %v183
    %251 = vmatprep.subr.mxu0 %v186
    %252 = vmatpush1.msra.mxu0 %v185
    %253 = vmatprep.subr.mxu0 %v188
    %254 = vmatpush1.msra.mxu0 %v187
    %255 = vmatprep.subr.mxu0 %v190
    %256 = vmatpush1.msra.mxu0 %v189
    %257 = vmatprep.subr.mxu0 %v192
    %258 = vmatpush1.msra.mxu0 %v191
    %259 = vmatprep.subr.mxu0 %v194
    %260 = vmatpush1.msra.mxu0 %v193
    %261 = vmatprep.subr.mxu0 0.0
    %262 = vmatpush1.msra.mxu0 0.0
    %263 = vmatprep.subr.mxu0 0.0
    %264 = vmatpush1.msra.mxu0 0.0
    %265 = vmatprep.subr.mxu0 0.0
    %266 = vmatpush1.msra.mxu0 0.0
    %267 = vmatprep.subr.mxu0 0.0
    %268 = vmatpush1.msra.mxu0 0.0
    %269 = vmatprep.subr.mxu0 0.0
    %270 = vmatpush1.msra.mxu0 0.0
    %271 = vmatprep.subr.mxu0 0.0
    %272 = vmatpush1.msra.mxu0 0.0
    %273 = vmatprep.subr.mxu0 0.0
    %274 = vmatpush1.msra.mxu0 0.0
    %275 = vmatprep.subr.mxu0 0.0
    %276 = vmatpush1.msra.mxu0 0.0
    %277 = vmatprep.subr.mxu0 0.0
    %278 = vmatpush1.msra.mxu0 0.0
    %279 = vmatprep.subr.mxu0 0.0
    %280 = vmatpush1.msra.mxu0 0.0
    %281 = vmatprep.subr.mxu0 0.0
    %282 = vmatpush1.msra.mxu0 0.0
    %283 = vmatprep.subr.mxu0 0.0
    %284 = vmatpush1.msra.mxu0 0.0
    %285 = vmatprep.subr.mxu0 0.0
    %286 = vmatpush1.msra.mxu0 0.0
    %287 = vmatprep.subr.mxu0 0.0
    %288 = vmatpush1.msra.mxu0 0.0
    %289 = vmatprep.subr.mxu0 0.0
    %290 = vmatpush1.msra.mxu0 0.0
    %291 = vmatprep.subr.mxu0 0.0
    %292 = vmatpush1.msra.mxu0 0.0
    %293 = vmatprep.subr.mxu0 0.0
    %294 = vmatpush1.msra.mxu0 0.0
    %295 = vmatprep.subr.mxu0 0.0
    %296 = vmatpush1.msra.mxu0 0.0
    %297 = vmatprep.subr.mxu0 0.0
    %298 = vmatpush1.msra.mxu0 0.0
    %299 = vmatprep.subr.mxu0 0.0
    %300 = vmatpush1.msra.mxu0 0.0
    %301 = vmatprep.subr.mxu0 0.0
    %302 = vmatpush1.msra.mxu0 0.0
    %303 = vmatprep.subr.mxu0 0.0
    %304 = vmatpush1.msra.mxu0 0.0
    %305 = vmatprep.subr.mxu0 0.0
    %306 = vmatpush1.msra.mxu0 0.0
    %307 = vmatprep.subr.mxu0 0.0
    %308 = vmatpush1.msra.mxu0 0.0
    %309 = vmatprep.mubr.f32.mxu0 0.0
    %310 = vmatmul.mubr.f32.gmra.mrb[0].mxu0 %v243
    %v311 = vpop.f32.mrb[0].mxu0
    %v312 = vadd.f32 0.0, %v311
    %v313 = vpop.f32.mrb[0].mxu0
    %v314 = vadd.f32 0.0, %v313
    %315 = vdwg.mxu0
    %v318 = vrot.slane %v312, 1
    %v319 = vrot.slane %v314, 1
    %v324 = vadd.f32 %v237, %v312
    %v325 = vadd.f32 %v238, %v314
    %v326 = vadd.f32 %v239, %v318
    %v327 = vadd.f32 %v240, %v319
    %v328 = vxor.u32 %v324, 2147483648
    %v329 = vxor.u32 %v326, 2147483648
    %v330 = vmul.f32 %v328, 1.442695
    %v331 = vpow.pop %v330
    %v332 = vmul.f32 %v329, 1.442695
    %v333 = vpow.pop %v332
    %v334 = vadd.f32 %v331, 1.0
    %v335 = vadd.f32 %v333, 1.0
    %v336 = vrcp.pop %v334
    %v337 = vmul.f32 1.0, %v336
    %v338 = vrcp.pop %v335
    %v339 = vmul.f32 1.0, %v338
    %v340 = vtanh.pop %v325
    %v341 = vtanh.pop %v327
    %v342 = vxor.u32 %v325, 2147483648
    %v343 = vxor.u32 %v327, 2147483648
    %v344 = vmul.f32 %v342, 1.442695
    %v345 = vpow.pop %v344
    %v346 = vmul.f32 %v343, 1.442695
    %v347 = vpow.pop %v346
    %v348 = vadd.f32 %v345, 1.0
    %v349 = vadd.f32 %v347, 1.0
    %v350 = vrcp.pop %v348
    %v351 = vmul.f32 1.0, %v350
    %v352 = vrcp.pop %v349
    %v353 = vmul.f32 1.0, %v352
    %v354 = vmul.f32 %v337, 0.0
    %v355 = vmul.f32 %v339, 0.0
    %v356 = vmul.f32 %v337, %v340
    %v357 = vmul.f32 %v339, %v341
    %360 = vrot.lane.b32.xlu0 %v356, 64
    %v361 = vpop.permute.xlu0 %360
    %362 = vrot.lane.b32.xlu0 %v357, 64
    %v363 = vpop.permute.xlu0 %362
    %v366 = vadd.f32 %v354, %v361
    %v367 = vadd.f32 %v355, %v363
    %v368 = vtanh.pop %v366
    %v369 = vtanh.pop %v367
    %v370 = vmul.f32 %v351, %v368
    %v371 = vmul.f32 %v353, %v369
    %v372 = vrot.slane %v221, 5
    %v373 = vrot.slane %v222, 5
    %v374 = vrot.slane %v223, 5
    %v375 = vrot.slane %v224, 5
    %v380 = vadd.f32 %v206, %v372
    %v381 = vadd.f32 %v207, %v373
    %v382 = vadd.f32 %v208, %v374
    %v383 = vadd.f32 %v209, %v375
    %v386 = vrot.slane %v371, 7
    %vm387 = vcmask 1041409
    %v388 = vsel %vm387, %v386, %v370
    %389 = vrot.lane.b32.xlu0 %v388, 64
    %v390 = vpop.permute.xlu0 %389
    %v391 = vsel %vm241, %v390, 0
    %393 = vmatprep.subr.mxu0 %v180
    %394 = vmatpush1.msra.mxu0 %v179
    %395 = vmatprep.subr.mxu0 %v182
    %396 = vmatpush1.msra.mxu0 %v181
    %397 = vmatprep.subr.mxu0 %v184
    %398 = vmatpush1.msra.mxu0 %v183
    %399 = vmatprep.subr.mxu0 %v186
    %400 = vmatpush1.msra.mxu0 %v185
    %401 = vmatprep.subr.mxu0 %v188
    %402 = vmatpush1.msra.mxu0 %v187
    %403 = vmatprep.subr.mxu0 %v190
    %404 = vmatpush1.msra.mxu0 %v189
    %405 = vmatprep.subr.mxu0 %v192
    %406 = vmatpush1.msra.mxu0 %v191
    %407 = vmatprep.subr.mxu0 %v194
    %408 = vmatpush1.msra.mxu0 %v193
    %409 = vmatprep.subr.mxu0 0.0
    %410 = vmatpush1.msra.mxu0 0.0
    %411 = vmatprep.subr.mxu0 0.0
    %412 = vmatpush1.msra.mxu0 0.0
    %413 = vmatprep.subr.mxu0 0.0
    %414 = vmatpush1.msra.mxu0 0.0
    %415 = vmatprep.subr.mxu0 0.0
    %416 = vmatpush1.msra.mxu0 0.0
    %417 = vmatprep.subr.mxu0 0.0
    %418 = vmatpush1.msra.mxu0 0.0
    %419 = vmatprep.subr.mxu0 0.0
    %420 = vmatpush1.msra.mxu0 0.0
    %421 = vmatprep.subr.mxu0 0.0
    %422 = vmatpush1.msra.mxu0 0.0
    %423 = vmatprep.subr.mxu0 0.0
    %424 = vmatpush1.msra.mxu0 0.0
    %425 = vmatprep.subr.mxu0 0.0
    %426 = vmatpush1.msra.mxu0 0.0
    %427 = vmatprep.subr.mxu0 0.0
    %428 = vmatpush1.msra.mxu0 0.0
    %429 = vmatprep.subr.mxu0 0.0
    %430 = vmatpush1.msra.mxu0 0.0
    %431 = vmatprep.subr.mxu0 0.0
    %432 = vmatpush1.msra.mxu0 0.0
    %433 = vmatprep.subr.mxu0 0.0
    %434 = vmatpush1.msra.mxu0 0.0
    %435 = vmatprep.subr.mxu0 0.0
    %436 = vmatpush1.msra.mxu0 0.0
    %437 = vmatprep.subr.mxu0 0.0
    %438 = vmatpush1.msra.mxu0 0.0
    %439 = vmatprep.subr.mxu0 0.0
    %440 = vmatpush1.msra.mxu0 0.0
    %441 = vmatprep.subr.mxu0 0.0
    %442 = vmatpush1.msra.mxu0 0.0
    %443 = vmatprep.subr.mxu0 0.0
    %444 = vmatpush1.msra.mxu0 0.0
    %445 = vmatprep.subr.mxu0 0.0
    %446 = vmatpush1.msra.mxu0 0.0
    %447 = vmatprep.subr.mxu0 0.0
    %448 = vmatpush1.msra.mxu0 0.0
    %449 = vmatprep.subr.mxu0 0.0
    %450 = vmatpush1.msra.mxu0 0.0
    %451 = vmatprep.subr.mxu0 0.0
    %452 = vmatpush1.msra.mxu0 0.0
    %453 = vmatprep.subr.mxu0 0.0
    %454 = vmatpush1.msra.mxu0 0.0
    %455 = vmatprep.subr.mxu0 0.0
    %456 = vmatpush1.msra.mxu0 0.0
    %457 = vmatprep.mubr.f32.mxu0 0.0
    %458 = vmatmul.mubr.f32.gmra.mrb[0].mxu0 %v391
    %v459 = vpop.f32.mrb[0].mxu0
    %v460 = vadd.f32 0.0, %v459
    %v461 = vpop.f32.mrb[0].mxu0
    %v462 = vadd.f32 0.0, %v461
    %463 = vdwg.mxu0
    %v466 = vrot.slane %v460, 7
    %v467 = vrot.slane %v462, 7
    %v472 = vadd.f32 %v380, %v466
    %v473 = vadd.f32 %v381, %v467
    %v474 = vadd.f32 %v382, %v460
    %v475 = vadd.f32 %v383, %v462
    %v476 = vxor.u32 %v472, 2147483648
    %v477 = vxor.u32 %v474, 2147483648
    %v478 = vmul.f32 %v476, 1.442695
    %v479 = vpow.pop %v478
    %v480 = vmul.f32 %v477, 1.442695
    %v481 = vpow.pop %v480
    %v482 = vadd.f32 %v479, 1.0
    %v483 = vadd.f32 %v481, 1.0
    %v484 = vrcp.pop %v482
    %v485 = vmul.f32 1.0, %v484
    %v486 = vrcp.pop %v483
    %v487 = vmul.f32 1.0, %v486
    %v488 = vtanh.pop %v473
    %v489 = vtanh.pop %v475
    %v490 = vxor.u32 %v473, 2147483648
    %v491 = vxor.u32 %v475, 2147483648
    %v492 = vmul.f32 %v490, 1.442695
    %v493 = vpow.pop %v492
    %v494 = vmul.f32 %v491, 1.442695
    %v495 = vpow.pop %v494
    %v496 = vadd.f32 %v493, 1.0
    %v497 = vadd.f32 %v495, 1.0
    %v498 = vrcp.pop %v496
    %v499 = vmul.f32 1.0, %v498
    %v500 = vrcp.pop %v497
    %v501 = vmul.f32 1.0, %v500
    %v504 = vrot.slane %v366, 7
    %v505 = vrot.slane %v367, 7
    %v508 = vmul.f32 %v485, %v504
    %v509 = vmul.f32 %v487, %v505
    %v510 = vmul.f32 %v485, %v488
    %v511 = vmul.f32 %v487, %v489
    %514 = vrot.lane.b32.xlu0 %v510, 64
    %v515 = vpop.permute.xlu0 %514
    %516 = vrot.lane.b32.xlu0 %v511, 64
    %v517 = vpop.permute.xlu0 %516
    %v520 = vadd.f32 %v508, %v515
    %v521 = vadd.f32 %v509, %v517
    %v522 = vtanh.pop %v520
    %v523 = vtanh.pop %v521
    %v524 = vmul.f32 %v499, %v522
    %v525 = vmul.f32 %v501, %v523
    %v526 = vrot.slane %v221, 3
    %v527 = vrot.slane %v222, 3
    %v528 = vrot.slane %v223, 3
    %v529 = vrot.slane %v224, 3
    %v534 = vadd.f32 %v206, %v526
    %v535 = vadd.f32 %v207, %v527
    %v536 = vadd.f32 %v208, %v528
    %v537 = vadd.f32 %v209, %v529
    %v540 = vrot.slane %v524, 1
    %v541 = vsel %vm387, %v525, %v540
    %542 = vrot.lane.b32.xlu0 %v541, 64
    %v543 = vpop.permute.xlu0 %542
    %v544 = vsel %vm241, %v543, 0
    %546 = vmatprep.subr.mxu0 %v180
    %547 = vmatpush1.msra.mxu0 %v179
    %548 = vmatprep.subr.mxu0 %v182
    %549 = vmatpush1.msra.mxu0 %v181
    %550 = vmatprep.subr.mxu0 %v184
    %551 = vmatpush1.msra.mxu0 %v183
    %552 = vmatprep.subr.mxu0 %v186
    %553 = vmatpush1.msra.mxu0 %v185
    %554 = vmatprep.subr.mxu0 %v188
    %555 = vmatpush1.msra.mxu0 %v187
    %556 = vmatprep.subr.mxu0 %v190
    %557 = vmatpush1.msra.mxu0 %v189
    %558 = vmatprep.subr.mxu0 %v192
    %559 = vmatpush1.msra.mxu0 %v191
    %560 = vmatprep.subr.mxu0 %v194
    %561 = vmatpush1.msra.mxu0 %v193
    %562 = vmatprep.subr.mxu0 0.0
    %563 = vmatpush1.msra.mxu0 0.0
    %564 = vmatprep.subr.mxu0 0.0
    %565 = vmatpush1.msra.mxu0 0.0
    %566 = vmatprep.subr.mxu0 0.0
    %567 = vmatpush1.msra.mxu0 0.0
    %568 = vmatprep.subr.mxu0 0.0
    %569 = vmatpush1.msra.mxu0 0.0
    %570 = vmatprep.subr.mxu0 0.0
    %571 = vmatpush1.msra.mxu0 0.0
    %572 = vmatprep.subr.mxu0 0.0
    %573 = vmatpush1.msra.mxu0 0.0
    %574 = vmatprep.subr.mxu0 0.0
    %575 = vmatpush1.msra.mxu0 0.0
    %576 = vmatprep.subr.mxu0 0.0
    %577 = vmatpush1.msra.mxu0 0.0
    %578 = vmatprep.subr.mxu0 0.0
    %579 = vmatpush1.msra.mxu0 0.0
    %580 = vmatprep.subr.mxu0 0.0
    %581 = vmatpush1.msra.mxu0 0.0
    %582 = vmatprep.subr.mxu0 0.0
    %583 = vmatpush1.msra.mxu0 0.0
    %584 = vmatprep.subr.mxu0 0.0
    %585 = vmatpush1.msra.mxu0 0.0
    %586 = vmatprep.subr.mxu0 0.0
    %587 = vmatpush1.msra.mxu0 0.0
    %588 = vmatprep.subr.mxu0 0.0
    %589 = vmatpush1.msra.mxu0 0.0
    %590 = vmatprep.subr.mxu0 0.0
    %591 = vmatpush1.msra.mxu0 0.0
    %592 = vmatprep.subr.mxu0 0.0
    %593 = vmatpush1.msra.mxu0 0.0
    %594 = vmatprep.subr.mxu0 0.0
    %595 = vmatpush1.msra.mxu0 0.0
    %596 = vmatprep.subr.mxu0 0.0
    %597 = vmatpush1.msra.mxu0 0.0
    %598 = vmatprep.subr.mxu0 0.0
    %599 = vmatpush1.msra.mxu0 0.0
    %600 = vmatprep.subr.mxu0 0.0
    %601 = vmatpush1.msra.mxu0 0.0
    %602 = vmatprep.subr.mxu0 0.0
    %603 = vmatpush1.msra.mxu0 0.0
    %604 = vmatprep.subr.mxu0 0.0
    %605 = vmatpush1.msra.mxu0 0.0
    %606 = vmatprep.subr.mxu0 0.0
    %607 = vmatpush1.msra.mxu0 0.0
    %608 = vmatprep.subr.mxu0 0.0
    %609 = vmatpush1.msra.mxu0 0.0
    %610 = vmatprep.mubr.f32.mxu0 0.0
    %611 = vmatmul.mubr.f32.gmra.mrb[0].mxu0 %v544
    %v612 = vpop.f32.mrb[0].mxu0
    %v613 = vadd.f32 0.0, %v612
    %v614 = vpop.f32.mrb[0].mxu0
    %v615 = vadd.f32 0.0, %v614
    %616 = vdwg.mxu0
    %v619 = vrot.slane %v613, 6
    %v620 = vrot.slane %v615, 6
    %v621 = vrot.slane %v613, 7
    %v622 = vrot.slane %v615, 7
    %v627 = vadd.f32 %v534, %v619
    %v628 = vadd.f32 %v535, %v620
    %v629 = vadd.f32 %v536, %v621
    %v630 = vadd.f32 %v537, %v622
    %v631 = vxor.u32 %v627, 2147483648
    %v632 = vxor.u32 %v629, 2147483648
    %v633 = vmul.f32 %v631, 1.442695
    %v634 = vpow.pop %v633
    %v635 = vmul.f32 %v632, 1.442695
    %v636 = vpow.pop %v635
    %v637 = vadd.f32 %v634, 1.0
    %v638 = vadd.f32 %v636, 1.0
    %v639 = vrcp.pop %v637
    %v640 = vmul.f32 1.0, %v639
    %v641 = vrcp.pop %v638
    %v642 = vmul.f32 1.0, %v641
    %v643 = vtanh.pop %v628
    %v644 = vtanh.pop %v630
    %v645 = vxor.u32 %v628, 2147483648
    %v646 = vxor.u32 %v630, 2147483648
    %v647 = vmul.f32 %v645, 1.442695
    %v648 = vpow.pop %v647
    %v649 = vmul.f32 %v646, 1.442695
    %v650 = vpow.pop %v649
    %v651 = vadd.f32 %v648, 1.0
    %v652 = vadd.f32 %v650, 1.0
    %v653 = vrcp.pop %v651
    %v654 = vmul.f32 1.0, %v653
    %v655 = vrcp.pop %v652
    %v656 = vmul.f32 1.0, %v655
    %v659 = vrot.slane %v520, 7
    %v660 = vrot.slane %v521, 7
    %v663 = vmul.f32 %v640, %v659
    %v664 = vmul.f32 %v642, %v660
    %v665 = vmul.f32 %v640, %v643
    %v666 = vmul.f32 %v642, %v644
    %669 = vrot.lane.b32.xlu0 %v665, 64
    %v670 = vpop.permute.xlu0 %669
    %671 = vrot.lane.b32.xlu0 %v666, 64
    %v672 = vpop.permute.xlu0 %671
    %v675 = vadd.f32 %v663, %v670
    %v676 = vadd.f32 %v664, %v672
    %v677 = vtanh.pop %v675
    %v678 = vtanh.pop %v676
    %v679 = vmul.f32 %v654, %v677
    %v680 = vmul.f32 %v656, %v678
    %v681 = vrot.slane %v221, 1
    %v682 = vrot.slane %v222, 1
    %v683 = vrot.slane %v223, 1
    %v684 = vrot.slane %v224, 1
    %v689 = vadd.f32 %v206, %v681
    %v690 = vadd.f32 %v207, %v682
    %v691 = vadd.f32 %v208, %v683
    %v692 = vadd.f32 %v209, %v684
    %v695 = vrot.slane %v679, 2
    %v696 = vrot.slane %v680, 1
    %v697 = vsel %vm387, %v696, %v695
    %698 = vrot.lane.b32.xlu0 %v697, 64
    %v699 = vpop.permute.xlu0 %698
    %v700 = vsel %vm241, %v699, 0
    %702 = vmatprep.subr.mxu0 %v180
    %703 = vmatpush1.msra.mxu0 %v179
    %704 = vmatprep.subr.mxu0 %v182
    %705 = vmatpush1.msra.mxu0 %v181
    %706 = vmatprep.subr.mxu0 %v184
    %707 = vmatpush1.msra.mxu0 %v183
    %708 = vmatprep.subr.mxu0 %v186
    %709 = vmatpush1.msra.mxu0 %v185
    %710 = vmatprep.subr.mxu0 %v188
    %711 = vmatpush1.msra.mxu0 %v187
    %712 = vmatprep.subr.mxu0 %v190
    %713 = vmatpush1.msra.mxu0 %v189
    %714 = vmatprep.subr.mxu0 %v192
    %715 = vmatpush1.msra.mxu0 %v191
    %716 = vmatprep.subr.mxu0 %v194
    %717 = vmatpush1.msra.mxu0 %v193
    %718 = vmatprep.subr.mxu0 0.0
    %719 = vmatpush1.msra.mxu0 0.0
    %720 = vmatprep.subr.mxu0 0.0
    %721 = vmatpush1.msra.mxu0 0.0
    %722 = vmatprep.subr.mxu0 0.0
    %723 = vmatpush1.msra.mxu0 0.0
    %724 = vmatprep.subr.mxu0 0.0
    %725 = vmatpush1.msra.mxu0 0.0
    %726 = vmatprep.subr.mxu0 0.0
    %727 = vmatpush1.msra.mxu0 0.0
    %728 = vmatprep.subr.mxu0 0.0
    %729 = vmatpush1.msra.mxu0 0.0
    %730 = vmatprep.subr.mxu0 0.0
    %731 = vmatpush1.msra.mxu0 0.0
    %732 = vmatprep.subr.mxu0 0.0
    %733 = vmatpush1.msra.mxu0 0.0
    %734 = vmatprep.subr.mxu0 0.0
    %735 = vmatpush1.msra.mxu0 0.0
    %736 = vmatprep.subr.mxu0 0.0
    %737 = vmatpush1.msra.mxu0 0.0
    %738 = vmatprep.subr.mxu0 0.0
    %739 = vmatpush1.msra.mxu0 0.0
    %740 = vmatprep.subr.mxu0 0.0
    %741 = vmatpush1.msra.mxu0 0.0
    %742 = vmatprep.subr.mxu0 0.0
    %743 = vmatpush1.msra.mxu0 0.0
    %744 = vmatprep.subr.mxu0 0.0
    %745 = vmatpush1.msra.mxu0 0.0
    %746 = vmatprep.subr.mxu0 0.0
    %747 = vmatpush1.msra.mxu0 0.0
    %748 = vmatprep.subr.mxu0 0.0
    %749 = vmatpush1.msra.mxu0 0.0
    %750 = vmatprep.subr.mxu0 0.0
    %751 = vmatpush1.msra.mxu0 0.0
    %752 = vmatprep.subr.mxu0 0.0
    %753 = vmatpush1.msra.mxu0 0.0
    %754 = vmatprep.subr.mxu0 0.0
    %755 = vmatpush1.msra.mxu0 0.0
    %756 = vmatprep.subr.mxu0 0.0
    %757 = vmatpush1.msra.mxu0 0.0
    %758 = vmatprep.subr.mxu0 0.0
    %759 = vmatpush1.msra.mxu0 0.0
    %760 = vmatprep.subr.mxu0 0.0
    %761 = vmatpush1.msra.mxu0 0.0
    %762 = vmatprep.subr.mxu0 0.0
    %763 = vmatpush1.msra.mxu0 0.0
    %764 = vmatprep.subr.mxu0 0.0
    %765 = vmatpush1.msra.mxu0 0.0
    %766 = vmatprep.mubr.f32.mxu0 0.0
    %767 = vmatmul.mubr.f32.gmra.mrb[0].mxu0 %v700
    %v768 = vpop.f32.mrb[0].mxu0
    %v769 = vadd.f32 0.0, %v768
    %v770 = vpop.f32.mrb[0].mxu0
    %v771 = vadd.f32 0.0, %v770
    %772 = vdwg.mxu0
    %v775 = vrot.slane %v769, 5
    %v776 = vrot.slane %v771, 5
    %v777 = vrot.slane %v769, 6
    %v778 = vrot.slane %v771, 6
    %v783 = vadd.f32 %v689, %v775
    %v784 = vadd.f32 %v690, %v776
    %v785 = vadd.f32 %v691, %v777
    %v786 = vadd.f32 %v692, %v778
    %v787 = vxor.u32 %v783, 2147483648
    %v788 = vxor.u32 %v785, 2147483648
    %v789 = vmul.f32 %v787, 1.442695
    %v790 = vpow.pop %v789
    %v791 = vmul.f32 %v788, 1.442695
    %v792 = vpow.pop %v791
    %v793 = vadd.f32 %v790, 1.0
    %v794 = vadd.f32 %v792, 1.0
    %v795 = vrcp.pop %v793
    %v796 = vmul.f32 1.0, %v795
    %v797 = vrcp.pop %v794
    %v798 = vmul.f32 1.0, %v797
    %v799 = vtanh.pop %v784
    %v800 = vtanh.pop %v786
    %v801 = vxor.u32 %v784, 2147483648
    %v802 = vxor.u32 %v786, 2147483648
    %v803 = vmul.f32 %v801, 1.442695
    %v804 = vpow.pop %v803
    %v805 = vmul.f32 %v802, 1.442695
    %v806 = vpow.pop %v805
    %v807 = vadd.f32 %v804, 1.0
    %v808 = vadd.f32 %v806, 1.0
    %v809 = vrcp.pop %v807
    %v810 = vmul.f32 1.0, %v809
    %v811 = vrcp.pop %v808
    %v812 = vmul.f32 1.0, %v811
    %v815 = vrot.slane %v675, 7
    %v816 = vrot.slane %v676, 7
    %v819 = vmul.f32 %v796, %v815
    %v820 = vmul.f32 %v798, %v816
    %v821 = vmul.f32 %v796, %v799
    %v822 = vmul.f32 %v798, %v800
    %825 = vrot.lane.b32.xlu0 %v821, 64
    %v826 = vpop.permute.xlu0 %825
    %827 = vrot.lane.b32.xlu0 %v822, 64
    %v828 = vpop.permute.xlu0 %827
    %v831 = vadd.f32 %v819, %v826
    %v832 = vadd.f32 %v820, %v828
    %v833 = vtanh.pop %v831
    %v834 = vtanh.pop %v832
    %v835 = vmul.f32 %v810, %v833
    %v836 = vmul.f32 %v812, %v834
    %v839 = vrot.slane %v835, 3
    %v840 = vrot.slane %v836, 2
    %v841 = vsel %vm387, %v840, %v839
    %842 = vrot.lane.b32.xlu0 %v841, 64
    %v843 = vpop.permute.xlu0 %842
    %v844 = vsel %vm241, %v843, 0
    %846 = vmatprep.subr.mxu0 %v180
    %847 = vmatpush1.msra.mxu0 %v179
    %848 = vmatprep.subr.mxu0 %v182
    %849 = vmatpush1.msra.mxu0 %v181
    %850 = vmatprep.subr.mxu0 %v184
    %851 = vmatpush1.msra.mxu0 %v183
    %852 = vmatprep.subr.mxu0 %v186
    %853 = vmatpush1.msra.mxu0 %v185
    %854 = vmatprep.subr.mxu0 %v188
    %855 = vmatpush1.msra.mxu0 %v187
    %856 = vmatprep.subr.mxu0 %v190
    %857 = vmatpush1.msra.mxu0 %v189
    %858 = vmatprep.subr.mxu0 %v192
    %859 = vmatpush1.msra.mxu0 %v191
    %860 = vmatprep.subr.mxu0 %v194
    %861 = vmatpush1.msra.mxu0 %v193
    %862 = vmatprep.subr.mxu0 0.0
    %863 = vmatpush1.msra.mxu0 0.0
    %864 = vmatprep.subr.mxu0 0.0
    %865 = vmatpush1.msra.mxu0 0.0
    %866 = vmatprep.subr.mxu0 0.0
    %867 = vmatpush1.msra.mxu0 0.0
    %868 = vmatprep.subr.mxu0 0.0
    %869 = vmatpush1.msra.mxu0 0.0
    %870 = vmatprep.subr.mxu0 0.0
    %871 = vmatpush1.msra.mxu0 0.0
    %872 = vmatprep.subr.mxu0 0.0
    %873 = vmatpush1.msra.mxu0 0.0
    %874 = vmatprep.subr.mxu0 0.0
    %875 = vmatpush1.msra.mxu0 0.0
    %876 = vmatprep.subr.mxu0 0.0
    %877 = vmatpush1.msra.mxu0 0.0
    %878 = vmatprep.subr.mxu0 0.0
    %879 = vmatpush1.msra.mxu0 0.0
    %880 = vmatprep.subr.mxu0 0.0
    %881 = vmatpush1.msra.mxu0 0.0
    %882 = vmatprep.subr.mxu0 0.0
    %883 = vmatpush1.msra.mxu0 0.0
    %884 = vmatprep.subr.mxu0 0.0
    %885 = vmatpush1.msra.mxu0 0.0
    %886 = vmatprep.subr.mxu0 0.0
    %887 = vmatpush1.msra.mxu0 0.0
    %888 = vmatprep.subr.mxu0 0.0
    %889 = vmatpush1.msra.mxu0 0.0
    %890 = vmatprep.subr.mxu0 0.0
    %891 = vmatpush1.msra.mxu0 0.0
    %892 = vmatprep.subr.mxu0 0.0
    %893 = vmatpush1.msra.mxu0 0.0
    %894 = vmatprep.subr.mxu0 0.0
    %895 = vmatpush1.msra.mxu0 0.0
    %896 = vmatprep.subr.mxu0 0.0
    %897 = vmatpush1.msra.mxu0 0.0
    %898 = vmatprep.subr.mxu0 0.0
    %899 = vmatpush1.msra.mxu0 0.0
    %900 = vmatprep.subr.mxu0 0.0
    %901 = vmatpush1.msra.mxu0 0.0
    %902 = vmatprep.subr.mxu0 0.0
    %903 = vmatpush1.msra.mxu0 0.0
    %904 = vmatprep.subr.mxu0 0.0
    %905 = vmatpush1.msra.mxu0 0.0
    %906 = vmatprep.subr.mxu0 0.0
    %907 = vmatpush1.msra.mxu0 0.0
    %908 = vmatprep.subr.mxu0 0.0
    %909 = vmatpush1.msra.mxu0 0.0
    %910 = vmatprep.mubr.f32.mxu0 0.0
    %911 = vmatmul.mubr.f32.gmra.mrb[0].mxu0 %v844
    %v912 = vpop.f32.mrb[0].mxu0
    %v913 = vadd.f32 0.0, %v912
    %v914 = vpop.f32.mrb[0].mxu0
    %v915 = vadd.f32 0.0, %v914
    %916 = vdwg.mxu0
    %v919 = vrot.slane %v913, 4
    %v920 = vrot.slane %v915, 4
    %v921 = vrot.slane %v913, 5
    %v922 = vrot.slane %v915, 5
    %v927 = vadd.f32 %v237, %v919
    %v928 = vadd.f32 %v238, %v920
    %v929 = vadd.f32 %v239, %v921
    %v930 = vadd.f32 %v240, %v922
    %v931 = vxor.u32 %v927, 2147483648
    %v932 = vxor.u32 %v929, 2147483648
    %v933 = vmul.f32 %v931, 1.442695
    %v934 = vpow.pop %v933
    %v935 = vmul.f32 %v932, 1.442695
    %v936 = vpow.pop %v935
    %v937 = vadd.f32 %v934, 1.0
    %v938 = vadd.f32 %v936, 1.0
    %v939 = vrcp.pop %v937
    %v940 = vmul.f32 1.0, %v939
    %v941 = vrcp.pop %v938
    %v942 = vmul.f32 1.0, %v941
    %v943 = vtanh.pop %v928
    %v944 = vtanh.pop %v930
    %v945 = vxor.u32 %v928, 2147483648
    %v946 = vxor.u32 %v930, 2147483648
    %v947 = vmul.f32 %v945, 1.442695
    %v948 = vpow.pop %v947
    %v949 = vmul.f32 %v946, 1.442695
    %v950 = vpow.pop %v949
    %v951 = vadd.f32 %v948, 1.0
    %v952 = vadd.f32 %v950, 1.0
    %v953 = vrcp.pop %v951
    %v954 = vmul.f32 1.0, %v953
    %v955 = vrcp.pop %v952
    %v956 = vmul.f32 1.0, %v955
    %v959 = vrot.slane %v831, 7
    %v960 = vrot.slane %v832, 7
    %v963 = vmul.f32 %v940, %v959
    %v964 = vmul.f32 %v942, %v960
    %v965 = vmul.f32 %v940, %v943
    %v966 = vmul.f32 %v942, %v944
    %969 = vrot.lane.b32.xlu0 %v965, 64
    %v970 = vpop.permute.xlu0 %969
    %971 = vrot.lane.b32.xlu0 %v966, 64
    %v972 = vpop.permute.xlu0 %971
    %v975 = vadd.f32 %v963, %v970
    %v976 = vadd.f32 %v964, %v972
    %v977 = vtanh.pop %v975
    %v978 = vtanh.pop %v976
    %v979 = vmul.f32 %v954, %v977
    %v980 = vmul.f32 %v956, %v978
    %v983 = vrot.slane %v979, 4
    %v984 = vrot.slane %v980, 3
    %v985 = vsel %vm387, %v984, %v983
    %986 = vrot.lane.b32.xlu0 %v985, 64
    %v987 = vpop.permute.xlu0 %986
    %v988 = vsel %vm241, %v987, 0
    %990 = vmatprep.subr.mxu0 %v180
    %991 = vmatpush1.msra.mxu0 %v179
    %992 = vmatprep.subr.mxu0 %v182
    %993 = vmatpush1.msra.mxu0 %v181
    %994 = vmatprep.subr.mxu0 %v184
    %995 = vmatpush1.msra.mxu0 %v183
    %996 = vmatprep.subr.mxu0 %v186
    %997 = vmatpush1.msra.mxu0 %v185
    %998 = vmatprep.subr.mxu0 %v188
    %999 = vmatpush1.msra.mxu0 %v187
    %1000 = vmatprep.subr.mxu0 %v190
    %1001 = vmatpush1.msra.mxu0 %v189
    %1002 = vmatprep.subr.mxu0 %v192
    %1003 = vmatpush1.msra.mxu0 %v191
    %1004 = vmatprep.subr.mxu0 %v194
    %1005 = vmatpush1.msra.mxu0 %v193
    %1006 = vmatprep.subr.mxu0 0.0
    %1007 = vmatpush1.msra.mxu0 0.0
    %1008 = vmatprep.subr.mxu0 0.0
    %1009 = vmatpush1.msra.mxu0 0.0
    %1010 = vmatprep.subr.mxu0 0.0
    %1011 = vmatpush1.msra.mxu0 0.0
    %1012 = vmatprep.subr.mxu0 0.0
    %1013 = vmatpush1.msra.mxu0 0.0
    %1014 = vmatprep.subr.mxu0 0.0
    %1015 = vmatpush1.msra.mxu0 0.0
    %1016 = vmatprep.subr.mxu0 0.0
    %1017 = vmatpush1.msra.mxu0 0.0
    %1018 = vmatprep.subr.mxu0 0.0
    %1019 = vmatpush1.msra.mxu0 0.0
    %1020 = vmatprep.subr.mxu0 0.0
    %1021 = vmatpush1.msra.mxu0 0.0
    %1022 = vmatprep.subr.mxu0 0.0
    %1023 = vmatpush1.msra.mxu0 0.0
    %1024 = vmatprep.subr.mxu0 0.0
    %1025 = vmatpush1.msra.mxu0 0.0
    %1026 = vmatprep.subr.mxu0 0.0
    %1027 = vmatpush1.msra.mxu0 0.0
    %1028 = vmatprep.subr.mxu0 0.0
    %1029 = vmatpush1.msra.mxu0 0.0
    %1030 = vmatprep.subr.mxu0 0.0
    %1031 = vmatpush1.msra.mxu0 0.0
    %1032 = vmatprep.subr.mxu0 0.0
    %1033 = vmatpush1.msra.mxu0 0.0
    %1034 = vmatprep.subr.mxu0 0.0
    %1035 = vmatpush1.msra.mxu0 0.0
    %1036 = vmatprep.subr.mxu0 0.0
    %1037 = vmatpush1.msra.mxu0 0.0
    %1038 = vmatprep.subr.mxu0 0.0
    %1039 = vmatpush1.msra.mxu0 0.0
    %1040 = vmatprep.subr.mxu0 0.0
    %1041 = vmatpush1.msra.mxu0 0.0
    %1042 = vmatprep.subr.mxu0 0.0
    %1043 = vmatpush1.msra.mxu0 0.0
    %1044 = vmatprep.subr.mxu0 0.0
    %1045 = vmatpush1.msra.mxu0 0.0
    %1046 = vmatprep.subr.mxu0 0.0
    %1047 = vmatpush1.msra.mxu0 0.0
    %1048 = vmatprep.subr.mxu0 0.0
    %1049 = vmatpush1.msra.mxu0 0.0
    %1050 = vmatprep.subr.mxu0 0.0
    %1051 = vmatpush1.msra.mxu0 0.0
    %1052 = vmatprep.subr.mxu0 0.0
    %1053 = vmatpush1.msra.mxu0 0.0
    %1054 = vmatprep.mubr.f32.mxu0 0.0
    %1055 = vmatmul.mubr.f32.gmra.mrb[0].mxu0 %v988
    %v1056 = vpop.f32.mrb[0].mxu0
    %v1057 = vadd.f32 0.0, %v1056
    %v1058 = vpop.f32.mrb[0].mxu0
    %v1059 = vadd.f32 0.0, %v1058
    %1060 = vdwg.mxu0
    %v1063 = vrot.slane %v1057, 3
    %v1064 = vrot.slane %v1059, 3
    %v1065 = vrot.slane %v1057, 4
    %v1066 = vrot.slane %v1059, 4
    %v1071 = vadd.f32 %v380, %v1063
    %v1072 = vadd.f32 %v381, %v1064
    %v1073 = vadd.f32 %v382, %v1065
    %v1074 = vadd.f32 %v383, %v1066
    %v1075 = vxor.u32 %v1071, 2147483648
    %v1076 = vxor.u32 %v1073, 2147483648
    %v1077 = vmul.f32 %v1075, 1.442695
    %v1078 = vpow.pop %v1077
    %v1079 = vmul.f32 %v1076, 1.442695
    %v1080 = vpow.pop %v1079
    %v1081 = vadd.f32 %v1078, 1.0
    %v1082 = vadd.f32 %v1080, 1.0
    %v1083 = vrcp.pop %v1081
    %v1084 = vmul.f32 1.0, %v1083
    %v1085 = vrcp.pop %v1082
    %v1086 = vmul.f32 1.0, %v1085
    %v1087 = vtanh.pop %v1072
    %v1088 = vtanh.pop %v1074
    %v1089 = vxor.u32 %v1072, 2147483648
    %v1090 = vxor.u32 %v1074, 2147483648
    %v1091 = vmul.f32 %v1089, 1.442695
    %v1092 = vpow.pop %v1091
    %v1093 = vmul.f32 %v1090, 1.442695
    %v1094 = vpow.pop %v1093
    %v1095 = vadd.f32 %v1092, 1.0
    %v1096 = vadd.f32 %v1094, 1.0
    %v1097 = vrcp.pop %v1095
    %v1098 = vmul.f32 1.0, %v1097
    %v1099 = vrcp.pop %v1096
    %v1100 = vmul.f32 1.0, %v1099
    %v1103 = vrot.slane %v975, 7
    %v1104 = vrot.slane %v976, 7
    %v1107 = vmul.f32 %v1084, %v1103
    %v1108 = vmul.f32 %v1086, %v1104
    %v1109 = vmul.f32 %v1084, %v1087
    %v1110 = vmul.f32 %v1086, %v1088
    %1113 = vrot.lane.b32.xlu0 %v1109, 64
    %v1114 = vpop.permute.xlu0 %1113
    %1115 = vrot.lane.b32.xlu0 %v1110, 64
    %v1116 = vpop.permute.xlu0 %1115
    %v1119 = vadd.f32 %v1107, %v1114
    %v1120 = vadd.f32 %v1108, %v1116
    %v1121 = vtanh.pop %v1119
    %v1122 = vtanh.pop %v1120
    %v1123 = vmul.f32 %v1098, %v1121
    %v1124 = vmul.f32 %v1100, %v1122
    %v1127 = vrot.slane %v1123, 5
    %v1128 = vrot.slane %v1124, 4
    %v1129 = vsel %vm387, %v1128, %v1127
    %1130 = vrot.lane.b32.xlu0 %v1129, 64
    %v1131 = vpop.permute.xlu0 %1130
    %v1132 = vsel %vm241, %v1131, 0
    %1134 = vmatprep.subr.mxu0 %v180
    %1135 = vmatpush1.msra.mxu0 %v179
    %1136 = vmatprep.subr.mxu0 %v182
    %1137 = vmatpush1.msra.mxu0 %v181
    %1138 = vmatprep.subr.mxu0 %v184
    %1139 = vmatpush1.msra.mxu0 %v183
    %1140 = vmatprep.subr.mxu0 %v186
    %1141 = vmatpush1.msra.mxu0 %v185
    %1142 = vmatprep.subr.mxu0 %v188
    %1143 = vmatpush1.msra.mxu0 %v187
    %1144 = vmatprep.subr.mxu0 %v190
    %1145 = vmatpush1.msra.mxu0 %v189
    %1146 = vmatprep.subr.mxu0 %v192
    %1147 = vmatpush1.msra.mxu0 %v191
    %1148 = vmatprep.subr.mxu0 %v194
    %1149 = vmatpush1.msra.mxu0 %v193
    %1150 = vmatprep.subr.mxu0 0.0
    %1151 = vmatpush1.msra.mxu0 0.0
    %1152 = vmatprep.subr.mxu0 0.0
    %1153 = vmatpush1.msra.mxu0 0.0
    %1154 = vmatprep.subr.mxu0 0.0
    %1155 = vmatpush1.msra.mxu0 0.0
    %1156 = vmatprep.subr.mxu0 0.0
    %1157 = vmatpush1.msra.mxu0 0.0
    %1158 = vmatprep.subr.mxu0 0.0
    %1159 = vmatpush1.msra.mxu0 0.0
    %1160 = vmatprep.subr.mxu0 0.0
    %1161 = vmatpush1.msra.mxu0 0.0
    %1162 = vmatprep.subr.mxu0 0.0
    %1163 = vmatpush1.msra.mxu0 0.0
    %1164 = vmatprep.subr.mxu0 0.0
    %1165 = vmatpush1.msra.mxu0 0.0
    %1166 = vmatprep.subr.mxu0 0.0
    %1167 = vmatpush1.msra.mxu0 0.0
    %1168 = vmatprep.subr.mxu0 0.0
    %1169 = vmatpush1.msra.mxu0 0.0
    %1170 = vmatprep.subr.mxu0 0.0
    %1171 = vmatpush1.msra.mxu0 0.0
    %1172 = vmatprep.subr.mxu0 0.0
    %1173 = vmatpush1.msra.mxu0 0.0
    %1174 = vmatprep.subr.mxu0 0.0
    %1175 = vmatpush1.msra.mxu0 0.0
    %1176 = vmatprep.subr.mxu0 0.0
    %1177 = vmatpush1.msra.mxu0 0.0
    %1178 = vmatprep.subr.mxu0 0.0
    %1179 = vmatpush1.msra.mxu0 0.0
    %1180 = vmatprep.subr.mxu0 0.0
    %1181 = vmatpush1.msra.mxu0 0.0
    %1182 = vmatprep.subr.mxu0 0.0
    %1183 = vmatpush1.msra.mxu0 0.0
    %1184 = vmatprep.subr.mxu0 0.0
    %1185 = vmatpush1.msra.mxu0 0.0
    %1186 = vmatprep.subr.mxu0 0.0
    %1187 = vmatpush1.msra.mxu0 0.0
    %1188 = vmatprep.subr.mxu0 0.0
    %1189 = vmatpush1.msra.mxu0 0.0
    %1190 = vmatprep.subr.mxu0 0.0
    %1191 = vmatpush1.msra.mxu0 0.0
    %1192 = vmatprep.subr.mxu0 0.0
    %1193 = vmatpush1.msra.mxu0 0.0
    %1194 = vmatprep.subr.mxu0 0.0
    %1195 = vmatpush1.msra.mxu0 0.0
    %1196 = vmatprep.subr.mxu0 0.0
    %1197 = vmatpush1.msra.mxu0 0.0
    %1198 = vmatprep.mubr.f32.mxu0 0.0
    %1199 = vmatmul.mubr.f32.gmra.mrb[0].mxu0 %v1132
    %v1200 = vpop.f32.mrb[0].mxu0
    %v1201 = vadd.f32 0.0, %v1200
    %v1202 = vpop.f32.mrb[0].mxu0
    %v1203 = vadd.f32 0.0, %v1202
    %1204 = vdwg.mxu0
    %v1207 = vrot.slane %v1201, 2
    %v1208 = vrot.slane %v1203, 2
    %v1209 = vrot.slane %v1201, 3
    %v1210 = vrot.slane %v1203, 3
    %v1215 = vadd.f32 %v534, %v1207
    %v1216 = vadd.f32 %v535, %v1208
    %v1217 = vadd.f32 %v536, %v1209
    %v1218 = vadd.f32 %v537, %v1210
    %v1219 = vxor.u32 %v1215, 2147483648
    %v1220 = vxor.u32 %v1217, 2147483648
    %v1221 = vmul.f32 %v1219, 1.442695
    %v1222 = vpow.pop %v1221
    %v1223 = vmul.f32 %v1220, 1.442695
    %v1224 = vpow.pop %v1223
    %v1225 = vadd.f32 %v1222, 1.0
    %v1226 = vadd.f32 %v1224, 1.0
    %v1227 = vrcp.pop %v1225
    %v1228 = vmul.f32 1.0, %v1227
    %v1229 = vrcp.pop %v1226
    %v1230 = vmul.f32 1.0, %v1229
    %v1231 = vtanh.pop %v1216
    %v1232 = vtanh.pop %v1218
    %v1233 = vxor.u32 %v1216, 2147483648
    %v1234 = vxor.u32 %v1218, 2147483648
    %v1235 = vmul.f32 %v1233, 1.442695
    %v1236 = vpow.pop %v1235
    %v1237 = vmul.f32 %v1234, 1.442695
    %v1238 = vpow.pop %v1237
    %v1239 = vadd.f32 %v1236, 1.0
    %v1240 = vadd.f32 %v1238, 1.0
    %v1241 = vrcp.pop %v1239
    %v1242 = vmul.f32 1.0, %v1241
    %v1243 = vrcp.pop %v1240
    %v1244 = vmul.f32 1.0, %v1243
    %v1247 = vrot.slane %v1119, 7
    %v1248 = vrot.slane %v1120, 7
    %v1251 = vmul.f32 %v1228, %v1247
    %v1252 = vmul.f32 %v1230, %v1248
    %v1253 = vmul.f32 %v1228, %v1231
    %v1254 = vmul.f32 %v1230, %v1232
    %1257 = vrot.lane.b32.xlu0 %v1253, 64
    %v1258 = vpop.permute.xlu0 %1257
    %1259 = vrot.lane.b32.xlu0 %v1254, 64
    %v1260 = vpop.permute.xlu0 %1259
    %v1263 = vadd.f32 %v1251, %v1258
    %v1264 = vadd.f32 %v1252, %v1260
    %v1265 = vtanh.pop %v1263
    %v1266 = vtanh.pop %v1264
    %v1267 = vmul.f32 %v1242, %v1265
    %v1268 = vmul.f32 %v1244, %v1266
    %v1271 = vrot.slane %v1267, 6
    %v1272 = vrot.slane %v1268, 5
    %v1273 = vsel %vm387, %v1272, %v1271
    %1274 = vrot.lane.b32.xlu0 %v1273, 64
    %v1275 = vpop.permute.xlu0 %1274
    %v1276 = vsel %vm241, %v1275, 0
    %1278 = vmatprep.subr.mxu0 %v180
    %1279 = vmatpush1.msra.mxu0 %v179
    %1280 = vmatprep.subr.mxu0 %v182
    %1281 = vmatpush1.msra.mxu0 %v181
    %1282 = vmatprep.subr.mxu0 %v184
    %1283 = vmatpush1.msra.mxu0 %v183
    %1284 = vmatprep.subr.mxu0 %v186
    %1285 = vmatpush1.msra.mxu0 %v185
    %1286 = vmatprep.subr.mxu0 %v188
    %1287 = vmatpush1.msra.mxu0 %v187
    %1288 = vmatprep.subr.mxu0 %v190
    %1289 = vmatpush1.msra.mxu0 %v189
    %1290 = vmatprep.subr.mxu0 %v192
    %1291 = vmatpush1.msra.mxu0 %v191
    %1292 = vmatprep.subr.mxu0 %v194
    %1293 = vmatpush1.msra.mxu0 %v193
    %1294 = vmatprep.subr.mxu0 0.0
    %1295 = vmatpush1.msra.mxu0 0.0
    %1296 = vmatprep.subr.mxu0 0.0
    %1297 = vmatpush1.msra.mxu0 0.0
    %1298 = vmatprep.subr.mxu0 0.0
    %1299 = vmatpush1.msra.mxu0 0.0
    %1300 = vmatprep.subr.mxu0 0.0
    %1301 = vmatpush1.msra.mxu0 0.0
    %1302 = vmatprep.subr.mxu0 0.0
    %1303 = vmatpush1.msra.mxu0 0.0
    %1304 = vmatprep.subr.mxu0 0.0
    %1305 = vmatpush1.msra.mxu0 0.0
    %1306 = vmatprep.subr.mxu0 0.0
    %1307 = vmatpush1.msra.mxu0 0.0
    %1308 = vmatprep.subr.mxu0 0.0
    %1309 = vmatpush1.msra.mxu0 0.0
    %1310 = vmatprep.subr.mxu0 0.0
    %1311 = vmatpush1.msra.mxu0 0.0
    %1312 = vmatprep.subr.mxu0 0.0
    %1313 = vmatpush1.msra.mxu0 0.0
    %1314 = vmatprep.subr.mxu0 0.0
    %1315 = vmatpush1.msra.mxu0 0.0
    %1316 = vmatprep.subr.mxu0 0.0
    %1317 = vmatpush1.msra.mxu0 0.0
    %1318 = vmatprep.subr.mxu0 0.0
    %1319 = vmatpush1.msra.mxu0 0.0
    %1320 = vmatprep.subr.mxu0 0.0
    %1321 = vmatpush1.msra.mxu0 0.0
    %1322 = vmatprep.subr.mxu0 0.0
    %1323 = vmatpush1.msra.mxu0 0.0
    %1324 = vmatprep.subr.mxu0 0.0
    %1325 = vmatpush1.msra.mxu0 0.0
    %1326 = vmatprep.subr.mxu0 0.0
    %1327 = vmatpush1.msra.mxu0 0.0
    %1328 = vmatprep.subr.mxu0 0.0
    %1329 = vmatpush1.msra.mxu0 0.0
    %1330 = vmatprep.subr.mxu0 0.0
    %1331 = vmatpush1.msra.mxu0 0.0
    %1332 = vmatprep.subr.mxu0 0.0
    %1333 = vmatpush1.msra.mxu0 0.0
    %1334 = vmatprep.subr.mxu0 0.0
    %1335 = vmatpush1.msra.mxu0 0.0
    %1336 = vmatprep.subr.mxu0 0.0
    %1337 = vmatpush1.msra.mxu0 0.0
    %1338 = vmatprep.subr.mxu0 0.0
    %1339 = vmatpush1.msra.mxu0 0.0
    %1340 = vmatprep.subr.mxu0 0.0
    %1341 = vmatpush1.msra.mxu0 0.0
    %1342 = vmatprep.mubr.f32.mxu0 0.0
    %1343 = vmatmul.mubr.f32.gmra.mrb[0].mxu0 %v1276
    %v1344 = vpop.f32.mrb[0].mxu0
    %v1345 = vadd.f32 0.0, %v1344
    %v1346 = vpop.f32.mrb[0].mxu0
    %v1347 = vadd.f32 0.0, %v1346
    %1348 = vdwg.mxu0
    %v1351 = vrot.slane %v1345, 1
    %v1352 = vrot.slane %v1347, 1
    %v1353 = vrot.slane %v1345, 2
    %v1354 = vrot.slane %v1347, 2
    %v1359 = vadd.f32 %v689, %v1351
    %v1360 = vadd.f32 %v690, %v1352
    %v1361 = vadd.f32 %v691, %v1353
    %v1362 = vadd.f32 %v692, %v1354
    %v1363 = vxor.u32 %v1359, 2147483648
    %v1364 = vxor.u32 %v1361, 2147483648
    %v1365 = vmul.f32 %v1363, 1.442695
    %v1366 = vpow.pop %v1365
    %v1367 = vmul.f32 %v1364, 1.442695
    %v1368 = vpow.pop %v1367
    %v1369 = vadd.f32 %v1366, 1.0
    %v1370 = vadd.f32 %v1368, 1.0
    %v1371 = vrcp.pop %v1369
    %v1372 = vmul.f32 1.0, %v1371
    %v1373 = vrcp.pop %v1370
    %v1374 = vmul.f32 1.0, %v1373
    %v1375 = vtanh.pop %v1360
    %v1376 = vtanh.pop %v1362
    %v1377 = vxor.u32 %v1360, 2147483648
    %v1378 = vxor.u32 %v1362, 2147483648
    %v1379 = vmul.f32 %v1377, 1.442695
    %v1380 = vpow.pop %v1379
    %v1381 = vmul.f32 %v1378, 1.442695
    %v1382 = vpow.pop %v1381
    %v1383 = vadd.f32 %v1380, 1.0
    %v1384 = vadd.f32 %v1382, 1.0
    %v1385 = vrcp.pop %v1383
    %v1386 = vmul.f32 1.0, %v1385
    %v1387 = vrcp.pop %v1384
    %v1388 = vmul.f32 1.0, %v1387
    %v1391 = vrot.slane %v1263, 7
    %v1392 = vrot.slane %v1264, 7
    %v1395 = vmul.f32 %v1372, %v1391
    %v1396 = vmul.f32 %v1374, %v1392
    %v1397 = vmul.f32 %v1372, %v1375
    %v1398 = vmul.f32 %v1374, %v1376
    %1401 = vrot.lane.b32.xlu0 %v1397, 64
    %v1402 = vpop.permute.xlu0 %1401
    %1403 = vrot.lane.b32.xlu0 %v1398, 64
    %v1404 = vpop.permute.xlu0 %1403
    %v1407 = vadd.f32 %v1395, %v1402
    %v1408 = vadd.f32 %v1396, %v1404
    %v1409 = vtanh.pop %v1407
    %v1410 = vtanh.pop %v1408
    %v1411 = vmul.f32 %v1386, %v1409
    %v1412 = vmul.f32 %v1388, %v1410
    %vm1413 = vcmask 1040384
    %v1414 = vsel %vm1413, %v370, %v524
    %v1415 = vsel %vm1413, %v371, %v525
    %vm1416 = vcmask 1041408
    %v1417 = vsel %vm1416, %v1414, %v679
    %v1418 = vsel %vm1416, %v1415, %v680
    %vm1419 = vcmask 1042432
    %v1420 = vsel %vm1419, %v1417, %v835
    %v1421 = vsel %vm1419, %v1418, %v836
    %vm1422 = vcmask 1043456
    %v1423 = vsel %vm1422, %v1420, %v979
    %v1424 = vsel %vm1422, %v1421, %v980
    %vm1425 = vcmask 1044480
    %v1426 = vsel %vm1425, %v1423, %v1123
    %v1427 = vsel %vm1425, %v1424, %v1124
    %vm1428 = vcmask 1045504
    %v1429 = vsel %vm1428, %v1426, %v1267
    %v1430 = vsel %vm1428, %v1427, %v1268
    %vm1431 = vcmask 1046528
    %v1432 = vsel %vm1431, %v1429, %v1411
    %v1433 = vsel %vm1431, %v1430, %v1412
    %v1436 = vrot.slane %v1411, 7
    %v1437 = vrot.slane %v1412, 7
    %v1440 = vrot.slane %v1267, 5
    %v1443 = vrot.slane %v1123, 3
    %v1444 = vrot.slane %v1124, 3
    %v1447 = vrot.slane %v979, 1
    %v1448 = vrot.slane %v980, 1
    %v1451 = vrot.slane %v835, 7
    %v1452 = vrot.slane %v836, 7
    %v1455 = vrot.slane %v679, 5
    %v1456 = vrot.slane %v680, 5
    %v1459 = vrot.slane %v524, 3
    %v1460 = vrot.slane %v525, 3
    %v1463 = vrot.slane %v370, 1
    %v1464 = vrot.slane %v371, 1
    %v1467 = vsel %vm1413, %v1436, %v1440
    %v1468 = vsel %vm1413, %v1437, %v1272
    %v1469 = vsel %vm1416, %v1467, %v1443
    %v1470 = vsel %vm1416, %v1468, %v1444
    %v1471 = vsel %vm1419, %v1469, %v1447
    %v1472 = vsel %vm1419, %v1470, %v1448
    %v1473 = vsel %vm1422, %v1471, %v1451
    %v1474 = vsel %vm1422, %v1472, %v1452
    %v1475 = vsel %vm1425, %v1473, %v1455
    %v1476 = vsel %vm1425, %v1474, %v1456
    %v1477 = vsel %vm1428, %v1475, %v1459
    %v1478 = vsel %vm1428, %v1476, %v1460
    %v1479 = vsel %vm1431, %v1477, %v1463
    %v1480 = vsel %vm1431, %v1478, %v1464
    %1483 = vrot.lane.b32.xlu0 %v1432, 64
    %v1484 = vpop.permute.xlu0 %1483
    %1485 = vrot.lane.b32.xlu0 %v1433, 64
    %v1486 = vpop.permute.xlu0 %1485
    %1491 = vrot.lane.b32.xlu0 %v1479, 64
    %v1492 = vpop.permute.xlu0 %1491
    %1493 = vrot.lane.b32.xlu0 %v1480, 64
    %v1494 = vpop.permute.xlu0 %1493
    %v1497 = vsel %vm93, %v1484, %v1492
    %v1498 = vsel %vm93, %v1486, %v1494
    %v1499 = vld [vmem:[%s2] sm:$0x3]
    %v1500 = vlaneseq
    %v1501 = vshrl.u32 %v1500, 7
    %v1502 = vsub.s32 0, %v1501
    %v1503 = vrot.slane %v1499, %v1502
    %1505 = vbcast.lane.b32.xlu0 %v1503, 256
    %v1506 = vpop.permute.xlu0 %1505
    %v1507 = vlaneseq
    %v1508 = vshrl.u32 %v1507, 7
    %v1509 = vsub.s32 1, %v1508
    %v1510 = vrot.slane %v1499, %v1509
    %1512 = vbcast.lane.b32.xlu0 %v1510, 256
    %v1513 = vpop.permute.xlu0 %1512
    %v1514 = vmul.f32 %v1497, %v1506
    %v1515 = vmul.f32 %v1498, %v1513
    %v1516 = vld [vmem:[%s12] sm:$0xff]
    %v1517 = vld [vmem:[%s12 + $0x8] sm:$0xff]
    %v1518 = vld [vmem:[%s12 + $0x10] sm:$0xff]
    %v1519 = vld [vmem:[%s12 + $0x18] sm:$0xff]
    %v1520 = vld [vmem:[%s12 + $0x20] sm:$0xff]
    %v1521 = vld [vmem:[%s12 + $0x28] sm:$0xff]
    %v1522 = vld [vmem:[%s12 + $0x30] sm:$0xff]
    %v1523 = vld [vmem:[%s12 + $0x38] sm:$0xff]
    %v1524 = vmul.f32 %v71, %v1506
    %v1525 = vmul.f32 %v72, %v1513
    %v1526 = vld [vmem:[%s13] sm:$0xff]
    %v1527 = vld [vmem:[%s13 + $0x8] sm:$0xff]
    %vm1528 = vcmask 130048
    %v1530 = vsel %vm1528, %v1524, 0
    %v1533 = vsel %vm1528, %v1525, 0
    %1535 = vmatprep.subr.mxu0 0.0
    %1536 = vmatpush1.msra.mxu0 %v1526
    %1537 = vmatprep.subr.mxu0 0.0
    %1538 = vmatpush1.msra.mxu0 %v1527
    %1539 = vmatprep.subr.mxu0 0.0
    %1540 = vmatpush1.msra.mxu0 0.0
    %1541 = vmatprep.subr.mxu0 0.0
    %1542 = vmatpush1.msra.mxu0 0.0
    %1543 = vmatprep.subr.mxu0 0.0
    %1544 = vmatpush1.msra.mxu0 0.0
    %1545 = vmatprep.subr.mxu0 0.0
    %1546 = vmatpush1.msra.mxu0 0.0
    %1547 = vmatprep.subr.mxu0 0.0
    %1548 = vmatpush1.msra.mxu0 0.0
    %1549 = vmatprep.subr.mxu0 0.0
    %1550 = vmatpush1.msra.mxu0 0.0
    %1551 = vmatprep.subr.mxu0 0.0
    %1552 = vmatpush1.msra.mxu0 0.0
    %1553 = vmatprep.subr.mxu0 0.0
    %1554 = vmatpush1.msra.mxu0 0.0
    %1555 = vmatprep.subr.mxu0 0.0
    %1556 = vmatpush1.msra.mxu0 0.0
    %1557 = vmatprep.subr.mxu0 0.0
    %1558 = vmatpush1.msra.mxu0 0.0
    %1559 = vmatprep.subr.mxu0 0.0
    %1560 = vmatpush1.msra.mxu0 0.0
    %1561 = vmatprep.subr.mxu0 0.0
    %1562 = vmatpush1.msra.mxu0 0.0
    %1563 = vmatprep.subr.mxu0 0.0
    %1564 = vmatpush1.msra.mxu0 0.0
    %1565 = vmatprep.subr.mxu0 0.0
    %1566 = vmatpush1.msra.mxu0 0.0
    %1567 = vmatprep.subr.mxu0 0.0
    %1568 = vmatpush1.msra.mxu0 0.0
    %1569 = vmatprep.subr.mxu0 0.0
    %1570 = vmatpush1.msra.mxu0 0.0
    %1571 = vmatprep.subr.mxu0 0.0
    %1572 = vmatpush1.msra.mxu0 0.0
    %1573 = vmatprep.subr.mxu0 0.0
    %1574 = vmatpush1.msra.mxu0 0.0
    %1575 = vmatprep.subr.mxu0 0.0
    %1576 = vmatpush1.msra.mxu0 0.0
    %1577 = vmatprep.subr.mxu0 0.0
    %1578 = vmatpush1.msra.mxu0 0.0
    %1579 = vmatprep.subr.mxu0 0.0
    %1580 = vmatpush1.msra.mxu0 0.0
    %1581 = vmatprep.subr.mxu0 0.0
    %1582 = vmatpush1.msra.mxu0 0.0
    %1583 = vmatprep.subr.mxu0 0.0
    %1584 = vmatpush1.msra.mxu0 0.0
    %1585 = vmatprep.subr.mxu0 0.0
    %1586 = vmatpush1.msra.mxu0 0.0
    %1587 = vmatprep.subr.mxu0 0.0
    %1588 = vmatpush1.msra.mxu0 0.0
    %1589 = vmatprep.subr.mxu0 0.0
    %1590 = vmatpush1.msra.mxu0 0.0
    %1591 = vmatprep.subr.mxu0 0.0
    %1592 = vmatpush1.msra.mxu0 0.0
    %1593 = vmatprep.subr.mxu0 0.0
    %1594 = vmatpush1.msra.mxu0 0.0
    %1595 = vmatprep.subr.mxu0 0.0
    %1596 = vmatpush1.msra.mxu0 0.0
    %1597 = vmatprep.subr.mxu0 0.0
    %1598 = vmatpush1.msra.mxu0 0.0
    %1599 = vmatprep.mubr.f32.mxu0 0.0
    %1600 = vmatmul.mubr.f32.gmra.mrb[0].mxu0 %v1530
    %v1601 = vpop.f32.mrb[0].mxu0
    %v1602 = vadd.f32 0.0, %v1601
    %v1603 = vpop.f32.mrb[0].mxu0
    %1604 = vmatprep.mubr.f32.mxu0 0.0
    %1605 = vmatmul.mubr.f32.gmra.mrb[0].mxu0 %v1533
    %v1606 = vpop.f32.mrb[0].mxu0
    %v1607 = vadd.f32 0.0, %v1606
    %v1608 = vpop.f32.mrb[0].mxu0
    %1609 = vdwg.mxu0
    %v1611 = vsel %vm241, %v1514, 0
    %v1614 = vsel %vm241, %v1515, 0
    %1616 = vmatprep.subr.mxu0 0.0
    %1617 = vmatpush1.msra.mxu0 %v1516
    %1618 = vmatprep.subr.mxu0 0.0
    %1619 = vmatpush1.msra.mxu0 %v1517
    %1620 = vmatprep.subr.mxu0 0.0
    %1621 = vmatpush1.msra.mxu0 %v1518
    %1622 = vmatprep.subr.mxu0 0.0
    %1623 = vmatpush1.msra.mxu0 %v1519
    %1624 = vmatprep.subr.mxu0 0.0
    %1625 = vmatpush1.msra.mxu0 %v1520
    %1626 = vmatprep.subr.mxu0 0.0
    %1627 = vmatpush1.msra.mxu0 %v1521
    %1628 = vmatprep.subr.mxu0 0.0
    %1629 = vmatpush1.msra.mxu0 %v1522
    %1630 = vmatprep.subr.mxu0 0.0
    %1631 = vmatpush1.msra.mxu0 %v1523
    %1632 = vmatprep.subr.mxu0 0.0
    %1633 = vmatpush1.msra.mxu0 0.0
    %1634 = vmatprep.subr.mxu0 0.0
    %1635 = vmatpush1.msra.mxu0 0.0
    %1636 = vmatprep.subr.mxu0 0.0
    %1637 = vmatpush1.msra.mxu0 0.0
    %1638 = vmatprep.subr.mxu0 0.0
    %1639 = vmatpush1.msra.mxu0 0.0
    %1640 = vmatprep.subr.mxu0 0.0
    %1641 = vmatpush1.msra.mxu0 0.0
    %1642 = vmatprep.subr.mxu0 0.0
    %1643 = vmatpush1.msra.mxu0 0.0
    %1644 = vmatprep.subr.mxu0 0.0
    %1645 = vmatpush1.msra.mxu0 0.0
    %1646 = vmatprep.subr.mxu0 0.0
    %1647 = vmatpush1.msra.mxu0 0.0
    %1648 = vmatprep.subr.mxu0 0.0
    %1649 = vmatpush1.msra.mxu0 0.0
    %1650 = vmatprep.subr.mxu0 0.0
    %1651 = vmatpush1.msra.mxu0 0.0
    %1652 = vmatprep.subr.mxu0 0.0
    %1653 = vmatpush1.msra.mxu0 0.0
    %1654 = vmatprep.subr.mxu0 0.0
    %1655 = vmatpush1.msra.mxu0 0.0
    %1656 = vmatprep.subr.mxu0 0.0
    %1657 = vmatpush1.msra.mxu0 0.0
    %1658 = vmatprep.subr.mxu0 0.0
    %1659 = vmatpush1.msra.mxu0 0.0
    %1660 = vmatprep.subr.mxu0 0.0
    %1661 = vmatpush1.msra.mxu0 0.0
    %1662 = vmatprep.subr.mxu0 0.0
    %1663 = vmatpush1.msra.mxu0 0.0
    %1664 = vmatprep.subr.mxu0 0.0
    %1665 = vmatpush1.msra.mxu0 0.0
    %1666 = vmatprep.subr.mxu0 0.0
    %1667 = vmatpush1.msra.mxu0 0.0
    %1668 = vmatprep.subr.mxu0 0.0
    %1669 = vmatpush1.msra.mxu0 0.0
    %1670 = vmatprep.subr.mxu0 0.0
    %1671 = vmatpush1.msra.mxu0 0.0
    %1672 = vmatprep.subr.mxu0 0.0
    %1673 = vmatpush1.msra.mxu0 0.0
    %1674 = vmatprep.subr.mxu0 0.0
    %1675 = vmatpush1.msra.mxu0 0.0
    %1676 = vmatprep.subr.mxu0 0.0
    %1677 = vmatpush1.msra.mxu0 0.0
    %1678 = vmatprep.subr.mxu0 0.0
    %1679 = vmatpush1.msra.mxu0 0.0
    %1680 = vmatprep.mubr.f32.mxu0 0.0
    %1681 = vmatmul.mubr.f32.gmra.mrb[0].mxu0 %v1611
    %v1682 = vpop.f32.mrb[0].mxu0
    %v1683 = vadd.f32 %v1602, %v1682
    %v1684 = vpop.f32.mrb[0].mxu0
    %1685 = vmatprep.mubr.f32.mxu0 0.0
    %1686 = vmatmul.mubr.f32.gmra.mrb[0].mxu0 %v1614
    %v1687 = vpop.f32.mrb[0].mxu0
    %v1688 = vadd.f32 %v1607, %v1687
    %v1689 = vpop.f32.mrb[0].mxu0
    %1690 = vdwg.mxu0
    %v1691 = vld [vmem:[%s14] sm:$0x1]
    %v1694 = vrot.slane %v1683, 7
    %v1695 = vrot.slane %v1688, 7
    %v1698 = vsel %vm1413, 0.0, %v1694
    %v1699 = vsel %vm1413, 0.0, %v1695
    %1702 = vrot.lane.b32.xlu0 %v1698, 32
    %v1703 = vpop.permute.xlu0 %1702
    %1704 = vrot.lane.b32.xlu0 %v1699, 32
    %v1705 = vpop.permute.xlu0 %1704
    %v1708 = vadd.f32 %v1683, %v1703
    %v1709 = vadd.f32 %v1688, %v1705
    %v1710 = vrot.slane %v1683, 1
    %v1711 = vrot.slane %v1688, 1
    %v1714 = vsel %vm1431, %v1710, 0.0
    %v1715 = vsel %vm1431, %v1711, 0.0
    %1718 = vrot.lane.b32.xlu0 %v1714, 96
    %v1719 = vpop.permute.xlu0 %1718
    %1720 = vrot.lane.b32.xlu0 %v1715, 96
    %v1721 = vpop.permute.xlu0 %1720
    %v1724 = vadd.f32 %v1708, %v1719
    %v1725 = vadd.f32 %v1709, %v1721
    %v1727 = vlaneseq
    %v1728 = vshrl.u32 %v1727, 7
    %v1729 = vsub.s32 0, %v1728
    %v1730 = vrot.slane %v1691, %v1729
    %1731 = vrot.lane.b32.xlu0 %v1730, 32
    %v1732 = vpop.permute.xlu0 %1731
    %v1734 = vadd.f32 %v1724, %v1732
    %v1735 = vadd.f32 %v1725, %v1732
    %vm1736 = vcmask 523520
    %v1737 = vsel %vm1736, %v1734, -inf
    %v1738 = vrot.slane %v1737, 4
    %v1739 = vmax.f32 %v1737, %v1738
    %v1740 = vrot.slane %v1739, 2
    %v1741 = vmax.f32 %v1739, %v1740
    %v1742 = vrot.slane %v1741, 1
    %v1743 = vmax.f32 %v1741, %v1742
    %v1744 = vsel %vm1736, %v1735, -inf
    %v1745 = vrot.slane %v1744, 4
    %v1746 = vmax.f32 %v1744, %v1745
    %v1747 = vrot.slane %v1746, 2
    %v1748 = vmax.f32 %v1746, %v1747
    %v1749 = vrot.slane %v1748, 1
    %v1750 = vmax.f32 %v1748, %v1749
    %v1751 = vtanh.pop %v1743
    %v1752 = vtanh.pop %v1750
    %v1753 = vld [vmem:[%s3] sm:$0x3]
    %v1754 = vlaneseq
    %v1755 = vshrl.u32 %v1754, 7
    %v1756 = vsub.s32 0, %v1755
    %v1757 = vrot.slane %v1753, %v1756
    %1759 = vbcast.lane.b32.xlu0 %v1757, 256
    %v1760 = vpop.permute.xlu0 %1759
    %v1761 = vlaneseq
    %v1762 = vshrl.u32 %v1761, 7
    %v1763 = vsub.s32 1, %v1762
    %v1764 = vrot.slane %v1753, %v1763
    %1766 = vbcast.lane.b32.xlu0 %v1764, 256
    %v1767 = vpop.permute.xlu0 %1766
    %v1768 = vmul.f32 %v69, %v1760
    %v1769 = vmul.f32 %v70, %v1767
    %v1770 = vld [vmem:[%s4] sm:$0x3]
    %v1771 = vlaneseq
    %v1772 = vshrl.u32 %v1771, 7
    %v1773 = vsub.s32 0, %v1772
    %v1774 = vrot.slane %v1770, %v1773
    %1776 = vbcast.lane.b32.xlu0 %v1774, 256
    %v1777 = vpop.permute.xlu0 %1776
    %v1778 = vlaneseq
    %v1779 = vshrl.u32 %v1778, 7
    %v1780 = vsub.s32 1, %v1779
    %v1781 = vrot.slane %v1770, %v1780
    %1783 = vbcast.lane.b32.xlu0 %v1781, 256
    %v1784 = vpop.permute.xlu0 %1783
    %v1785 = vmul.f32 %v69, %v1777
    %v1786 = vmul.f32 %v70, %v1784
    %1789 = vrot.lane.b32.xlu0 %v1785, 32
    %v1790 = vpop.permute.xlu0 %1789
    %1791 = vrot.lane.b32.xlu0 %v1786, 32
    %v1792 = vpop.permute.xlu0 %1791
    %v1795 = vsel %vm93, %v1768, %v1790
    %v1796 = vsel %vm93, %v1769, %v1792
    %v1797 = vld [vmem:[%s15] sm:$0xff]
    %v1798 = vld [vmem:[%s15 + $0x8] sm:$0xff]
    %v1799 = vld [vmem:[%s15 + $0x10] sm:$0xff]
    %v1800 = vld [vmem:[%s15 + $0x18] sm:$0xff]
    %v1801 = vld [vmem:[%s15 + $0x20] sm:$0xff]
    %v1802 = vld [vmem:[%s15 + $0x28] sm:$0xff]
    %v1803 = vld [vmem:[%s15 + $0x30] sm:$0xff]
    %v1804 = vld [vmem:[%s15 + $0x38] sm:$0xff]
    %v1805 = vld [vmem:[%s15 + $0x40] sm:$0xff]
    %v1806 = vld [vmem:[%s15 + $0x48] sm:$0xff]
    %v1807 = vld [vmem:[%s15 + $0x50] sm:$0xff]
    %v1808 = vld [vmem:[%s15 + $0x58] sm:$0xff]
    %v1809 = vld [vmem:[%s15 + $0x60] sm:$0xff]
    %v1810 = vld [vmem:[%s15 + $0x68] sm:$0xff]
    %v1811 = vld [vmem:[%s15 + $0x70] sm:$0xff]
    %v1812 = vld [vmem:[%s15 + $0x78] sm:$0xff]
    %v1814 = vsel %vm241, %v1795, 0
    %v1817 = vsel %vm241, %v1796, 0
    %1819 = vmatprep.subr.mxu0 %v1798
    %1820 = vmatpush1.msra.mxu0 %v1797
    %1821 = vmatprep.subr.mxu0 %v1800
    %1822 = vmatpush1.msra.mxu0 %v1799
    %1823 = vmatprep.subr.mxu0 %v1802
    %1824 = vmatpush1.msra.mxu0 %v1801
    %1825 = vmatprep.subr.mxu0 %v1804
    %1826 = vmatpush1.msra.mxu0 %v1803
    %1827 = vmatprep.subr.mxu0 %v1806
    %1828 = vmatpush1.msra.mxu0 %v1805
    %1829 = vmatprep.subr.mxu0 %v1808
    %1830 = vmatpush1.msra.mxu0 %v1807
    %1831 = vmatprep.subr.mxu0 %v1810
    %1832 = vmatpush1.msra.mxu0 %v1809
    %1833 = vmatprep.subr.mxu0 %v1812
    %1834 = vmatpush1.msra.mxu0 %v1811
    %1835 = vmatprep.subr.mxu0 0.0
    %1836 = vmatpush1.msra.mxu0 0.0
    %1837 = vmatprep.subr.mxu0 0.0
    %1838 = vmatpush1.msra.mxu0 0.0
    %1839 = vmatprep.subr.mxu0 0.0
    %1840 = vmatpush1.msra.mxu0 0.0
    %1841 = vmatprep.subr.mxu0 0.0
    %1842 = vmatpush1.msra.mxu0 0.0
    %1843 = vmatprep.subr.mxu0 0.0
    %1844 = vmatpush1.msra.mxu0 0.0
    %1845 = vmatprep.subr.mxu0 0.0
    %1846 = vmatpush1.msra.mxu0 0.0
    %1847 = vmatprep.subr.mxu0 0.0
    %1848 = vmatpush1.msra.mxu0 0.0
    %1849 = vmatprep.subr.mxu0 0.0
    %1850 = vmatpush1.msra.mxu0 0.0
    %1851 = vmatprep.subr.mxu0 0.0
    %1852 = vmatpush1.msra.mxu0 0.0
    %1853 = vmatprep.subr.mxu0 0.0
    %1854 = vmatpush1.msra.mxu0 0.0
    %1855 = vmatprep.subr.mxu0 0.0
    %1856 = vmatpush1.msra.mxu0 0.0
    %1857 = vmatprep.subr.mxu0 0.0
    %1858 = vmatpush1.msra.mxu0 0.0
    %1859 = vmatprep.subr.mxu0 0.0
    %1860 = vmatpush1.msra.mxu0 0.0
    %1861 = vmatprep.subr.mxu0 0.0
    %1862 = vmatpush1.msra.mxu0 0.0
    %1863 = vmatprep.subr.mxu0 0.0
    %1864 = vmatpush1.msra.mxu0 0.0
    %1865 = vmatprep.subr.mxu0 0.0
    %1866 = vmatpush1.msra.mxu0 0.0
    %1867 = vmatprep.subr.mxu0 0.0
    %1868 = vmatpush1.msra.mxu0 0.0
    %1869 = vmatprep.subr.mxu0 0.0
    %1870 = vmatpush1.msra.mxu0 0.0
    %1871 = vmatprep.subr.mxu0 0.0
    %1872 = vmatpush1.msra.mxu0 0.0
    %1873 = vmatprep.subr.mxu0 0.0
    %1874 = vmatpush1.msra.mxu0 0.0
    %1875 = vmatprep.subr.mxu0 0.0
    %1876 = vmatpush1.msra.mxu0 0.0
    %1877 = vmatprep.subr.mxu0 0.0
    %1878 = vmatpush1.msra.mxu0 0.0
    %1879 = vmatprep.subr.mxu0 0.0
    %1880 = vmatpush1.msra.mxu0 0.0
    %1881 = vmatprep.subr.mxu0 0.0
    %1882 = vmatpush1.msra.mxu0 0.0
    %1883 = vmatprep.mubr.f32.mxu0 0.0
    %1884 = vmatmul.mubr.f32.gmra.mrb[0].mxu0 %v1814
    %v1885 = vpop.f32.mrb[0].mxu0
    %v1886 = vadd.f32 0.0, %v1885
    %v1887 = vpop.f32.mrb[0].mxu0
    %v1888 = vadd.f32 0.0, %v1887
    %1889 = vmatprep.mubr.f32.mxu0 0.0
    %1890 = vmatmul.mubr.f32.gmra.mrb[0].mxu0 %v1817
    %v1891 = vpop.f32.mrb[0].mxu0
    %v1892 = vadd.f32 0.0, %v1891
    %v1893 = vpop.f32.mrb[0].mxu0
    %v1894 = vadd.f32 0.0, %v1893
    %1895 = vdwg.mxu0
    %v1896 = vld [vmem:[%s16] sm:$0x1]
    %v1899 = vrot.slane %v1886, 7
    %v1900 = vrot.slane %v1892, 7
    %v1903 = vsel %vm1413, 0.0, %v1899
    %v1904 = vsel %vm1413, 0.0, %v1900
    %1907 = vrot.lane.b32.xlu0 %v1903, 32
    %v1908 = vpop.permute.xlu0 %1907
    %1909 = vrot.lane.b32.xlu0 %v1904, 32
    %v1910 = vpop.permute.xlu0 %1909
    %v1913 = vadd.f32 %v1886, %v1908
    %v1914 = vadd.f32 %v1892, %v1910
    %v1915 = vrot.slane %v1886, 1
    %v1916 = vrot.slane %v1892, 1
    %v1919 = vsel %vm1431, %v1915, 0.0
    %v1920 = vsel %vm1431, %v1916, 0.0
    %1923 = vrot.lane.b32.xlu0 %v1919, 96
    %v1924 = vpop.permute.xlu0 %1923
    %1925 = vrot.lane.b32.xlu0 %v1920, 96
    %v1926 = vpop.permute.xlu0 %1925
    %v1929 = vadd.f32 %v1913, %v1924
    %v1930 = vadd.f32 %v1914, %v1926
    %v1932 = vlaneseq
    %v1933 = vshrl.u32 %v1932, 7
    %v1934 = vsub.s32 0, %v1933
    %v1935 = vrot.slane %v1896, %v1934
    %1936 = vrot.lane.b32.xlu0 %v1935, 32
    %v1937 = vpop.permute.xlu0 %1936
    %v1939 = vadd.f32 %v1929, %v1937
    %v1940 = vadd.f32 %v1930, %v1937
    %v1941 = vsel %vm1736, %v1939, -inf
    %v1942 = vrot.slane %v1941, 4
    %v1943 = vmax.f32 %v1941, %v1942
    %v1944 = vrot.slane %v1943, 2
    %v1945 = vmax.f32 %v1943, %v1944
    %v1946 = vrot.slane %v1945, 1
    %v1947 = vmax.f32 %v1945, %v1946
    %v1948 = vsel %vm1736, %v1940, -inf
    %v1949 = vrot.slane %v1948, 4
    %v1950 = vmax.f32 %v1948, %v1949
    %v1951 = vrot.slane %v1950, 2
    %v1952 = vmax.f32 %v1950, %v1951
    %v1953 = vrot.slane %v1952, 1
    %v1954 = vmax.f32 %v1952, %v1953
    %v1955 = vtanh.pop %v1947
    %v1956 = vtanh.pop %v1954
    %v1957 = vld [vmem:[%s17] sm:$0x1]
    %1958 = vrot.lane.b32.xlu0 %v1899, 32
    %v1959 = vpop.permute.xlu0 %1958
    %1960 = vrot.lane.b32.xlu0 %v1900, 32
    %v1961 = vpop.permute.xlu0 %1960
    %v1964 = vsel %vm1413, 0.0, %v1959
    %v1965 = vsel %vm1413, 0.0, %v1961
    %v1966 = vadd.f32 %v1888, %v1964
    %v1967 = vadd.f32 %v1894, %v1965
    %v1970 = vrot.slane %v1888, 1
    %v1971 = vrot.slane %v1894, 1
    %v1974 = vsel %vm1431, %v1970, 0.0
    %v1975 = vsel %vm1431, %v1971, 0.0
    %1978 = vrot.lane.b32.xlu0 %v1974, 96
    %v1979 = vpop.permute.xlu0 %1978
    %1980 = vrot.lane.b32.xlu0 %v1975, 96
    %v1981 = vpop.permute.xlu0 %1980
    %v1984 = vadd.f32 %v1966, %v1979
    %v1985 = vadd.f32 %v1967, %v1981
    %v1987 = vlaneseq
    %v1988 = vshrl.u32 %v1987, 7
    %v1989 = vsub.s32 0, %v1988
    %v1990 = vrot.slane %v1957, %v1989
    %v1992 = vadd.f32 %v1984, %v1990
    %v1993 = vadd.f32 %v1985, %v1990
    %v1994 = vsel %vm93, %v1992, -inf
    %v1995 = vrot.slane %v1994, 4
    %v1996 = vmax.f32 %v1994, %v1995
    %v1997 = vrot.slane %v1996, 2
    %v1998 = vmax.f32 %v1996, %v1997
    %v1999 = vrot.slane %v1998, 1
    %v2000 = vmax.f32 %v1998, %v1999
    %v2001 = vsel %vm93, %v1993, -inf
    %v2002 = vrot.slane %v2001, 4
    %v2003 = vmax.f32 %v2001, %v2002
    %v2004 = vrot.slane %v2003, 2
    %v2005 = vmax.f32 %v2003, %v2004
    %v2006 = vrot.slane %v2005, 1
    %v2007 = vmax.f32 %v2005, %v2006
    %v2008 = vtanh.pop %v2000
    %v2009 = vtanh.pop %v2007
    %v2012 = vsel %vm387, %v1956, %v1955
    %2013 = vrot.lane.b32.xlu0 %v2012, 96
    %v2014 = vpop.permute.xlu0 %2013
    %v2018 = vsel %vm387, %v2009, %v2008
    %2019 = vrot.lane.b32.xlu0 %v2018, 32
    %v2020 = vpop.permute.xlu0 %2019
    %2022 = vrot.lane.b32.xlu0 %v2012, 32
    %v2023 = vpop.permute.xlu0 %2022
    %2025 = vrot.lane.b32.xlu0 %v2018, 96
    %v2026 = vpop.permute.xlu0 %2025
    %v2028 = vsel %vm93, %v2014, %v2020
    %v2029 = vsel %vm241, %v2028, %v2023
    %vm2030 = vcmask 785408
    %v2031 = vsel %vm2030, %v2029, %v2026
    %v2032 = vld [vmem:[%s18] sm:$0xff]
    %v2033 = vld [vmem:[%s18 + $0x8] sm:$0xff]
    %v2034 = vld [vmem:[%s18 + $0x10] sm:$0xff]
    %v2035 = vld [vmem:[%s18 + $0x18] sm:$0xff]
    %v2036 = vld [vmem:[%s18 + $0x20] sm:$0xff]
    %v2037 = vld [vmem:[%s18 + $0x28] sm:$0xff]
    %v2038 = vld [vmem:[%s18 + $0x30] sm:$0xff]
    %v2039 = vld [vmem:[%s18 + $0x38] sm:$0xff]
    %v2040 = vld [vmem:[%s18 + $0x40] sm:$0xff]
    %v2041 = vld [vmem:[%s18 + $0x48] sm:$0xff]
    %v2042 = vld [vmem:[%s18 + $0x50] sm:$0xff]
    %v2043 = vld [vmem:[%s18 + $0x58] sm:$0xff]
    %v2044 = vld [vmem:[%s18 + $0x60] sm:$0xff]
    %v2045 = vld [vmem:[%s18 + $0x68] sm:$0xff]
    %v2046 = vld [vmem:[%s18 + $0x70] sm:$0xff]
    %v2047 = vld [vmem:[%s18 + $0x78] sm:$0xff]
    %v2048 = vld [vmem:[%s18 + $0x80] sm:$0xff]
    %v2049 = vld [vmem:[%s18 + $0x88] sm:$0xff]
    %v2050 = vld [vmem:[%s18 + $0x90] sm:$0xff]
    %v2051 = vld [vmem:[%s18 + $0x98] sm:$0xff]
    %v2052 = vld [vmem:[%s18 + $0xa0] sm:$0xff]
    %v2053 = vld [vmem:[%s18 + $0xa8] sm:$0xff]
    %v2054 = vld [vmem:[%s18 + $0xb0] sm:$0xff]
    %v2055 = vld [vmem:[%s18 + $0xb8] sm:$0xff]
    %v2056 = vld [vmem:[%s18 + $0xc0] sm:$0xff]
    %v2057 = vld [vmem:[%s18 + $0xc8] sm:$0xff]
    %v2058 = vld [vmem:[%s18 + $0xd0] sm:$0xff]
    %v2059 = vld [vmem:[%s18 + $0xd8] sm:$0xff]
    %v2060 = vld [vmem:[%s18 + $0xe0] sm:$0xff]
    %v2061 = vld [vmem:[%s18 + $0xe8] sm:$0xff]
    %v2062 = vld [vmem:[%s18 + $0xf0] sm:$0xff]
    %v2063 = vld [vmem:[%s18 + $0xf8] sm:$0xff]
    %2064 = vmatprep.subr.mxu0 %v2033
    %2065 = vmatpush1.msra.mxu0 %v2032
    %2066 = vmatprep.subr.mxu0 %v2035
    %2067 = vmatpush1.msra.mxu0 %v2034
    %2068 = vmatprep.subr.mxu0 %v2037
    %2069 = vmatpush1.msra.mxu0 %v2036
    %2070 = vmatprep.subr.mxu0 %v2039
    %2071 = vmatpush1.msra.mxu0 %v2038
    %2072 = vmatprep.subr.mxu0 %v2041
    %2073 = vmatpush1.msra.mxu0 %v2040
    %2074 = vmatprep.subr.mxu0 %v2043
    %2075 = vmatpush1.msra.mxu0 %v2042
    %2076 = vmatprep.subr.mxu0 %v2045
    %2077 = vmatpush1.msra.mxu0 %v2044
    %2078 = vmatprep.subr.mxu0 %v2047
    %2079 = vmatpush1.msra.mxu0 %v2046
    %2080 = vmatprep.subr.mxu0 %v2049
    %2081 = vmatpush1.msra.mxu0 %v2048
    %2082 = vmatprep.subr.mxu0 %v2051
    %2083 = vmatpush1.msra.mxu0 %v2050
    %2084 = vmatprep.subr.mxu0 %v2053
    %2085 = vmatpush1.msra.mxu0 %v2052
    %2086 = vmatprep.subr.mxu0 %v2055
    %2087 = vmatpush1.msra.mxu0 %v2054
    %2088 = vmatprep.subr.mxu0 %v2057
    %2089 = vmatpush1.msra.mxu0 %v2056
    %2090 = vmatprep.subr.mxu0 %v2059
    %2091 = vmatpush1.msra.mxu0 %v2058
    %2092 = vmatprep.subr.mxu0 %v2061
    %2093 = vmatpush1.msra.mxu0 %v2060
    %2094 = vmatprep.subr.mxu0 %v2063
    %2095 = vmatpush1.msra.mxu0 %v2062
    %2096 = vmatprep.subr.mxu0 0.0
    %2097 = vmatpush1.msra.mxu0 0.0
    %2098 = vmatprep.subr.mxu0 0.0
    %2099 = vmatpush1.msra.mxu0 0.0
    %2100 = vmatprep.subr.mxu0 0.0
    %2101 = vmatpush1.msra.mxu0 0.0
    %2102 = vmatprep.subr.mxu0 0.0
    %2103 = vmatpush1.msra.mxu0 0.0
    %2104 = vmatprep.subr.mxu0 0.0
    %2105 = vmatpush1.msra.mxu0 0.0
    %2106 = vmatprep.subr.mxu0 0.0
    %2107 = vmatpush1.msra.mxu0 0.0
    %2108 = vmatprep.subr.mxu0 0.0
    %2109 = vmatpush1.msra.mxu0 0.0
    %2110 = vmatprep.subr.mxu0 0.0
    %2111 = vmatpush1.msra.mxu0 0.0
    %2112 = vmatprep.subr.mxu0 0.0
    %2113 = vmatpush1.msra.mxu0 0.0
    %2114 = vmatprep.subr.mxu0 0.0
    %2115 = vmatpush1.msra.mxu0 0.0
    %2116 = vmatprep.subr.mxu0 0.0
    %2117 = vmatpush1.msra.mxu0 0.0
    %2118 = vmatprep.subr.mxu0 0.0
    %2119 = vmatpush1.msra.mxu0 0.0
    %2120 = vmatprep.subr.mxu0 0.0
    %2121 = vmatpush1.msra.mxu0 0.0
    %2122 = vmatprep.subr.mxu0 0.0
    %2123 = vmatpush1.msra.mxu0 0.0
    %2124 = vmatprep.subr.mxu0 0.0
    %2125 = vmatpush1.msra.mxu0 0.0
    %2126 = vmatprep.subr.mxu0 0.0
    %2127 = vmatpush1.msra.mxu0 0.0
    %2128 = vmatprep.mubr.f32.mxu0 0.0
    %2129 = vmatmul.mubr.f32.gmra.mrb[0].mxu0 %v2031
    %v2130 = vpop.f32.mrb[0].mxu0
    %v2131 = vadd.f32 0.0, %v2130
    %v2132 = vpop.f32.mrb[0].mxu0
    %v2133 = vadd.f32 0.0, %v2132
    %2134 = vdwg.mxu0
    %2136 = vrot.lane.b32.xlu0 %v2131, 64
    %v2137 = vpop.permute.xlu0 %2136
    %2140 = vrot.lane.b32.xlu0 %v2133, 64
    %v2141 = vpop.permute.xlu0 %2140
    %v2143 = vcombine.low %v2131, %v2133
    %v2145 = vunpack.c.l.s4 1983009808
    %v2146 = vunpack.c.0.s8 %v2145
    %v2147 = vlaneseq
    %v2148 = vshrl.u32 %v2147, 7
    %v2149 = vsub.s32 %v2146, %v2148
    %v2150 = vrot.slane %v2143, %v2149
    %v2151 = vcombine.low %v2137, %v2141
    %v2153 = vunpack.c.l.s4 1983009808
    %v2154 = vunpack.c.0.s8 %v2153
    %v2155 = vlaneseq
    %v2156 = vshrl.u32 %v2155, 7
    %v2157 = vsub.s32 %v2154, %v2156
    %v2158 = vrot.slane %v2151, %v2157
    %v2159 = vcombine.low %v2150, %v2158
    %v2161 = vunpack.c.l.s4 1934713408
    %v2162 = vunpack.c.0.s8 %v2161
    %v2163 = vlaneseq
    %v2164 = vshrl.u32 %v2163, 7
    %v2165 = vsub.s32 %v2162, %v2164
    %v2166 = vrot.slane %v2159, %v2165
    %v2167 = vcombine.high %v2166, 0.0
    %v2169 = vsel %vm241, %v2166, 0
    %v2172 = vsel %vm241, %v1497, 0
    %2174 = vmatprep.subr.mxu0 0.0
    %2175 = vmatpush1.xpose.msra.mxu0 %v2172
    %2176 = vmatprep.subr.mxu0 0.0
    %2177 = vmatpush1.xpose.msra.mxu0 0.0
    %2178 = vmatprep.subr.mxu0 0.0
    %2179 = vmatpush1.xpose.msra.mxu0 0.0
    %2180 = vmatprep.subr.mxu0 0.0
    %2181 = vmatpush1.xpose.msra.mxu0 0.0
    %2182 = vmatprep.subr.mxu0 0.0
    %2183 = vmatpush1.xpose.msra.mxu0 0.0
    %2184 = vmatprep.subr.mxu0 0.0
    %2185 = vmatpush1.xpose.msra.mxu0 0.0
    %2186 = vmatprep.subr.mxu0 0.0
    %2187 = vmatpush1.xpose.msra.mxu0 0.0
    %2188 = vmatprep.subr.mxu0 0.0
    %2189 = vmatpush1.xpose.msra.mxu0 0.0
    %2190 = vmatprep.subr.mxu0 0.0
    %2191 = vmatpush1.xpose.msra.mxu0 0.0
    %2192 = vmatprep.subr.mxu0 0.0
    %2193 = vmatpush1.xpose.msra.mxu0 0.0
    %2194 = vmatprep.subr.mxu0 0.0
    %2195 = vmatpush1.xpose.msra.mxu0 0.0
    %2196 = vmatprep.subr.mxu0 0.0
    %2197 = vmatpush1.xpose.msra.mxu0 0.0
    %2198 = vmatprep.subr.mxu0 0.0
    %2199 = vmatpush1.xpose.msra.mxu0 0.0
    %2200 = vmatprep.subr.mxu0 0.0
    %2201 = vmatpush1.xpose.msra.mxu0 0.0
    %2202 = vmatprep.subr.mxu0 0.0
    %2203 = vmatpush1.xpose.msra.mxu0 0.0
    %2204 = vmatprep.subr.mxu0 0.0
    %2205 = vmatpush1.xpose.msra.mxu0 0.0
    %2206 = vmatprep.subr.mxu0 0.0
    %2207 = vmatpush1.xpose.msra.mxu0 0.0
    %2208 = vmatprep.subr.mxu0 0.0
    %2209 = vmatpush1.xpose.msra.mxu0 0.0
    %2210 = vmatprep.subr.mxu0 0.0
    %2211 = vmatpush1.xpose.msra.mxu0 0.0
    %2212 = vmatprep.subr.mxu0 0.0
    %2213 = vmatpush1.xpose.msra.mxu0 0.0
    %2214 = vmatprep.subr.mxu0 0.0
    %2215 = vmatpush1.xpose.msra.mxu0 0.0
    %2216 = vmatprep.subr.mxu0 0.0
    %2217 = vmatpush1.xpose.msra.mxu0 0.0
    %2218 = vmatprep.subr.mxu0 0.0
    %2219 = vmatpush1.xpose.msra.mxu0 0.0
    %2220 = vmatprep.subr.mxu0 0.0
    %2221 = vmatpush1.xpose.msra.mxu0 0.0
    %2222 = vmatprep.subr.mxu0 0.0
    %2223 = vmatpush1.xpose.msra.mxu0 0.0
    %2224 = vmatprep.subr.mxu0 0.0
    %2225 = vmatpush1.xpose.msra.mxu0 0.0
    %2226 = vmatprep.subr.mxu0 0.0
    %2227 = vmatpush1.xpose.msra.mxu0 0.0
    %2228 = vmatprep.subr.mxu0 0.0
    %2229 = vmatpush1.xpose.msra.mxu0 0.0
    %2230 = vmatprep.subr.mxu0 0.0
    %2231 = vmatpush1.xpose.msra.mxu0 0.0
    %2232 = vmatprep.subr.mxu0 0.0
    %2233 = vmatpush1.xpose.msra.mxu0 0.0
    %2234 = vmatprep.subr.mxu0 0.0
    %2235 = vmatpush1.xpose.msra.mxu0 0.0
    %2236 = vmatprep.subr.mxu0 0.0
    %2237 = vmatpush1.xpose.msra.mxu0 0.0
    %2238 = vmatprep.mubr.f32.mxu0 0.0
    %2239 = vmatmul.mubr.f32.gmra.mrb[0].mxu0 %v2169
    %v2240 = vpop.f32.mrb[0].mxu0
    %v2241 = vadd.f32 0.0, %v2240
    %v2242 = vpop.f32.mrb[0].mxu0
    %2243 = vdwg.mxu0
    %v2245 = vsel %vm241, %v2167, 0
    %v2248 = vsel %vm241, %v1498, 0
    %2250 = vmatprep.subr.mxu0 0.0
    %2251 = vmatpush1.xpose.msra.mxu0 %v2248
    %2252 = vmatprep.subr.mxu0 0.0
    %2253 = vmatpush1.xpose.msra.mxu0 0.0
    %2254 = vmatprep.subr.mxu0 0.0
    %2255 = vmatpush1.xpose.msra.mxu0 0.0
    %2256 = vmatprep.subr.mxu0 0.0
    %2257 = vmatpush1.xpose.msra.mxu0 0.0
    %2258 = vmatprep.subr.mxu0 0.0
    %2259 = vmatpush1.xpose.msra.mxu0 0.0
    %2260 = vmatprep.subr.mxu0 0.0
    %2261 = vmatpush1.xpose.msra.mxu0 0.0
    %2262 = vmatprep.subr.mxu0 0.0
    %2263 = vmatpush1.xpose.msra.mxu0 0.0
    %2264 = vmatprep.subr.mxu0 0.0
    %2265 = vmatpush1.xpose.msra.mxu0 0.0
    %2266 = vmatprep.subr.mxu0 0.0
    %2267 = vmatpush1.xpose.msra.mxu0 0.0
    %2268 = vmatprep.subr.mxu0 0.0
    %2269 = vmatpush1.xpose.msra.mxu0 0.0
    %2270 = vmatprep.subr.mxu0 0.0
    %2271 = vmatpush1.xpose.msra.mxu0 0.0
    %2272 = vmatprep.subr.mxu0 0.0
    %2273 = vmatpush1.xpose.msra.mxu0 0.0
    %2274 = vmatprep.subr.mxu0 0.0
    %2275 = vmatpush1.xpose.msra.mxu0 0.0
    %2276 = vmatprep.subr.mxu0 0.0
    %2277 = vmatpush1.xpose.msra.mxu0 0.0
    %2278 = vmatprep.subr.mxu0 0.0
    %2279 = vmatpush1.xpose.msra.mxu0 0.0
    %2280 = vmatprep.subr.mxu0 0.0
    %2281 = vmatpush1.xpose.msra.mxu0 0.0
    %2282 = vmatprep.subr.mxu0 0.0
    %2283 = vmatpush1.xpose.msra.mxu0 0.0
    %2284 = vmatprep.subr.mxu0 0.0
    %2285 = vmatpush1.xpose.msra.mxu0 0.0
    %2286 = vmatprep.subr.mxu0 0.0
    %2287 = vmatpush1.xpose.msra.mxu0 0.0
    %2288 = vmatprep.subr.mxu0 0.0
    %2289 = vmatpush1.xpose.msra.mxu0 0.0
    %2290 = vmatprep.subr.mxu0 0.0
    %2291 = vmatpush1.xpose.msra.mxu0 0.0
    %2292 = vmatprep.subr.mxu0 0.0
    %2293 = vmatpush1.xpose.msra.mxu0 0.0
    %2294 = vmatprep.subr.mxu0 0.0
    %2295 = vmatpush1.xpose.msra.mxu0 0.0
    %2296 = vmatprep.subr.mxu0 0.0
    %2297 = vmatpush1.xpose.msra.mxu0 0.0
    %2298 = vmatprep.subr.mxu0 0.0
    %2299 = vmatpush1.xpose.msra.mxu0 0.0
    %2300 = vmatprep.subr.mxu0 0.0
    %2301 = vmatpush1.xpose.msra.mxu0 0.0
    %2302 = vmatprep.subr.mxu0 0.0
    %2303 = vmatpush1.xpose.msra.mxu0 0.0
    %2304 = vmatprep.subr.mxu0 0.0
    %2305 = vmatpush1.xpose.msra.mxu0 0.0
    %2306 = vmatprep.subr.mxu0 0.0
    %2307 = vmatpush1.xpose.msra.mxu0 0.0
    %2308 = vmatprep.subr.mxu0 0.0
    %2309 = vmatpush1.xpose.msra.mxu0 0.0
    %2310 = vmatprep.subr.mxu0 0.0
    %2311 = vmatpush1.xpose.msra.mxu0 0.0
    %2312 = vmatprep.subr.mxu0 0.0
    %2313 = vmatpush1.xpose.msra.mxu0 0.0
    %2314 = vmatprep.mubr.f32.mxu0 0.0
    %2315 = vmatmul.mubr.f32.gmra.mrb[0].mxu0 %v2245
    %v2316 = vpop.f32.mrb[0].mxu0
    %v2317 = vadd.f32 0.0, %v2316
    %v2318 = vpop.f32.mrb[0].mxu0
    %2319 = vdwg.mxu0
    %v2320 = vtanh.pop %v2241
    %v2321 = vtanh.pop %v2317
    %v2322 = vmul.f32 %v2320, 1.442695
    %v2323 = vpow.pop %v2322
    %v2324 = vmul.f32 %v2321, 1.442695
    %v2325 = vpow.pop %v2324
    %v2326 = vld [vmem:[%s5] sm:$0x3]
    %v2329 = vunpack.c.l.s4 1966171168
    %v2330 = vunpack.c.0.s8 %v2329
    %v2331 = vlaneseq
    %v2332 = vshrl.u32 %v2331, 7
    %v2333 = vsub.s32 %v2330, %v2332
    %v2334 = vrot.slane %v2326, %v2333
    %v2335 = vcombine.high %v2334, %v2334
    %v2337 = vunpack.c.l.s4 1966171168
    %v2338 = vunpack.c.0.s8 %v2337
    %v2339 = vlaneseq
    %v2340 = vshrl.u32 %v2339, 7
    %v2341 = vsub.s32 %v2338, %v2340
    %v2342 = vrot.slane %v2334, %v2341
    %v2344 = vunpack.c.l.s4 1966171168
    %v2345 = vunpack.c.0.s8 %v2344
    %v2346 = vlaneseq
    %v2347 = vshrl.u32 %v2346, 7
    %v2348 = vsub.s32 %v2345, %v2347
    %v2349 = vrot.slane %v2335, %v2348
    %v2352 = vld [vmem:[%s6] sm:$0x3]
    %v2355 = vunpack.c.l.s4 1966171168
    %v2356 = vunpack.c.0.s8 %v2355
    %v2357 = vlaneseq
    %v2358 = vshrl.u32 %v2357, 7
    %v2359 = vsub.s32 %v2356, %v2358
    %v2360 = vrot.slane %v2352, %v2359
    %v2361 = vcombine.high %v2360, %v2360
    %v2363 = vunpack.c.l.s4 1966171168
    %v2364 = vunpack.c.0.s8 %v2363
    %v2365 = vlaneseq
    %v2366 = vshrl.u32 %v2365, 7
    %v2367 = vsub.s32 %v2364, %v2366
    %v2368 = vrot.slane %v2360, %v2367
    %v2370 = vunpack.c.l.s4 1966171168
    %v2371 = vunpack.c.0.s8 %v2370
    %v2372 = vlaneseq
    %v2373 = vshrl.u32 %v2372, 7
    %v2374 = vsub.s32 %v2371, %v2373
    %v2375 = vrot.slane %v2361, %v2374
    %v2376 = vlaneseq
    %v2377 = vshrl.u32 %v2376, 7
    %v2378 = vsub.s32 0, %v2377
    %v2379 = vrot.slane %v2368, %v2378
    %v2380 = vlaneseq
    %v2381 = vshrl.u32 %v2380, 7
    %v2382 = vsub.s32 0, %v2381
    %v2383 = vrot.slane %v2375, %v2382
    %v2386 = vlaneseq
    %v2387 = vshrl.u32 %v2386, 7
    %v2388 = vsub.s32 0, %v2387
    %v2389 = vrot.slane %v2342, %v2388
    %v2390 = vlaneseq
    %v2391 = vshrl.u32 %v2390, 7
    %v2392 = vsub.s32 0, %v2391
    %v2393 = vrot.slane %v2349, %v2392
    %v2396 = vsel %vm1413, %v2342, %v2379
    %v2397 = vsel %vm1413, %v2349, %v2383
    %v2398 = vsel %vm1416, %v2396, %v2389
    %v2399 = vsel %vm1416, %v2397, %v2393
    %v2400 = vsel %vm1419, %v2398, %v2379
    %v2401 = vsel %vm1419, %v2399, %v2383
    %v2402 = vmul.f32 %v2323, %v2400
    %v2403 = vmul.f32 %v2325, %v2401
    %v2404 = vld [vmem:[%s7] sm:$0x3]
    %v2407 = vunpack.c.l.s4 1966171168
    %v2408 = vunpack.c.0.s8 %v2407
    %v2409 = vlaneseq
    %v2410 = vshrl.u32 %v2409, 7
    %v2411 = vsub.s32 %v2408, %v2410
    %v2412 = vrot.slane %v2404, %v2411
    %v2413 = vcombine.high %v2412, %v2412
    %v2415 = vunpack.c.l.s4 1966171168
    %v2416 = vunpack.c.0.s8 %v2415
    %v2417 = vlaneseq
    %v2418 = vshrl.u32 %v2417, 7
    %v2419 = vsub.s32 %v2416, %v2418
    %v2420 = vrot.slane %v2412, %v2419
    %v2422 = vunpack.c.l.s4 1966171168
    %v2423 = vunpack.c.0.s8 %v2422
    %v2424 = vlaneseq
    %v2425 = vshrl.u32 %v2424, 7
    %v2426 = vsub.s32 %v2423, %v2425
    %v2427 = vrot.slane %v2413, %v2426
    %vm2430 = vcmp.gt.f32.partialorder %v2420, 0.5
    %vm2431 = vcmp.gt.f32.partialorder %v2427, 0.5
    %v2432 = vsel %vm2430, 1, 0
    %v2433 = vsel %vm2431, 1, 0
    %v2434 = vlaneseq
    %v2435 = vshrl.u32 %v2434, 7
    %v2436 = vsub.s32 0, %v2435
    %v2437 = vrot.slane %v2432, %v2436
    %v2438 = vlaneseq
    %v2439 = vshrl.u32 %v2438, 7
    %v2440 = vsub.s32 0, %v2439
    %v2441 = vrot.slane %v2433, %v2440
    %vm2442 = vcmp.eq.s32.totalorder %v2437, 1
    %vm2443 = vcmp.eq.s32.totalorder %v2441, 1
    %v2444 = vsel %vm2442, 0.0, %v2402
    %v2445 = vsel %vm2443, 0.0, %v2403
    %vm2446 = vcmask 60416
    %v2447 = vsel %vm2446, %v2444, 0.0
    %2448 = vadd.xlane.f32.xlu0 %v2447
    %v2449 = vpop.xlane.xlu0 %2448
    %v2450 = vsel %vm2446, %v2445, 0.0
    %2451 = vadd.xlane.f32.xlu0 %v2450
    %v2452 = vpop.xlane.xlu0 %2451
    %v2453 = vrcp.pop %v2449
    %v2454 = vmul.f32 %v2444, %v2453
    %v2455 = vrcp.pop %v2452
    %v2456 = vmul.f32 %v2445, %v2455
    %vm2457 = vcmask 64512
    %v2459 = vsel %vm2457, %v2454, 0
    %2461 = vmatprep.subr.mxu0 0.0
    %2462 = vmatpush1.msra.mxu0 %v1497
    %2463 = vmatprep.subr.mxu0 0.0
    %2464 = vmatpush1.msra.mxu0 0.0
    %2465 = vmatprep.subr.mxu0 0.0
    %2466 = vmatpush1.msra.mxu0 0.0
    %2467 = vmatprep.subr.mxu0 0.0
    %2468 = vmatpush1.msra.mxu0 0.0
    %2469 = vmatprep.subr.mxu0 0.0
    %2470 = vmatpush1.msra.mxu0 0.0
    %2471 = vmatprep.subr.mxu0 0.0
    %2472 = vmatpush1.msra.mxu0 0.0
    %2473 = vmatprep.subr.mxu0 0.0
    %2474 = vmatpush1.msra.mxu0 0.0
    %2475 = vmatprep.subr.mxu0 0.0
    %2476 = vmatpush1.msra.mxu0 0.0
    %2477 = vmatprep.subr.mxu0 0.0
    %2478 = vmatpush1.msra.mxu0 0.0
    %2479 = vmatprep.subr.mxu0 0.0
    %2480 = vmatpush1.msra.mxu0 0.0
    %2481 = vmatprep.subr.mxu0 0.0
    %2482 = vmatpush1.msra.mxu0 0.0
    %2483 = vmatprep.subr.mxu0 0.0
    %2484 = vmatpush1.msra.mxu0 0.0
    %2485 = vmatprep.subr.mxu0 0.0
    %2486 = vmatpush1.msra.mxu0 0.0
    %2487 = vmatprep.subr.mxu0 0.0
    %2488 = vmatpush1.msra.mxu0 0.0
    %2489 = vmatprep.subr.mxu0 0.0
    %2490 = vmatpush1.msra.mxu0 0.0
    %2491 = vmatprep.subr.mxu0 0.0
    %2492 = vmatpush1.msra.mxu0 0.0
    %2493 = vmatprep.subr.mxu0 0.0
    %2494 = vmatpush1.msra.mxu0 0.0
    %2495 = vmatprep.subr.mxu0 0.0
    %2496 = vmatpush1.msra.mxu0 0.0
    %2497 = vmatprep.subr.mxu0 0.0
    %2498 = vmatpush1.msra.mxu0 0.0
    %2499 = vmatprep.subr.mxu0 0.0
    %2500 = vmatpush1.msra.mxu0 0.0
    %2501 = vmatprep.subr.mxu0 0.0
    %2502 = vmatpush1.msra.mxu0 0.0
    %2503 = vmatprep.subr.mxu0 0.0
    %2504 = vmatpush1.msra.mxu0 0.0
    %2505 = vmatprep.subr.mxu0 0.0
    %2506 = vmatpush1.msra.mxu0 0.0
    %2507 = vmatprep.subr.mxu0 0.0
    %2508 = vmatpush1.msra.mxu0 0.0
    %2509 = vmatprep.subr.mxu0 0.0
    %2510 = vmatpush1.msra.mxu0 0.0
    %2511 = vmatprep.subr.mxu0 0.0
    %2512 = vmatpush1.msra.mxu0 0.0
    %2513 = vmatprep.subr.mxu0 0.0
    %2514 = vmatpush1.msra.mxu0 0.0
    %2515 = vmatprep.subr.mxu0 0.0
    %2516 = vmatpush1.msra.mxu0 0.0
    %2517 = vmatprep.subr.mxu0 0.0
    %2518 = vmatpush1.msra.mxu0 0.0
    %2519 = vmatprep.subr.mxu0 0.0
    %2520 = vmatpush1.msra.mxu0 0.0
    %2521 = vmatprep.subr.mxu0 0.0
    %2522 = vmatpush1.msra.mxu0 0.0
    %2523 = vmatprep.subr.mxu0 0.0
    %2524 = vmatpush1.msra.mxu0 0.0
    %2525 = vmatprep.mubr.f32.mxu0 0.0
    %2526 = vmatmul.mubr.f32.gmra.mrb[0].mxu0 %v2459
    %v2527 = vpop.f32.mrb[0].mxu0
    %v2528 = vadd.f32 0.0, %v2527
    %v2529 = vpop.f32.mrb[0].mxu0
    %2530 = vdwg.mxu0
    %v2532 = vsel %vm2457, %v2456, 0
    %2534 = vmatprep.subr.mxu0 0.0
    %2535 = vmatpush1.msra.mxu0 %v1498
    %2536 = vmatprep.subr.mxu0 0.0
    %2537 = vmatpush1.msra.mxu0 0.0
    %2538 = vmatprep.subr.mxu0 0.0
    %2539 = vmatpush1.msra.mxu0 0.0
    %2540 = vmatprep.subr.mxu0 0.0
    %2541 = vmatpush1.msra.mxu0 0.0
    %2542 = vmatprep.subr.mxu0 0.0
    %2543 = vmatpush1.msra.mxu0 0.0
    %2544 = vmatprep.subr.mxu0 0.0
    %2545 = vmatpush1.msra.mxu0 0.0
    %2546 = vmatprep.subr.mxu0 0.0
    %2547 = vmatpush1.msra.mxu0 0.0
    %2548 = vmatprep.subr.mxu0 0.0
    %2549 = vmatpush1.msra.mxu0 0.0
    %2550 = vmatprep.subr.mxu0 0.0
    %2551 = vmatpush1.msra.mxu0 0.0
    %2552 = vmatprep.subr.mxu0 0.0
    %2553 = vmatpush1.msra.mxu0 0.0
    %2554 = vmatprep.subr.mxu0 0.0
    %2555 = vmatpush1.msra.mxu0 0.0
    %2556 = vmatprep.subr.mxu0 0.0
    %2557 = vmatpush1.msra.mxu0 0.0
    %2558 = vmatprep.subr.mxu0 0.0
    %2559 = vmatpush1.msra.mxu0 0.0
    %2560 = vmatprep.subr.mxu0 0.0
    %2561 = vmatpush1.msra.mxu0 0.0
    %2562 = vmatprep.subr.mxu0 0.0
    %2563 = vmatpush1.msra.mxu0 0.0
    %2564 = vmatprep.subr.mxu0 0.0
    %2565 = vmatpush1.msra.mxu0 0.0
    %2566 = vmatprep.subr.mxu0 0.0
    %2567 = vmatpush1.msra.mxu0 0.0
    %2568 = vmatprep.subr.mxu0 0.0
    %2569 = vmatpush1.msra.mxu0 0.0
    %2570 = vmatprep.subr.mxu0 0.0
    %2571 = vmatpush1.msra.mxu0 0.0
    %2572 = vmatprep.subr.mxu0 0.0
    %2573 = vmatpush1.msra.mxu0 0.0
    %2574 = vmatprep.subr.mxu0 0.0
    %2575 = vmatpush1.msra.mxu0 0.0
    %2576 = vmatprep.subr.mxu0 0.0
    %2577 = vmatpush1.msra.mxu0 0.0
    %2578 = vmatprep.subr.mxu0 0.0
    %2579 = vmatpush1.msra.mxu0 0.0
    %2580 = vmatprep.subr.mxu0 0.0
    %2581 = vmatpush1.msra.mxu0 0.0
    %2582 = vmatprep.subr.mxu0 0.0
    %2583 = vmatpush1.msra.mxu0 0.0
    %2584 = vmatprep.subr.mxu0 0.0
    %2585 = vmatpush1.msra.mxu0 0.0
    %2586 = vmatprep.subr.mxu0 0.0
    %2587 = vmatpush1.msra.mxu0 0.0
    %2588 = vmatprep.subr.mxu0 0.0
    %2589 = vmatpush1.msra.mxu0 0.0
    %2590 = vmatprep.subr.mxu0 0.0
    %2591 = vmatpush1.msra.mxu0 0.0
    %2592 = vmatprep.subr.mxu0 0.0
    %2593 = vmatpush1.msra.mxu0 0.0
    %2594 = vmatprep.subr.mxu0 0.0
    %2595 = vmatpush1.msra.mxu0 0.0
    %2596 = vmatprep.subr.mxu0 0.0
    %2597 = vmatpush1.msra.mxu0 0.0
    %2598 = vmatprep.mubr.f32.mxu0 0.0
    %2599 = vmatmul.mubr.f32.gmra.mrb[0].mxu0 %v2532
    %v2600 = vpop.f32.mrb[0].mxu0
    %v2601 = vadd.f32 0.0, %v2600
    %v2602 = vpop.f32.mrb[0].mxu0
    %2603 = vdwg.mxu0
    %v2605 = vunpack.c.l.s4 1983009808
    %v2606 = vunpack.c.0.s8 %v2605
    %v2607 = vlaneseq
    %v2608 = vshrl.u32 %v2607, 7
    %v2609 = vsub.s32 %v2606, %v2608
    %v2610 = vrot.slane %v2528, %v2609
    %v2612 = vunpack.c.l.s4 1983009808
    %v2613 = vunpack.c.0.s8 %v2612
    %v2614 = vlaneseq
    %v2615 = vshrl.u32 %v2614, 7
    %v2616 = vsub.s32 %v2613, %v2615
    %v2617 = vrot.slane %v2601, %v2616
    %v2618 = vcombine.low %v2610, %v2617
    %v2619 = vcombine.high %v2610, %v2617
    %v2621 = vunpack.c.l.s4 1934713408
    %v2622 = vunpack.c.0.s8 %v2621
    %v2623 = vlaneseq
    %v2624 = vshrl.u32 %v2623, 7
    %v2625 = vsub.s32 %v2622, %v2624
    %v2626 = vrot.slane %v2618, %v2625
    %v2628 = vunpack.c.l.s4 1934713408
    %v2629 = vunpack.c.0.s8 %v2628
    %v2630 = vlaneseq
    %v2631 = vshrl.u32 %v2630, 7
    %v2632 = vsub.s32 %v2629, %v2631
    %v2633 = vrot.slane %v2619, %v2632
    %v2634 = vcombine.high %v2626, 0.0
    %v2635 = vcombine.high %v2633, 0.0
    %2637 = vrot.lane.b32.xlu0 %v2634, 64
    %v2638 = vpop.permute.xlu0 %2637
    %2641 = vrot.lane.b32.xlu0 %v2635, 64
    %v2642 = vpop.permute.xlu0 %2641
    %v2644 = vsel %vm241, %v2626, %v2638
    %v2645 = vsel %vm241, %v2633, %v2642
    %v2648 = vsel %vm387, %v1752, %v1751
    %2649 = vrot.lane.b32.xlu0 %v2648, 96
    %v2650 = vpop.permute.xlu0 %2649
    %2653 = vrot.lane.b32.xlu0 %v2018, 64
    %v2654 = vpop.permute.xlu0 %2653
    %2658 = vrot.lane.b32.xlu0 %v2644, 96
    %v2659 = vpop.permute.xlu0 %2658
    %2660 = vrot.lane.b32.xlu0 %v2645, 96
    %v2661 = vpop.permute.xlu0 %2660
    %v2662 = vsel %vm2030, %v2659, %v2661
    %v2665 = vsel %vm93, %v2650, %v2012
    %v2666 = vsel %vm241, %v2665, %v2654
    %v2667 = vsel %vm2030, %v2666, %v2659
    %v2668 = vld [vmem:[%s19] sm:$0xff]
    %v2669 = vld [vmem:[%s19 + $0x8] sm:$0xff]
    %v2670 = vld [vmem:[%s19 + $0x10] sm:$0xff]
    %v2671 = vld [vmem:[%s19 + $0x18] sm:$0xff]
    %v2672 = vld [vmem:[%s19 + $0x20] sm:$0xff]
    %v2673 = vld [vmem:[%s19 + $0x28] sm:$0xff]
    %v2674 = vld [vmem:[%s19 + $0x30] sm:$0xff]
    %v2675 = vld [vmem:[%s19 + $0x38] sm:$0xff]
    %v2676 = vld [vmem:[%s19 + $0x40] sm:$0xff]
    %v2677 = vld [vmem:[%s19 + $0x48] sm:$0xff]
    %v2678 = vld [vmem:[%s19 + $0x50] sm:$0xff]
    %v2679 = vld [vmem:[%s19 + $0x58] sm:$0xff]
    %v2680 = vld [vmem:[%s19 + $0x60] sm:$0xff]
    %v2681 = vld [vmem:[%s19 + $0x68] sm:$0xff]
    %v2682 = vld [vmem:[%s19 + $0x70] sm:$0xff]
    %v2683 = vld [vmem:[%s19 + $0x78] sm:$0xff]
    %v2684 = vld [vmem:[%s19 + $0x80] sm:$0xff]
    %v2685 = vld [vmem:[%s19 + $0x88] sm:$0xff]
    %v2686 = vld [vmem:[%s19 + $0x90] sm:$0xff]
    %v2687 = vld [vmem:[%s19 + $0x98] sm:$0xff]
    %v2688 = vld [vmem:[%s19 + $0xa0] sm:$0xff]
    %v2689 = vld [vmem:[%s19 + $0xa8] sm:$0xff]
    %v2690 = vld [vmem:[%s19 + $0xb0] sm:$0xff]
    %v2691 = vld [vmem:[%s19 + $0xb8] sm:$0xff]
    %v2692 = vld [vmem:[%s19 + $0xc0] sm:$0xff]
    %v2693 = vld [vmem:[%s19 + $0xc8] sm:$0xff]
    %v2694 = vld [vmem:[%s19 + $0xd0] sm:$0xff]
    %v2695 = vld [vmem:[%s19 + $0xd8] sm:$0xff]
    %v2696 = vld [vmem:[%s19 + $0xe0] sm:$0xff]
    %v2697 = vld [vmem:[%s19 + $0xe8] sm:$0xff]
    %v2698 = vld [vmem:[%s19 + $0xf0] sm:$0xff]
    %v2699 = vld [vmem:[%s19 + $0xf8] sm:$0xff]
    %v2700 = vld [vmem:[%s19 + $0x100] sm:$0xff]
    %v2701 = vld [vmem:[%s19 + $0x108] sm:$0xff]
    %v2702 = vld [vmem:[%s19 + $0x110] sm:$0xff]
    %v2703 = vld [vmem:[%s19 + $0x118] sm:$0xff]
    %v2704 = vld [vmem:[%s19 + $0x120] sm:$0xff]
    %v2705 = vld [vmem:[%s19 + $0x128] sm:$0xff]
    %v2706 = vld [vmem:[%s19 + $0x130] sm:$0xff]
    %v2707 = vld [vmem:[%s19 + $0x138] sm:$0xff]
    %v2708 = vld [vmem:[%s19 + $0x140] sm:$0xff]
    %v2709 = vld [vmem:[%s19 + $0x148] sm:$0xff]
    %v2710 = vld [vmem:[%s19 + $0x150] sm:$0xff]
    %v2711 = vld [vmem:[%s19 + $0x158] sm:$0xff]
    %v2712 = vld [vmem:[%s20] sm:$0x1]
    %v2714 = vlaneseq
    %v2715 = vshrl.u32 %v2714, 7
    %v2716 = vsub.s32 0, %v2715
    %v2717 = vrot.slane %v2712, %v2716
    %v2719 = vsel %vm2030, %v2661, 0
    %2721 = vmatprep.subr.mxu0 0.0
    %2722 = vmatpush1.msra.mxu0 %v2668
    %2723 = vmatprep.subr.mxu0 0.0
    %2724 = vmatpush1.msra.mxu0 %v2669
    %2725 = vmatprep.subr.mxu0 0.0
    %2726 = vmatpush1.msra.mxu0 %v2670
    %2727 = vmatprep.subr.mxu0 0.0
    %2728 = vmatpush1.msra.mxu0 %v2671
    %2729 = vmatprep.subr.mxu0 0.0
    %2730 = vmatpush1.msra.mxu0 %v2672
    %2731 = vmatprep.subr.mxu0 0.0
    %2732 = vmatpush1.msra.mxu0 %v2673
    %2733 = vmatprep.subr.mxu0 0.0
    %2734 = vmatpush1.msra.mxu0 %v2674
    %2735 = vmatprep.subr.mxu0 0.0
    %2736 = vmatpush1.msra.mxu0 %v2675
    %2737 = vmatprep.subr.mxu0 0.0
    %2738 = vmatpush1.msra.mxu0 %v2676
    %2739 = vmatprep.subr.mxu0 0.0
    %2740 = vmatpush1.msra.mxu0 %v2677
    %2741 = vmatprep.subr.mxu0 0.0
    %2742 = vmatpush1.msra.mxu0 %v2678
    %2743 = vmatprep.subr.mxu0 0.0
    %2744 = vmatpush1.msra.mxu0 %v2679
    %2745 = vmatprep.subr.mxu0 0.0
    %2746 = vmatpush1.msra.mxu0 %v2680
    %2747 = vmatprep.subr.mxu0 0.0
    %2748 = vmatpush1.msra.mxu0 %v2681
    %2749 = vmatprep.subr.mxu0 0.0
    %2750 = vmatpush1.msra.mxu0 %v2682
    %2751 = vmatprep.subr.mxu0 0.0
    %2752 = vmatpush1.msra.mxu0 %v2683
    %2753 = vmatprep.subr.mxu0 0.0
    %2754 = vmatpush1.msra.mxu0 %v2684
    %2755 = vmatprep.subr.mxu0 0.0
    %2756 = vmatpush1.msra.mxu0 %v2685
    %2757 = vmatprep.subr.mxu0 0.0
    %2758 = vmatpush1.msra.mxu0 %v2686
    %2759 = vmatprep.subr.mxu0 0.0
    %2760 = vmatpush1.msra.mxu0 %v2687
    %2761 = vmatprep.subr.mxu0 0.0
    %2762 = vmatpush1.msra.mxu0 %v2688
    %2763 = vmatprep.subr.mxu0 0.0
    %2764 = vmatpush1.msra.mxu0 %v2689
    %2765 = vmatprep.subr.mxu0 0.0
    %2766 = vmatpush1.msra.mxu0 %v2690
    %2767 = vmatprep.subr.mxu0 0.0
    %2768 = vmatpush1.msra.mxu0 %v2691
    %2769 = vmatprep.subr.mxu0 0.0
    %2770 = vmatpush1.msra.mxu0 %v2692
    %2771 = vmatprep.subr.mxu0 0.0
    %2772 = vmatpush1.msra.mxu0 %v2693
    %2773 = vmatprep.subr.mxu0 0.0
    %2774 = vmatpush1.msra.mxu0 %v2694
    %2775 = vmatprep.subr.mxu0 0.0
    %2776 = vmatpush1.msra.mxu0 %v2695
    %2777 = vmatprep.subr.mxu0 0.0
    %2778 = vmatpush1.msra.mxu0 %v2696
    %2779 = vmatprep.subr.mxu0 0.0
    %2780 = vmatpush1.msra.mxu0 %v2697
    %2781 = vmatprep.subr.mxu0 0.0
    %2782 = vmatpush1.msra.mxu0 %v2698
    %2783 = vmatprep.subr.mxu0 0.0
    %2784 = vmatpush1.msra.mxu0 %v2699
    %2785 = vmatprep.mubr.f32.mxu0 %v2662
    %2786 = vmatmul.mubr.f32.gmra.mrb[0].mxu0 %v2667
    %v2787 = vpop.f32.mrb[0].mxu0
    %v2788 = vadd.f32 %v2717, %v2787
    %v2789 = vpop.f32.mrb[0].mxu0
    %2790 = vdwg.mxu0
    %2791 = vmatprep.subr.mxu0 0.0
    %2792 = vmatpush1.msra.mxu0 %v2700
    %2793 = vmatprep.subr.mxu0 0.0
    %2794 = vmatpush1.msra.mxu0 %v2701
    %2795 = vmatprep.subr.mxu0 0.0
    %2796 = vmatpush1.msra.mxu0 %v2702
    %2797 = vmatprep.subr.mxu0 0.0
    %2798 = vmatpush1.msra.mxu0 %v2703
    %2799 = vmatprep.subr.mxu0 0.0
    %2800 = vmatpush1.msra.mxu0 %v2704
    %2801 = vmatprep.subr.mxu0 0.0
    %2802 = vmatpush1.msra.mxu0 %v2705
    %2803 = vmatprep.subr.mxu0 0.0
    %2804 = vmatpush1.msra.mxu0 %v2706
    %2805 = vmatprep.subr.mxu0 0.0
    %2806 = vmatpush1.msra.mxu0 %v2707
    %2807 = vmatprep.subr.mxu0 0.0
    %2808 = vmatpush1.msra.mxu0 %v2708
    %2809 = vmatprep.subr.mxu0 0.0
    %2810 = vmatpush1.msra.mxu0 %v2709
    %2811 = vmatprep.subr.mxu0 0.0
    %2812 = vmatpush1.msra.mxu0 %v2710
    %2813 = vmatprep.subr.mxu0 0.0
    %2814 = vmatpush1.msra.mxu0 %v2711
    %2815 = vmatprep.subr.mxu0 0.0
    %2816 = vmatpush1.msra.mxu0 0.0
    %2817 = vmatprep.subr.mxu0 0.0
    %2818 = vmatpush1.msra.mxu0 0.0
    %2819 = vmatprep.subr.mxu0 0.0
    %2820 = vmatpush1.msra.mxu0 0.0
    %2821 = vmatprep.subr.mxu0 0.0
    %2822 = vmatpush1.msra.mxu0 0.0
    %2823 = vmatprep.subr.mxu0 0.0
    %2824 = vmatpush1.msra.mxu0 0.0
    %2825 = vmatprep.subr.mxu0 0.0
    %2826 = vmatpush1.msra.mxu0 0.0
    %2827 = vmatprep.subr.mxu0 0.0
    %2828 = vmatpush1.msra.mxu0 0.0
    %2829 = vmatprep.subr.mxu0 0.0
    %2830 = vmatpush1.msra.mxu0 0.0
    %2831 = vmatprep.subr.mxu0 0.0
    %2832 = vmatpush1.msra.mxu0 0.0
    %2833 = vmatprep.subr.mxu0 0.0
    %2834 = vmatpush1.msra.mxu0 0.0
    %2835 = vmatprep.subr.mxu0 0.0
    %2836 = vmatpush1.msra.mxu0 0.0
    %2837 = vmatprep.subr.mxu0 0.0
    %2838 = vmatpush1.msra.mxu0 0.0
    %2839 = vmatprep.subr.mxu0 0.0
    %2840 = vmatpush1.msra.mxu0 0.0
    %2841 = vmatprep.subr.mxu0 0.0
    %2842 = vmatpush1.msra.mxu0 0.0
    %2843 = vmatprep.subr.mxu0 0.0
    %2844 = vmatpush1.msra.mxu0 0.0
    %2845 = vmatprep.subr.mxu0 0.0
    %2846 = vmatpush1.msra.mxu0 0.0
    %2847 = vmatprep.subr.mxu0 0.0
    %2848 = vmatpush1.msra.mxu0 0.0
    %2849 = vmatprep.subr.mxu0 0.0
    %2850 = vmatpush1.msra.mxu0 0.0
    %2851 = vmatprep.subr.mxu0 0.0
    %2852 = vmatpush1.msra.mxu0 0.0
    %2853 = vmatprep.subr.mxu0 0.0
    %2854 = vmatpush1.msra.mxu0 0.0
    %2855 = vmatprep.mubr.f32.mxu0 0.0
    %2856 = vmatmul.mubr.f32.gmra.mrb[0].mxu0 %v2719
    %v2857 = vpop.f32.mrb[0].mxu0
    %v2858 = vadd.f32 %v2788, %v2857
    %v2859 = vpop.f32.mrb[0].mxu0
    %2860 = vdwg.mxu0
    %vm2861 = vcmask 33792
    %v2862 = vsel %vm2861, %v2858, -inf
    %2863 = vmax.xlane.f32.xlu0 %v2862
    %v2864 = vpop.xlane.xlu0 %2863
    %v2865 = vsub.f32 %v2858, %v2864
    %v2866 = vmul.f32 %v2865, 1.442695
    %v2867 = vpow.pop %v2866
    %v2868 = vsel %vm2861, %v2867, 0.0
    %2869 = vadd.xlane.f32.xlu0 %v2868
    %v2870 = vpop.xlane.xlu0 %2869
    %v2871 = vrcp.pop %v2870
    %v2872 = vmul.f32 %v2867, %v2871
    %2873 = vst.msk [vmem:[#allocation2] sm:$0x3] %vm2861, %v2872
    // Predicated region
    $region86: #{mfa_forward.1} parent=1 // pred_check
      _
    $region87: #{mfa_forward.1} parent=1 // pred_check_branch
      %2875 = sbr.rel (0) target = $region89
    $region88: #{mfa_forward.1} parent=1 // pred_region
      %s2877 = ssub.s32 32, 32
      %2878 = vsyncadd [#allocation3], %s2877
      %s2880 = sshll.u32 [#allocation2], 4
      %s2881 = int_to_ptr.vmem [resolvable:$true] %s2880
      %2883 = dma.vmem_to_hbm [thread:$0]  %s2881, 32, %s21, [#allocation3]
    $region89: #{mfa_forward.1} parent=1 // pred_fallthru
      _
    // Predicated region
    $region90: #{mfa_forward.1} parent=1 // pred_check
      _
    $region91: #{mfa_forward.1} parent=1 // pred_check_branch
      %2885 = sbr.rel (0) target = $region93
    $region92: #{mfa_forward.1} parent=1 // pred_region
      %2886 = dma.done [#allocation3], 32
    $region93: #{mfa_forward.1} parent=1 // pred_fallthru
      _
    %2887 = vsyncpa [#allocation3], 1

</llo_original>
